<compile_context>
chip_gen: v6e
topology: v6e:2x2x1
jax: 0.10.0
libtpu: 0.0.40
codegen_flags: <defaults>
</compile_context>

<pallas_src>
import functools

import jax
import jax.numpy as jnp
from jax import lax
from jax.experimental import pallas as pl
from jax.experimental.pallas import tpu as pltpu


COUT_PAD = 128  # final conv's 3 output channels padded to a lane-dense 128


# ----------------------------------------------------------------------------
# Fused Pallas kernel: conv1 + bn1 + lrelu -> conv2 + bn2 + lrelu
#                      -> conv3 + bn3 + lrelu -> conv4      (one image)
# ----------------------------------------------------------------------------
def _fused_kernel(cols1_ref, w1_ref, b1_ref, w2_ref, b2_ref, w3_ref, b3_ref,
                  w4_ref, b4_ref, out_ref, *, H, W):
    HW = H * W

    # Width-boundary masks on the flat row index (height boundaries are
    # handled by zero row-padding below).
    row = lax.broadcasted_iota(jnp.int32, (HW, 1), 0)
    col = row % W
    not_left = col > 0           # output col 0 has no (w-1) neighbour
    not_right = col < (W - 1)    # output col W-1 has no (w+1) neighbour

    def conv3x3(act, w_ref, b_ref, apply_act):
        """3x3 conv (stride 1, pad 1) on a flat (HW, Cin) f32 activation.

        The 3 dx taps are concatenated along channels -> 3 matmuls with
        K = 3*Cin.  bf16 MXU inputs, f32 accumulation, f32 epilogue.
        """
        cin = act.shape[-1]
        zr = jnp.zeros((8, cin), jnp.float32)
        ap = jnp.concatenate([zr, act, zr], axis=0)            # (HW+16, cin)
        left = jnp.where(not_left, ap[7:7 + HW, :], 0.0)       # in[h, w-1]
        right = jnp.where(not_right, ap[9:9 + HW, :], 0.0)     # in[h, w+1]
        a3 = jnp.concatenate([left, act, right], axis=1)       # (HW, 3*cin)
        zr3 = jnp.zeros((W, 3 * cin), jnp.float32)
        a3p = jnp.concatenate([zr3, a3, zr3], axis=0)          # (HW+2W, 3cin)
        # dy = 0, 1, 2 row shifts (zero-padded rows give the height halo).
        acc = jnp.dot(a3p[0:HW].astype(jnp.bfloat16), w_ref[0],
                      preferred_element_type=jnp.float32)
        acc = acc + jnp.dot(a3p[W:W + HW].astype(jnp.bfloat16), w_ref[1],
                            preferred_element_type=jnp.float32)
        acc = acc + jnp.dot(a3p[2 * W:2 * W + HW].astype(jnp.bfloat16),
                            w_ref[2], preferred_element_type=jnp.float32)
        acc = acc + b_ref[...]                                 # (1, Cout) bias
        if apply_act:
            acc = jnp.where(acc > 0, acc, 0.05 * acc)          # leaky_relu
        return acc

    # Layer 1 (Cin=1): single (HW, 9) x (9, 64) matmul on the im2col'd input.
    y = jnp.dot(cols1_ref[0], w1_ref[...], preferred_element_type=jnp.float32)
    y = y + b1_ref[...]
    y = jnp.where(y > 0, y, 0.05 * y)
    # F.dropout2d(p=0.001) is identity in eval mode.
    # TODO(synk): training-mode channel dropout not implemented.

    y = conv3x3(y, w2_ref, b2_ref, apply_act=True)    # 64  -> 128
    y = conv3x3(y, w3_ref, b3_ref, apply_act=True)    # 128 -> 64
    y = conv3x3(y, w4_ref, b4_ref, apply_act=False)   # 64  -> 128 (3 + pad)

    out_ref[0] = y        # flat, lane-dense (HW, 128) f32 store


# ----------------------------------------------------------------------------
# Parameter setup (deterministic), BN folding, weight layout (plain-JAX glue)
# ----------------------------------------------------------------------------
def make_conv_params(key, cin, cout, scale=0.08):
    k1, k2 = jax.random.split(key)
    w = scale * jax.random.normal(k1, (cout, cin, 3, 3), jnp.float32)  # OIHW
    b = 0.05 * jax.random.normal(k2, (cout,), jnp.float32)
    return w, b


def make_bn_params(key, c):
    k1, k2, k3, k4 = jax.random.split(key, 4)
    gamma = 1.0 + 0.1 * jax.random.normal(k1, (c,), jnp.float32)
    beta = 0.05 * jax.random.normal(k2, (c,), jnp.float32)
    mean = 0.1 * jax.random.normal(k3, (c,), jnp.float32)
    var = 1.0 + 0.2 * jax.random.uniform(k4, (c,), jnp.float32)
    return gamma, beta, mean, var


def fold_bn(w_oihw, b, bn, eps=1e-5):
    """Fold BatchNorm (inference, running stats) into the preceding conv."""
    gamma, beta, mean, var = bn
    scale = gamma / jnp.sqrt(var + eps)                 # (Cout,)
    return w_oihw * scale[:, None, None, None], (b - mean) * scale + beta


def to_dyrow_major(w_oihw):
    """(Cout,Cin,3,3) -> (3, 3*Cin, Cout), indexed [dy, dx*Cin + cin, cout]."""
    cout, cin = w_oihw.shape[0], w_oihw.shape[1]
    return jnp.transpose(w_oihw, (2, 3, 1, 0)).reshape(3, 3 * cin, cout)


# ----------------------------------------------------------------------------
# Full network forward (single fused Pallas call) and a pure-JAX reference
# ----------------------------------------------------------------------------
def vision_prompt_net_pallas(x_nchw, params):
    (w1, b1, bn1), (w2, b2, bn2), (w3, b3, bn3), (w4, b4) = params
    N, _, H, W = x_nchw.shape
    HW = H * W
    c1, c2, c3, c4 = w1.shape[0], w2.shape[0], w3.shape[0], w4.shape[0]

    # BN folding + MXU-friendly (bf16, tap-row-major) weight layout.
    w1f, b1f = fold_bn(w1, b1, bn1)
    w2f, b2f = fold_bn(w2, b2, bn2)
    w3f, b3f = fold_bn(w3, b3, bn3)
    w1m = jnp.transpose(w1f, (2, 3, 1, 0)).reshape(9, c1).astype(jnp.bfloat16)
    w2m = to_dyrow_major(w2f).astype(jnp.bfloat16)            # (3, 192, 128)
    w3m = to_dyrow_major(w3f).astype(jnp.bfloat16)            # (3, 384, 64)
    w4m = jnp.pad(to_dyrow_major(w4),                          # Cout 3 -> 128
                  ((0, 0), (0, 0), (0, COUT_PAD - c4))).astype(jnp.bfloat16)
    b4m = jnp.pad(b4, (0, COUT_PAD - c4))

    # im2col of the tiny 1-channel network input (layer 1 -> one K=9 matmul).
    xp = jnp.pad(x_nchw[:, 0].astype(jnp.float32), ((0, 0), (1, 1), (1, 1)))
    cols = jnp.stack([xp[:, dy:dy + H, dx:dx + W]
                      for dy in range(3) for dx in range(3)], axis=-1)
    cols = cols.reshape(N, HW, 9).astype(jnp.bfloat16)

    kernel = functools.partial(_fused_kernel, H=H, W=W)
    out = pl.pallas_call(
        kernel,
        out_shape=jax.ShapeDtypeStruct((N, HW, COUT_PAD), jnp.float32),
        grid=(N,),
        in_specs=[
            pl.BlockSpec((1, HW, 9), lambda n: (n, 0, 0)),
            pl.BlockSpec((9, c1), lambda n: (0, 0)),
            pl.BlockSpec((1, c1), lambda n: (0, 0)),
            pl.BlockSpec((3, 3 * c1, c2), lambda n: (0, 0, 0)),
            pl.BlockSpec((1, c2), lambda n: (0, 0)),
            pl.BlockSpec((3, 3 * c2, c3), lambda n: (0, 0, 0)),
            pl.BlockSpec((1, c3), lambda n: (0, 0)),
            pl.BlockSpec((3, 3 * c3, COUT_PAD), lambda n: (0, 0, 0)),
            pl.BlockSpec((1, COUT_PAD), lambda n: (0, 0)),
        ],
        out_specs=pl.BlockSpec((1, HW, COUT_PAD), lambda n: (n, 0, 0)),
        compiler_params=pltpu.CompilerParams(
            dimension_semantics=("parallel",)),     # 1 image per TC on v7x
    )(cols, w1m, b1f[None, :], w2m, b2f[None, :], w3m, b3f[None, :],
      w4m, b4m[None, :])

    y = out[:, :, :c4].reshape(N, H, W, c4)          # drop the pad channels
    return jnp.transpose(y, (0, 3, 1, 2))            # NHWC -> NCHW


def _conv_ref(x, w, b):
    y = lax.conv_general_dilated(
        x, w, window_strides=(1, 1), padding=((1, 1), (1, 1)),
        dimension_numbers=("NCHW", "OIHW", "NCHW"))
    return y + b[None, :, None, None]


def _bn_ref(x, bn, eps=1e-5):
    gamma, beta, mean, var = bn
    inv = gamma / jnp.sqrt(var + eps)
    return (x - mean[None, :, None, None]) * inv[None, :, None, None] \
        + beta[None, :, None, None]


def _lrelu(x):
    return jnp.where(x > 0, x, 0.05 * x)


def vision_prompt_net_ref(x_nchw, params):
    (w1, b1, bn1), (w2, b2, bn2), (w3, b3, bn3), (w4, b4) = params
    x = x_nchw.astype(jnp.float32)
    x = _lrelu(_bn_ref(_conv_ref(x, w1, b1), bn1))
    x = _lrelu(_bn_ref(_conv_ref(x, w2, b2), bn2))
    x = _lrelu(_bn_ref(_conv_ref(x, w3, b3), bn3))
    return _conv_ref(x, w4, b4)


# ----------------------------------------------------------------------------
if __name__ == "__main__":
    key = jax.random.PRNGKey(0)
    ks = jax.random.split(key, 8)

    # Parameters (module __init__ shapes), deterministic init.
    w1, b1 = make_conv_params(ks[0], 1, 64)
    w2, b2 = make_conv_params(ks[1], 64, 128)
    w3, b3 = make_conv_params(ks[2], 128, 64)
    w4, b4 = make_conv_params(ks[3], 64, 3)
    bn1 = make_bn_params(ks[4], 64)
    bn2 = make_bn_params(ks[5], 128)
    bn3 = make_bn_params(ks[6], 64)
    params = ((w1, b1, bn1), (w2, b2, bn2), (w3, b3, bn3), (w4, b4))

    # Input: N=2, C=1 (module expects 1-channel input), 16x16 spatial.
    x = jax.random.normal(ks[7], (2, 1, 16, 16), jnp.float32)

    fwd = jax.jit(vision_prompt_net_pallas)
    out = jax.block_until_ready(fwd(x, params))
    ref = jax.block_until_ready(vision_prompt_net_ref(x, params))

    assert out.shape == (2, 3, 16, 16), out.shape
    # Tolerance loosened vs. pure-f32 because the kernel feeds bf16 to the MXU
    # (f32 accumulation / epilogue), as recommended in the perf review.
    assert jnp.allclose(out, ref, rtol=5e-2, atol=5e-2), \
        float(jnp.max(jnp.abs(out - ref)))

    print("KERNEL_OK")
</pallas_src>

<mosaic_0001>
module attributes {stable_mosaic.version = 11 : i64} {
  func.func @_fused_kernel(%arg0: i32, %arg1: memref<1x256x9xbf16, #tpu.memory_space<vmem>>, %arg2: memref<9x64xbf16, #tpu.memory_space<vmem>>, %arg3: memref<1x64xf32, #tpu.memory_space<vmem>>, %arg4: memref<3x192x128xbf16, #tpu.memory_space<vmem>>, %arg5: memref<1x128xf32, #tpu.memory_space<vmem>>, %arg6: memref<3x384x64xbf16, #tpu.memory_space<vmem>>, %arg7: memref<1x64xf32, #tpu.memory_space<vmem>>, %arg8: memref<3x192x128xbf16, #tpu.memory_space<vmem>>, %arg9: memref<1x128xf32, #tpu.memory_space<vmem>>, %arg10: memref<1x256x128xf32, #tpu.memory_space<vmem>>) attributes {dimension_semantics = [#tpu.dimension_semantics<parallel>], iteration_bounds = array<i64: 2>, scalar_prefetch = 0 : i64, scratch_operands = 0 : i64, tpu.core_type = #tpu.core_type<tc>, window_params = [{transform_indices = @transform_0, window_bounds = array<i64: 1, 256, 9>}, {pipeline_mode = #tpu.pipeline_mode<synchronous>, transform_indices = @transform_1, window_bounds = array<i64: 9, 64>}, {pipeline_mode = #tpu.pipeline_mode<synchronous>, transform_indices = @transform_2, window_bounds = array<i64: 1, 64>}, {pipeline_mode = #tpu.pipeline_mode<synchronous>, transform_indices = @transform_3, window_bounds = array<i64: 3, 192, 128>}, {pipeline_mode = #tpu.pipeline_mode<synchronous>, transform_indices = @transform_4, window_bounds = array<i64: 1, 128>}, {pipeline_mode = #tpu.pipeline_mode<synchronous>, transform_indices = @transform_5, window_bounds = array<i64: 3, 384, 64>}, {pipeline_mode = #tpu.pipeline_mode<synchronous>, transform_indices = @transform_6, window_bounds = array<i64: 1, 64>}, {pipeline_mode = #tpu.pipeline_mode<synchronous>, transform_indices = @transform_7, window_bounds = array<i64: 3, 192, 128>}, {pipeline_mode = #tpu.pipeline_mode<synchronous>, transform_indices = @transform_8, window_bounds = array<i64: 1, 128>}, {transform_indices = @transform_9, window_bounds = array<i64: 1, 256, 128>}]} {
    %0 = tpu.iota {dimensions = array<i32: 0>} : vector<256x1xi32>
    %c16_i32 = arith.constant 16 : i32
    %c0_i32 = arith.constant 0 : i32
    %1 = arith.cmpi eq, %c16_i32, %c0_i32 : i32
    %c1_i32 = arith.constant 1 : i32
    %2 = arith.select %1, %c1_i32, %c16_i32 : i32
    %3 = vector.broadcast %2 : i32 to vector<256x1xi32>
    %4 = arith.remsi %0, %3 : vector<256x1xi32>
    %c0_i32_0 = arith.constant 0 : i32
    %5 = vector.broadcast %c0_i32_0 : i32 to vector<256x1xi32>
    %6 = arith.cmpi ne, %4, %5 : vector<256x1xi32>
    %c0_i32_1 = arith.constant 0 : i32
    %7 = vector.broadcast %c0_i32_1 : i32 to vector<256x1xi32>
    %8 = arith.cmpi slt, %4, %7 : vector<256x1xi32>
    %c0_i32_2 = arith.constant 0 : i32
    %9 = arith.cmpi slt, %2, %c0_i32_2 : i32
    %10 = vector.broadcast %9 : i1 to vector<256x1xi1>
    %11 = vector.broadcast %10 : vector<256x1xi1> to vector<256x1xi1>
    %12 = arith.xori %8, %11 : vector<256x1xi1>
    %13 = arith.andi %12, %6 : vector<256x1xi1>
    %14 = vector.broadcast %2 : i32 to vector<256x1xi32>
    %15 = arith.addi %4, %14 : vector<256x1xi32>
    %16 = arith.select %13, %15, %4 : vector<256x1xi1>, vector<256x1xi32>
    %c0_i32_3 = arith.constant 0 : i32
    %17 = vector.broadcast %c0_i32_3 : i32 to vector<256x1xi32>
    %18 = arith.cmpi sgt, %16, %17 : vector<256x1xi32>
    %c15_i32 = arith.constant 15 : i32
    %19 = vector.broadcast %c15_i32 : i32 to vector<256x1xi32>
    %20 = arith.cmpi slt, %16, %19 : vector<256x1xi32>
    %c0 = arith.constant 0 : index
    %c0_4 = arith.constant 0 : index
    %c0_5 = arith.constant 0 : index
    %21 = vector.load %arg1[%c0, %c0_4, %c0_5] : memref<1x256x9xbf16, #tpu.memory_space<vmem>>, vector<1x256x9xbf16>
    %22 = vector.shape_cast %21 : vector<1x256x9xbf16> to vector<256x9xbf16>
    %c0_6 = arith.constant 0 : index
    %c0_7 = arith.constant 0 : index
    %23 = vector.load %arg2[%c0_6, %c0_7] : memref<9x64xbf16, #tpu.memory_space<vmem>>, vector<9x64xbf16>
    %cst = arith.constant dense<0.000000e+00> : vector<256x64xf32>
    %24 = tpu.matmul %22, %23, %cst {dimension_numbers = #tpu.dot_dimension_numbers<[1], [0], [0], [1], [0, 0, 1, 1], [], []>} : vector<256x9xbf16>, vector<9x64xbf16>, vector<256x64xf32> -> vector<256x64xf32>
    %c0_8 = arith.constant 0 : index
    %c0_9 = arith.constant 0 : index
    %25 = vector.load %arg3[%c0_8, %c0_9] : memref<1x64xf32, #tpu.memory_space<vmem>>, vector<1x64xf32>
    %26 = vector.broadcast %25 : vector<1x64xf32> to vector<256x64xf32>
    %27 = arith.addf %24, %26 : vector<256x64xf32>
    %cst_10 = arith.constant 0.000000e+00 : f32
    %28 = vector.broadcast %cst_10 : f32 to vector<256x64xf32>
    %29 = arith.cmpf ogt, %27, %28 : vector<256x64xf32>
    %cst_11 = arith.constant 5.000000e-02 : f32
    %30 = vector.broadcast %cst_11 : f32 to vector<256x64xf32>
    %31 = arith.mulf %30, %27 : vector<256x64xf32>
    %32 = arith.select %29, %27, %31 : vector<256x64xi1>, vector<256x64xf32>
    %cst_12 = arith.constant 0.000000e+00 : f32
    %33 = vector.broadcast %cst_12 : f32 to vector<8x64xf32>
    %34 = tpu.concatenate %33, %32, %33 in 0 : vector<8x64xf32>, vector<256x64xf32>, vector<8x64xf32> -> vector<272x64xf32>
    %35 = vector.extract_strided_slice %34 {offsets = [7, 0], sizes = [256, 64], strides = [1, 1]} : vector<272x64xf32> to vector<256x64xf32>
    %cst_13 = arith.constant 0.000000e+00 : f32
    %36 = vector.shape_cast %18 : vector<256x1xi1> to vector<256x1xi1>
    %37 = vector.broadcast %36 : vector<256x1xi1> to vector<256x64xi1>
    %38 = vector.broadcast %cst_13 : f32 to vector<256x64xf32>
    %39 = arith.select %37, %35, %38 : vector<256x64xi1>, vector<256x64xf32>
    %40 = vector.extract_strided_slice %34 {offsets = [9, 0], sizes = [256, 64], strides = [1, 1]} : vector<272x64xf32> to vector<256x64xf32>
    %cst_14 = arith.constant 0.000000e+00 : f32
    %41 = vector.shape_cast %20 : vector<256x1xi1> to vector<256x1xi1>
    %42 = vector.broadcast %41 : vector<256x1xi1> to vector<256x64xi1>
    %43 = vector.broadcast %cst_14 : f32 to vector<256x64xf32>
    %44 = arith.select %42, %40, %43 : vector<256x64xi1>, vector<256x64xf32>
    %45 = tpu.concatenate %39, %32, %44 in 1 : vector<256x64xf32>, vector<256x64xf32>, vector<256x64xf32> -> vector<256x192xf32>
    %cst_15 = arith.constant 0.000000e+00 : f32
    %46 = vector.broadcast %cst_15 : f32 to vector<16x192xf32>
    %47 = tpu.concatenate %46, %45, %46 in 0 : vector<16x192xf32>, vector<256x192xf32>, vector<16x192xf32> -> vector<288x192xf32>
    %48 = vector.extract_strided_slice %47 {offsets = [0, 0], sizes = [256, 192], strides = [1, 1]} : vector<288x192xf32> to vector<256x192xf32>
    %49 = arith.truncf %48 : vector<256x192xf32> to vector<256x192xbf16>
    %c0_16 = arith.constant 0 : index
    %c0_17 = arith.constant 0 : index
    %c0_18 = arith.constant 0 : index
    %50 = vector.load %arg4[%c0_16, %c0_17, %c0_18] : memref<3x192x128xbf16, #tpu.memory_space<vmem>>, vector<1x192x128xbf16>
    %51 = vector.shape_cast %50 : vector<1x192x128xbf16> to vector<192x128xbf16>
    %cst_19 = arith.constant dense<0.000000e+00> : vector<256x128xf32>
    %52 = tpu.matmul %49, %51, %cst_19 {dimension_numbers = #tpu.dot_dimension_numbers<[1], [0], [0], [1], [0, 0, 1, 1], [], []>} : vector<256x192xbf16>, vector<192x128xbf16>, vector<256x128xf32> -> vector<256x128xf32>
    %53 = vector.extract_strided_slice %47 {offsets = [16, 0], sizes = [256, 192], strides = [1, 1]} : vector<288x192xf32> to vector<256x192xf32>
    %54 = arith.truncf %53 : vector<256x192xf32> to vector<256x192xbf16>
    %c1 = arith.constant 1 : index
    %c0_20 = arith.constant 0 : index
    %c0_21 = arith.constant 0 : index
    %55 = vector.load %arg4[%c1, %c0_20, %c0_21] : memref<3x192x128xbf16, #tpu.memory_space<vmem>>, vector<1x192x128xbf16>
    %56 = vector.shape_cast %55 : vector<1x192x128xbf16> to vector<192x128xbf16>
    %cst_22 = arith.constant dense<0.000000e+00> : vector<256x128xf32>
    %57 = tpu.matmul %54, %56, %cst_22 {dimension_numbers = #tpu.dot_dimension_numbers<[1], [0], [0], [1], [0, 0, 1, 1], [], []>} : vector<256x192xbf16>, vector<192x128xbf16>, vector<256x128xf32> -> vector<256x128xf32>
    %58 = arith.addf %52, %57 : vector<256x128xf32>
    %59 = vector.extract_strided_slice %47 {offsets = [32, 0], sizes = [256, 192], strides = [1, 1]} : vector<288x192xf32> to vector<256x192xf32>
    %60 = arith.truncf %59 : vector<256x192xf32> to vector<256x192xbf16>
    %c2 = arith.constant 2 : index
    %c0_23 = arith.constant 0 : index
    %c0_24 = arith.constant 0 : index
    %61 = vector.load %arg4[%c2, %c0_23, %c0_24] : memref<3x192x128xbf16, #tpu.memory_space<vmem>>, vector<1x192x128xbf16>
    %62 = vector.shape_cast %61 : vector<1x192x128xbf16> to vector<192x128xbf16>
    %cst_25 = arith.constant dense<0.000000e+00> : vector<256x128xf32>
    %63 = tpu.matmul %60, %62, %cst_25 {dimension_numbers = #tpu.dot_dimension_numbers<[1], [0], [0], [1], [0, 0, 1, 1], [], []>} : vector<256x192xbf16>, vector<192x128xbf16>, vector<256x128xf32> -> vector<256x128xf32>
    %64 = arith.addf %58, %63 : vector<256x128xf32>
    %c0_26 = arith.constant 0 : index
    %c0_27 = arith.constant 0 : index
    %65 = vector.load %arg5[%c0_26, %c0_27] : memref<1x128xf32, #tpu.memory_space<vmem>>, vector<1x128xf32>
    %66 = vector.broadcast %65 : vector<1x128xf32> to vector<256x128xf32>
    %67 = arith.addf %64, %66 : vector<256x128xf32>
    %cst_28 = arith.constant 0.000000e+00 : f32
    %68 = vector.broadcast %cst_28 : f32 to vector<256x128xf32>
    %69 = arith.cmpf ogt, %67, %68 : vector<256x128xf32>
    %cst_29 = arith.constant 5.000000e-02 : f32
    %70 = vector.broadcast %cst_29 : f32 to vector<256x128xf32>
    %71 = arith.mulf %70, %67 : vector<256x128xf32>
    %72 = arith.select %69, %67, %71 : vector<256x128xi1>, vector<256x128xf32>
    %cst_30 = arith.constant 0.000000e+00 : f32
    %73 = vector.broadcast %cst_30 : f32 to vector<8x128xf32>
    %74 = tpu.concatenate %73, %72, %73 in 0 : vector<8x128xf32>, vector<256x128xf32>, vector<8x128xf32> -> vector<272x128xf32>
    %75 = vector.extract_strided_slice %74 {offsets = [7, 0], sizes = [256, 128], strides = [1, 1]} : vector<272x128xf32> to vector<256x128xf32>
    %cst_31 = arith.constant 0.000000e+00 : f32
    %76 = vector.shape_cast %18 : vector<256x1xi1> to vector<256x1xi1>
    %77 = vector.broadcast %76 : vector<256x1xi1> to vector<256x128xi1>
    %78 = vector.broadcast %cst_31 : f32 to vector<256x128xf32>
    %79 = arith.select %77, %75, %78 : vector<256x128xi1>, vector<256x128xf32>
    %80 = vector.extract_strided_slice %74 {offsets = [9, 0], sizes = [256, 128], strides = [1, 1]} : vector<272x128xf32> to vector<256x128xf32>
    %cst_32 = arith.constant 0.000000e+00 : f32
    %81 = vector.shape_cast %20 : vector<256x1xi1> to vector<256x1xi1>
    %82 = vector.broadcast %81 : vector<256x1xi1> to vector<256x128xi1>
    %83 = vector.broadcast %cst_32 : f32 to vector<256x128xf32>
    %84 = arith.select %82, %80, %83 : vector<256x128xi1>, vector<256x128xf32>
    %85 = tpu.concatenate %79, %72, %84 in 1 : vector<256x128xf32>, vector<256x128xf32>, vector<256x128xf32> -> vector<256x384xf32>
    %cst_33 = arith.constant 0.000000e+00 : f32
    %86 = vector.broadcast %cst_33 : f32 to vector<16x384xf32>
    %87 = tpu.concatenate %86, %85, %86 in 0 : vector<16x384xf32>, vector<256x384xf32>, vector<16x384xf32> -> vector<288x384xf32>
    %88 = vector.extract_strided_slice %87 {offsets = [0, 0], sizes = [256, 384], strides = [1, 1]} : vector<288x384xf32> to vector<256x384xf32>
    %89 = arith.truncf %88 : vector<256x384xf32> to vector<256x384xbf16>
    %c0_34 = arith.constant 0 : index
    %c0_35 = arith.constant 0 : index
    %c0_36 = arith.constant 0 : index
    %90 = vector.load %arg6[%c0_34, %c0_35, %c0_36] : memref<3x384x64xbf16, #tpu.memory_space<vmem>>, vector<1x384x64xbf16>
    %91 = vector.shape_cast %90 : vector<1x384x64xbf16> to vector<384x64xbf16>
    %cst_37 = arith.constant dense<0.000000e+00> : vector<256x64xf32>
    %92 = tpu.matmul %89, %91, %cst_37 {dimension_numbers = #tpu.dot_dimension_numbers<[1], [0], [0], [1], [0, 0, 1, 1], [], []>} : vector<256x384xbf16>, vector<384x64xbf16>, vector<256x64xf32> -> vector<256x64xf32>
    %93 = vector.extract_strided_slice %87 {offsets = [16, 0], sizes = [256, 384], strides = [1, 1]} : vector<288x384xf32> to vector<256x384xf32>
    %94 = arith.truncf %93 : vector<256x384xf32> to vector<256x384xbf16>
    %c1_38 = arith.constant 1 : index
    %c0_39 = arith.constant 0 : index
    %c0_40 = arith.constant 0 : index
    %95 = vector.load %arg6[%c1_38, %c0_39, %c0_40] : memref<3x384x64xbf16, #tpu.memory_space<vmem>>, vector<1x384x64xbf16>
    %96 = vector.shape_cast %95 : vector<1x384x64xbf16> to vector<384x64xbf16>
    %cst_41 = arith.constant dense<0.000000e+00> : vector<256x64xf32>
    %97 = tpu.matmul %94, %96, %cst_41 {dimension_numbers = #tpu.dot_dimension_numbers<[1], [0], [0], [1], [0, 0, 1, 1], [], []>} : vector<256x384xbf16>, vector<384x64xbf16>, vector<256x64xf32> -> vector<256x64xf32>
    %98 = arith.addf %92, %97 : vector<256x64xf32>
    %99 = vector.extract_strided_slice %87 {offsets = [32, 0], sizes = [256, 384], strides = [1, 1]} : vector<288x384xf32> to vector<256x384xf32>
    %100 = arith.truncf %99 : vector<256x384xf32> to vector<256x384xbf16>
    %c2_42 = arith.constant 2 : index
    %c0_43 = arith.constant 0 : index
    %c0_44 = arith.constant 0 : index
    %101 = vector.load %arg6[%c2_42, %c0_43, %c0_44] : memref<3x384x64xbf16, #tpu.memory_space<vmem>>, vector<1x384x64xbf16>
    %102 = vector.shape_cast %101 : vector<1x384x64xbf16> to vector<384x64xbf16>
    %cst_45 = arith.constant dense<0.000000e+00> : vector<256x64xf32>
    %103 = tpu.matmul %100, %102, %cst_45 {dimension_numbers = #tpu.dot_dimension_numbers<[1], [0], [0], [1], [0, 0, 1, 1], [], []>} : vector<256x384xbf16>, vector<384x64xbf16>, vector<256x64xf32> -> vector<256x64xf32>
    %104 = arith.addf %98, %103 : vector<256x64xf32>
    %c0_46 = arith.constant 0 : index
    %c0_47 = arith.constant 0 : index
    %105 = vector.load %arg7[%c0_46, %c0_47] : memref<1x64xf32, #tpu.memory_space<vmem>>, vector<1x64xf32>
    %106 = vector.broadcast %105 : vector<1x64xf32> to vector<256x64xf32>
    %107 = arith.addf %104, %106 : vector<256x64xf32>
    %cst_48 = arith.constant 0.000000e+00 : f32
    %108 = vector.broadcast %cst_48 : f32 to vector<256x64xf32>
    %109 = arith.cmpf ogt, %107, %108 : vector<256x64xf32>
    %cst_49 = arith.constant 5.000000e-02 : f32
    %110 = vector.broadcast %cst_49 : f32 to vector<256x64xf32>
    %111 = arith.mulf %110, %107 : vector<256x64xf32>
    %112 = arith.select %109, %107, %111 : vector<256x64xi1>, vector<256x64xf32>
    %cst_50 = arith.constant 0.000000e+00 : f32
    %113 = vector.broadcast %cst_50 : f32 to vector<8x64xf32>
    %114 = tpu.concatenate %113, %112, %113 in 0 : vector<8x64xf32>, vector<256x64xf32>, vector<8x64xf32> -> vector<272x64xf32>
    %115 = vector.extract_strided_slice %114 {offsets = [7, 0], sizes = [256, 64], strides = [1, 1]} : vector<272x64xf32> to vector<256x64xf32>
    %cst_51 = arith.constant 0.000000e+00 : f32
    %116 = vector.shape_cast %18 : vector<256x1xi1> to vector<256x1xi1>
    %117 = vector.broadcast %116 : vector<256x1xi1> to vector<256x64xi1>
    %118 = vector.broadcast %cst_51 : f32 to vector<256x64xf32>
    %119 = arith.select %117, %115, %118 : vector<256x64xi1>, vector<256x64xf32>
    %120 = vector.extract_strided_slice %114 {offsets = [9, 0], sizes = [256, 64], strides = [1, 1]} : vector<272x64xf32> to vector<256x64xf32>
    %cst_52 = arith.constant 0.000000e+00 : f32
    %121 = vector.shape_cast %20 : vector<256x1xi1> to vector<256x1xi1>
    %122 = vector.broadcast %121 : vector<256x1xi1> to vector<256x64xi1>
    %123 = vector.broadcast %cst_52 : f32 to vector<256x64xf32>
    %124 = arith.select %122, %120, %123 : vector<256x64xi1>, vector<256x64xf32>
    %125 = tpu.concatenate %119, %112, %124 in 1 : vector<256x64xf32>, vector<256x64xf32>, vector<256x64xf32> -> vector<256x192xf32>
    %cst_53 = arith.constant 0.000000e+00 : f32
    %126 = vector.broadcast %cst_53 : f32 to vector<16x192xf32>
    %127 = tpu.concatenate %126, %125, %126 in 0 : vector<16x192xf32>, vector<256x192xf32>, vector<16x192xf32> -> vector<288x192xf32>
    %128 = vector.extract_strided_slice %127 {offsets = [0, 0], sizes = [256, 192], strides = [1, 1]} : vector<288x192xf32> to vector<256x192xf32>
    %129 = arith.truncf %128 : vector<256x192xf32> to vector<256x192xbf16>
    %c0_54 = arith.constant 0 : index
    %c0_55 = arith.constant 0 : index
    %c0_56 = arith.constant 0 : index
    %130 = vector.load %arg8[%c0_54, %c0_55, %c0_56] : memref<3x192x128xbf16, #tpu.memory_space<vmem>>, vector<1x192x128xbf16>
    %131 = vector.shape_cast %130 : vector<1x192x128xbf16> to vector<192x128xbf16>
    %cst_57 = arith.constant dense<0.000000e+00> : vector<256x128xf32>
    %132 = tpu.matmul %129, %131, %cst_57 {dimension_numbers = #tpu.dot_dimension_numbers<[1], [0], [0], [1], [0, 0, 1, 1], [], []>} : vector<256x192xbf16>, vector<192x128xbf16>, vector<256x128xf32> -> vector<256x128xf32>
    %133 = vector.extract_strided_slice %127 {offsets = [16, 0], sizes = [256, 192], strides = [1, 1]} : vector<288x192xf32> to vector<256x192xf32>
    %134 = arith.truncf %133 : vector<256x192xf32> to vector<256x192xbf16>
    %c1_58 = arith.constant 1 : index
    %c0_59 = arith.constant 0 : index
    %c0_60 = arith.constant 0 : index
    %135 = vector.load %arg8[%c1_58, %c0_59, %c0_60] : memref<3x192x128xbf16, #tpu.memory_space<vmem>>, vector<1x192x128xbf16>
    %136 = vector.shape_cast %135 : vector<1x192x128xbf16> to vector<192x128xbf16>
    %cst_61 = arith.constant dense<0.000000e+00> : vector<256x128xf32>
    %137 = tpu.matmul %134, %136, %cst_61 {dimension_numbers = #tpu.dot_dimension_numbers<[1], [0], [0], [1], [0, 0, 1, 1], [], []>} : vector<256x192xbf16>, vector<192x128xbf16>, vector<256x128xf32> -> vector<256x128xf32>
    %138 = arith.addf %132, %137 : vector<256x128xf32>
    %139 = vector.extract_strided_slice %127 {offsets = [32, 0], sizes = [256, 192], strides = [1, 1]} : vector<288x192xf32> to vector<256x192xf32>
    %140 = arith.truncf %139 : vector<256x192xf32> to vector<256x192xbf16>
    %c2_62 = arith.constant 2 : index
    %c0_63 = arith.constant 0 : index
    %c0_64 = arith.constant 0 : index
    %141 = vector.load %arg8[%c2_62, %c0_63, %c0_64] : memref<3x192x128xbf16, #tpu.memory_space<vmem>>, vector<1x192x128xbf16>
    %142 = vector.shape_cast %141 : vector<1x192x128xbf16> to vector<192x128xbf16>
    %cst_65 = arith.constant dense<0.000000e+00> : vector<256x128xf32>
    %143 = tpu.matmul %140, %142, %cst_65 {dimension_numbers = #tpu.dot_dimension_numbers<[1], [0], [0], [1], [0, 0, 1, 1], [], []>} : vector<256x192xbf16>, vector<192x128xbf16>, vector<256x128xf32> -> vector<256x128xf32>
    %144 = arith.addf %138, %143 : vector<256x128xf32>
    %c0_66 = arith.constant 0 : index
    %c0_67 = arith.constant 0 : index
    %145 = vector.load %arg9[%c0_66, %c0_67] : memref<1x128xf32, #tpu.memory_space<vmem>>, vector<1x128xf32>
    %146 = vector.broadcast %145 : vector<1x128xf32> to vector<256x128xf32>
    %147 = arith.addf %144, %146 : vector<256x128xf32>
    %c0_68 = arith.constant 0 : index
    %c0_69 = arith.constant 0 : index
    %c0_70 = arith.constant 0 : index
    %148 = vector.load %arg10[%c0_68, %c0_69, %c0_70] : memref<1x256x128xf32, #tpu.memory_space<vmem>>, vector<1x256x128xf32>
    %149 = vector.shape_cast %148 : vector<1x256x128xf32> to vector<256x128xf32>
    %150 = vector.shape_cast %147 : vector<256x128xf32> to vector<1x256x128xf32>
    tpu.vector_store %arg10[%c0_68, %c0_69, %c0_70], %150 {strides = array<i32>} : memref<1x256x128xf32, #tpu.memory_space<vmem>>, vector<1x256x128xf32>,
    return
  }
  func.func @transform_0(%arg0: i32) -> (i32, i32, i32) {
    %c0_i32 = arith.constant 0 : i32
    %c0_i32_0 = arith.constant 0 : i32
    %c0_i32_1 = arith.constant 0 : i32
    return %arg0, %c0_i32, %c0_i32_0 : i32, i32, i32
  }
  func.func @transform_1(%arg0: i32) -> (i32, i32) {
    %c0_i32 = arith.constant 0 : i32
    %c0_i32_0 = arith.constant 0 : i32
    %c0_i32_1 = arith.constant 0 : i32
    return %c0_i32, %c0_i32_0 : i32, i32
  }
  func.func @transform_2(%arg0: i32) -> (i32, i32) {
    %c0_i32 = arith.constant 0 : i32
    %c0_i32_0 = arith.constant 0 : i32
    %c0_i32_1 = arith.constant 0 : i32
    return %c0_i32, %c0_i32_0 : i32, i32
  }
  func.func @transform_3(%arg0: i32) -> (i32, i32, i32) {
    %c0_i32 = arith.constant 0 : i32
    %c0_i32_0 = arith.constant 0 : i32
    %c0_i32_1 = arith.constant 0 : i32
    %c0_i32_2 = arith.constant 0 : i32
    return %c0_i32, %c0_i32_0, %c0_i32_1 : i32, i32, i32
  }
  func.func @transform_4(%arg0: i32) -> (i32, i32) {
    %c0_i32 = arith.constant 0 : i32
    %c0_i32_0 = arith.constant 0 : i32
    %c0_i32_1 = arith.constant 0 : i32
    return %c0_i32, %c0_i32_0 : i32, i32
  }
  func.func @transform_5(%arg0: i32) -> (i32, i32, i32) {
    %c0_i32 = arith.constant 0 : i32
    %c0_i32_0 = arith.constant 0 : i32
    %c0_i32_1 = arith.constant 0 : i32
    %c0_i32_2 = arith.constant 0 : i32
    return %c0_i32, %c0_i32_0, %c0_i32_1 : i32, i32, i32
  }
  func.func @transform_6(%arg0: i32) -> (i32, i32) {
    %c0_i32 = arith.constant 0 : i32
    %c0_i32_0 = arith.constant 0 : i32
    %c0_i32_1 = arith.constant 0 : i32
    return %c0_i32, %c0_i32_0 : i32, i32
  }
  func.func @transform_7(%arg0: i32) -> (i32, i32, i32) {
    %c0_i32 = arith.constant 0 : i32
    %c0_i32_0 = arith.constant 0 : i32
    %c0_i32_1 = arith.constant 0 : i32
    %c0_i32_2 = arith.constant 0 : i32
    return %c0_i32, %c0_i32_0, %c0_i32_1 : i32, i32, i32
  }
  func.func @transform_8(%arg0: i32) -> (i32, i32) {
    %c0_i32 = arith.constant 0 : i32
    %c0_i32_0 = arith.constant 0 : i32
    %c0_i32_1 = arith.constant 0 : i32
    return %c0_i32, %c0_i32_0 : i32, i32
  }
  func.func @transform_9(%arg0: i32) -> (i32, i32, i32) {
    %c0_i32 = arith.constant 0 : i32
    %c0_i32_0 = arith.constant 0 : i32
    %c0_i32_1 = arith.constant 0 : i32
    return %arg0, %c0_i32, %c0_i32_0 : i32, i32, i32
  }
}

</mosaic_0001>

<llo_original>
// kernel: vision_prompt_net_pallas.1
$region0: #{vision_prompt_net_pallas.1}
  #allocation0 [shape = 'u32[]', space=smem, size = 0x4, offset = 0x4, fixed_abs, tag = 'smem constant byte address 0x4 - core index']
  #allocation1 [shape = 'u32[144,128]{1,0:T(1,128)}', space=vmem, size = 0x12000, scoped, tag = 'internal scratch']
  %s0 = inlined_call_operand.vmem [shape: bf16[2,256,9], index: 0, kind: input, shape index: {}]
  %s1 = inlined_call_operand.vmem [shape: bf16[9,64], index: 1, kind: input, shape index: {}]
  %s2 = inlined_call_operand.vmem [shape: f32[1,64], index: 2, kind: input, shape index: {}]
  %s3 = inlined_call_operand.vmem [shape: bf16[3,192,128], index: 3, kind: input, shape index: {}]
  %s4 = inlined_call_operand.vmem [shape: f32[1,128], index: 4, kind: input, shape index: {}]
  %s5 = inlined_call_operand.vmem [shape: bf16[3,384,64], index: 5, kind: input, shape index: {}]
  %s6 = inlined_call_operand.vmem [shape: f32[1,64], index: 6, kind: input, shape index: {}]
  %s7 = inlined_call_operand.vmem [shape: bf16[3,192,128], index: 7, kind: input, shape index: {}]
  %s8 = inlined_call_operand.vmem [shape: f32[1,128], index: 8, kind: input, shape index: {}]
  %s9 = inlined_call_operand.vmem [shape: f32[2,256,128], index: 9, kind: output, shape index: {}]
  %s10 = sld [smem:[#allocation0]]
  $region69: #{vision_prompt_net_pallas.1} parent=0
    _
  %s12 = ssub.s32 1, %s10
  %s13 = scalar_select 0, %s12, %s10
  loop: start=0, step=1, limit=4
  $region2: #{vision_prompt_net_pallas.1} parent=0 // loop_pre_header
    _
  $region3: #{vision_prompt_net_pallas.1} parent=0 // loop_header
    %s15 = sphi 0, %s19
    %p16 = scmp.ge.s32.totalorder %s15, 4
    %s25 = sphi 0, %s27
    %s28 = sphi 0, %s25
    %s29 = sphi 0, %s28
    %s45 = sphi 0, %s29
    %s49 = sphi 0, %s49
    %s51 = sphi 0, %s49
    %s52 = sphi 0, %s51
    %s66 = sphi 0, %s52
    %s70 = sphi 0, %s70
    %s72 = sphi 0, %s70
    %s73 = sphi 0, %s72
    %s87 = sphi 0, %s73
    %s91 = sphi 0, %s91
    %s93 = sphi 0, %s91
    %s94 = sphi 0, %s93
    %s108 = sphi 0, %s94
    %s112 = sphi 0, %s112
    %s114 = sphi 0, %s112
    %s115 = sphi 0, %s114
    %s129 = sphi 0, %s115
    %s133 = sphi 0, %s133
    %s135 = sphi 0, %s133
    %s136 = sphi 0, %s135
    %s150 = sphi 0, %s136
    %s154 = sphi 0, %s154
    %s156 = sphi 0, %s154
    %s157 = sphi 0, %s156
    %s171 = sphi 0, %s157
    %s175 = sphi 0, %s175
    %s177 = sphi 0, %s175
    %s178 = sphi 0, %s177
    %s192 = sphi 0, %s178
    %s196 = sphi 0, %s196
    %s198 = sphi 0, %s196
    %s199 = sphi 0, %s198
    %s213 = sphi 0, %s199
    %s219 = sphi 0, %s221
    %s222 = sphi 0, %s219
    %s223 = sphi 0, %s222
    %s239 = sphi 0, %s223
  $region4: #{vision_prompt_net_pallas.1} parent=0 // loop_header_branch
    %18 = sbr.rel (%p16) target = $region8
  $region5: #{vision_prompt_net_pallas.1} parent=0 // loop_body
    %s20 = ssub.s32 %s15, 1
    %s21 = ssub.s32 %s15, 2
    %s22 = sadd.s32 %s15, 1
    %s23 = ssub.s32 %s15, %s22
    %p24 = scmp.eq.s32.totalorder %s23, 0
    %s26 = sadd.s32 %s25, 1
    %s27 = scalar_select %p24, %s25, %s26
    %p30 = pneg %p24
    %p31 = scmp.eq.s32.totalorder %s15, 1
    %p32 = por %p30, %p31
    %p33 = scmp.ne.s32.totalorder %s25, %s28
    %p34 = scmp.eq.s32.totalorder %s15, 0
    %p35 = por %p33, %p34
    %p36 = scmp.ne.s32.totalorder %s25, %s28
    %p37 = scmp.eq.s32.totalorder %s20, 1
    %p38 = por %p36, %p37
    %p39 = scmp.ne.s32.totalorder %s28, %s29
    %p40 = scmp.eq.s32.totalorder %s20, 0
    %p41 = por %p39, %p40
    %p42 = scmp.ne.s32.totalorder %s28, %s29
    %p43 = scmp.eq.s32.totalorder %s21, 1
    %p44 = por %p42, %p43
    %p46 = scmp.ne.s32.totalorder %s29, %s45
    %p47 = scmp.eq.s32.totalorder %s21, 0
    %p48 = por %p46, %p47
    %s50 = sadd.s32 %s49, 1
    %p53 = scmp.eq.s32.totalorder %s15, 1
    %p54 = scmp.ne.s32.totalorder %s49, %s51
    %p55 = scmp.eq.s32.totalorder %s15, 0
    %p56 = por %p54, %p55
    %p57 = scmp.ne.s32.totalorder %s49, %s51
    %p58 = scmp.eq.s32.totalorder %s20, 1
    %p59 = por %p57, %p58
    %p60 = scmp.ne.s32.totalorder %s51, %s52
    %p61 = scmp.eq.s32.totalorder %s20, 0
    %p62 = por %p60, %p61
    %p63 = scmp.ne.s32.totalorder %s51, %s52
    %p64 = scmp.eq.s32.totalorder %s21, 1
    %p65 = por %p63, %p64
    %p67 = scmp.ne.s32.totalorder %s52, %s66
    %p68 = scmp.eq.s32.totalorder %s21, 0
    %p69 = por %p67, %p68
    %s71 = sadd.s32 %s70, 1
    %p74 = scmp.eq.s32.totalorder %s15, 1
    %p75 = scmp.ne.s32.totalorder %s70, %s72
    %p76 = scmp.eq.s32.totalorder %s15, 0
    %p77 = por %p75, %p76
    %p78 = scmp.ne.s32.totalorder %s70, %s72
    %p79 = scmp.eq.s32.totalorder %s20, 1
    %p80 = por %p78, %p79
    %p81 = scmp.ne.s32.totalorder %s72, %s73
    %p82 = scmp.eq.s32.totalorder %s20, 0
    %p83 = por %p81, %p82
    %p84 = scmp.ne.s32.totalorder %s72, %s73
    %p85 = scmp.eq.s32.totalorder %s21, 1
    %p86 = por %p84, %p85
    %p88 = scmp.ne.s32.totalorder %s73, %s87
    %p89 = scmp.eq.s32.totalorder %s21, 0
    %p90 = por %p88, %p89
    %s92 = sadd.s32 %s91, 1
    %p95 = scmp.eq.s32.totalorder %s15, 1
    %p96 = scmp.ne.s32.totalorder %s91, %s93
    %p97 = scmp.eq.s32.totalorder %s15, 0
    %p98 = por %p96, %p97
    %p99 = scmp.ne.s32.totalorder %s91, %s93
    %p100 = scmp.eq.s32.totalorder %s20, 1
    %p101 = por %p99, %p100
    %p102 = scmp.ne.s32.totalorder %s93, %s94
    %p103 = scmp.eq.s32.totalorder %s20, 0
    %p104 = por %p102, %p103
    %p105 = scmp.ne.s32.totalorder %s93, %s94
    %p106 = scmp.eq.s32.totalorder %s21, 1
    %p107 = por %p105, %p106
    %p109 = scmp.ne.s32.totalorder %s94, %s108
    %p110 = scmp.eq.s32.totalorder %s21, 0
    %p111 = por %p109, %p110
    %s113 = sadd.s32 %s112, 1
    %p116 = scmp.eq.s32.totalorder %s15, 1
    %p117 = scmp.ne.s32.totalorder %s112, %s114
    %p118 = scmp.eq.s32.totalorder %s15, 0
    %p119 = por %p117, %p118
    %p120 = scmp.ne.s32.totalorder %s112, %s114
    %p121 = scmp.eq.s32.totalorder %s20, 1
    %p122 = por %p120, %p121
    %p123 = scmp.ne.s32.totalorder %s114, %s115
    %p124 = scmp.eq.s32.totalorder %s20, 0
    %p125 = por %p123, %p124
    %p126 = scmp.ne.s32.totalorder %s114, %s115
    %p127 = scmp.eq.s32.totalorder %s21, 1
    %p128 = por %p126, %p127
    %p130 = scmp.ne.s32.totalorder %s115, %s129
    %p131 = scmp.eq.s32.totalorder %s21, 0
    %p132 = por %p130, %p131
    %s134 = sadd.s32 %s133, 1
    %p137 = scmp.eq.s32.totalorder %s15, 1
    %p138 = scmp.ne.s32.totalorder %s133, %s135
    %p139 = scmp.eq.s32.totalorder %s15, 0
    %p140 = por %p138, %p139
    %p141 = scmp.ne.s32.totalorder %s133, %s135
    %p142 = scmp.eq.s32.totalorder %s20, 1
    %p143 = por %p141, %p142
    %p144 = scmp.ne.s32.totalorder %s135, %s136
    %p145 = scmp.eq.s32.totalorder %s20, 0
    %p146 = por %p144, %p145
    %p147 = scmp.ne.s32.totalorder %s135, %s136
    %p148 = scmp.eq.s32.totalorder %s21, 1
    %p149 = por %p147, %p148
    %p151 = scmp.ne.s32.totalorder %s136, %s150
    %p152 = scmp.eq.s32.totalorder %s21, 0
    %p153 = por %p151, %p152
    %s155 = sadd.s32 %s154, 1
    %p158 = scmp.eq.s32.totalorder %s15, 1
    %p159 = scmp.ne.s32.totalorder %s154, %s156
    %p160 = scmp.eq.s32.totalorder %s15, 0
    %p161 = por %p159, %p160
    %p162 = scmp.ne.s32.totalorder %s154, %s156
    %p163 = scmp.eq.s32.totalorder %s20, 1
    %p164 = por %p162, %p163
    %p165 = scmp.ne.s32.totalorder %s156, %s157
    %p166 = scmp.eq.s32.totalorder %s20, 0
    %p167 = por %p165, %p166
    %p168 = scmp.ne.s32.totalorder %s156, %s157
    %p169 = scmp.eq.s32.totalorder %s21, 1
    %p170 = por %p168, %p169
    %p172 = scmp.ne.s32.totalorder %s157, %s171
    %p173 = scmp.eq.s32.totalorder %s21, 0
    %p174 = por %p172, %p173
    %s176 = sadd.s32 %s175, 1
    %p179 = scmp.eq.s32.totalorder %s15, 1
    %p180 = scmp.ne.s32.totalorder %s175, %s177
    %p181 = scmp.eq.s32.totalorder %s15, 0
    %p182 = por %p180, %p181
    %p183 = scmp.ne.s32.totalorder %s175, %s177
    %p184 = scmp.eq.s32.totalorder %s20, 1
    %p185 = por %p183, %p184
    %p186 = scmp.ne.s32.totalorder %s177, %s178
    %p187 = scmp.eq.s32.totalorder %s20, 0
    %p188 = por %p186, %p187
    %p189 = scmp.ne.s32.totalorder %s177, %s178
    %p190 = scmp.eq.s32.totalorder %s21, 1
    %p191 = por %p189, %p190
    %p193 = scmp.ne.s32.totalorder %s178, %s192
    %p194 = scmp.eq.s32.totalorder %s21, 0
    %p195 = por %p193, %p194
    %s197 = sadd.s32 %s196, 1
    %p200 = scmp.eq.s32.totalorder %s15, 1
    %p201 = scmp.ne.s32.totalorder %s196, %s198
    %p202 = scmp.eq.s32.totalorder %s15, 0
    %p203 = por %p201, %p202
    %p204 = scmp.ne.s32.totalorder %s196, %s198
    %p205 = scmp.eq.s32.totalorder %s20, 1
    %p206 = por %p204, %p205
    %p207 = scmp.ne.s32.totalorder %s198, %s199
    %p208 = scmp.eq.s32.totalorder %s20, 0
    %p209 = por %p207, %p208
    %p210 = scmp.ne.s32.totalorder %s198, %s199
    %p211 = scmp.eq.s32.totalorder %s21, 1
    %p212 = por %p210, %p211
    %p214 = scmp.ne.s32.totalorder %s199, %s213
    %p215 = scmp.eq.s32.totalorder %s21, 0
    %p216 = por %p214, %p215
    %s217 = ssub.s32 %s15, %s22
    %p218 = scmp.eq.s32.totalorder %s217, 0
    %s220 = sadd.s32 %s219, 1
    %s221 = scalar_select %p218, %s219, %s220
    %p224 = pneg %p218
    %p225 = scmp.eq.s32.totalorder %s15, 1
    %p226 = por %p224, %p225
    %p227 = scmp.ne.s32.totalorder %s219, %s222
    %p228 = scmp.eq.s32.totalorder %s15, 0
    %p229 = por %p227, %p228
    %p230 = scmp.ne.s32.totalorder %s219, %s222
    %p231 = scmp.eq.s32.totalorder %s20, 1
    %p232 = por %p230, %p231
    %p233 = scmp.ne.s32.totalorder %s222, %s223
    %p234 = scmp.eq.s32.totalorder %s20, 0
    %p235 = por %p233, %p234
    %p236 = scmp.ne.s32.totalorder %s222, %s223
    %p237 = scmp.eq.s32.totalorder %s21, 1
    %p238 = por %p236, %p237
    %p240 = scmp.ne.s32.totalorder %s223, %s239
    %p241 = scmp.eq.s32.totalorder %s21, 0
    %p242 = por %p240, %p241
    %p243 = scmp.le.s32.totalorder 1, %s15
    %p244 = scmp.lt.s32.totalorder %s15, 3
    %p245 = pnand %p243, %p244
    %p246 = pneg %p245
    // Predicated region
    $region9: #{vision_prompt_net_pallas.1} parent=5 // pred_check
      _
    $region10: #{vision_prompt_net_pallas.1} parent=5 // pred_check_branch
      %248 = sbr.rel (%p245) target = $region12
    $region11: #{vision_prompt_net_pallas.1} parent=5 // pred_region
      %s249 = ssub.s32 %s15, 1
      // Predicated region
      $region13: #{vision_prompt_net_pallas.1} parent=11 // pred_check
        %p250 = pneg %p62
      $region14: #{vision_prompt_net_pallas.1} parent=11 // pred_check_branch
        %252 = sbr.rel (%p250) target = $region16
      $region15: #{vision_prompt_net_pallas.1} parent=11 // pred_region
        _
      $region16: #{vision_prompt_net_pallas.1} parent=11 // pred_fallthru
        _
      // Predicated region
      $region17: #{vision_prompt_net_pallas.1} parent=11 // pred_check
        %p253 = pneg %p83
      $region18: #{vision_prompt_net_pallas.1} parent=11 // pred_check_branch
        %255 = sbr.rel (%p253) target = $region20
      $region19: #{vision_prompt_net_pallas.1} parent=11 // pred_region
        _
      $region20: #{vision_prompt_net_pallas.1} parent=11 // pred_fallthru
        _
      // Predicated region
      $region21: #{vision_prompt_net_pallas.1} parent=11 // pred_check
        %p256 = pneg %p104
      $region22: #{vision_prompt_net_pallas.1} parent=11 // pred_check_branch
        %258 = sbr.rel (%p256) target = $region24
      $region23: #{vision_prompt_net_pallas.1} parent=11 // pred_region
        _
      $region24: #{vision_prompt_net_pallas.1} parent=11 // pred_fallthru
        _
      // Predicated region
      $region25: #{vision_prompt_net_pallas.1} parent=11 // pred_check
        %p259 = pneg %p125
      $region26: #{vision_prompt_net_pallas.1} parent=11 // pred_check_branch
        %261 = sbr.rel (%p259) target = $region28
      $region27: #{vision_prompt_net_pallas.1} parent=11 // pred_region
        _
      $region28: #{vision_prompt_net_pallas.1} parent=11 // pred_fallthru
        _
      // Predicated region
      $region29: #{vision_prompt_net_pallas.1} parent=11 // pred_check
        %p262 = pneg %p146
      $region30: #{vision_prompt_net_pallas.1} parent=11 // pred_check_branch
        %264 = sbr.rel (%p262) target = $region32
      $region31: #{vision_prompt_net_pallas.1} parent=11 // pred_region
        _
      $region32: #{vision_prompt_net_pallas.1} parent=11 // pred_fallthru
        _
      // Predicated region
      $region33: #{vision_prompt_net_pallas.1} parent=11 // pred_check
        %p265 = pneg %p167
      $region34: #{vision_prompt_net_pallas.1} parent=11 // pred_check_branch
        %267 = sbr.rel (%p265) target = $region36
      $region35: #{vision_prompt_net_pallas.1} parent=11 // pred_region
        _
      $region36: #{vision_prompt_net_pallas.1} parent=11 // pred_fallthru
        _
      // Predicated region
      $region37: #{vision_prompt_net_pallas.1} parent=11 // pred_check
        %p268 = pneg %p188
      $region38: #{vision_prompt_net_pallas.1} parent=11 // pred_check_branch
        %270 = sbr.rel (%p268) target = $region40
      $region39: #{vision_prompt_net_pallas.1} parent=11 // pred_region
        _
      $region40: #{vision_prompt_net_pallas.1} parent=11 // pred_fallthru
        _
      // Predicated region
      $region41: #{vision_prompt_net_pallas.1} parent=11 // pred_check
        %p271 = pneg %p209
      $region42: #{vision_prompt_net_pallas.1} parent=11 // pred_check_branch
        %273 = sbr.rel (%p271) target = $region44
      $region43: #{vision_prompt_net_pallas.1} parent=11 // pred_region
        _
      $region44: #{vision_prompt_net_pallas.1} parent=11 // pred_fallthru
        _
    $region12: #{vision_prompt_net_pallas.1} parent=5 // pred_fallthru
      _
    %p274 = scmp.lt.s32.totalorder %s15, 2
    // Predicated region
    $region45: #{vision_prompt_net_pallas.1} parent=5 // pred_check
      %p275 = pneg %p274
    $region46: #{vision_prompt_net_pallas.1} parent=5 // pred_check_branch
      %277 = sbr.rel (%p275) target = $region48
    $region47: #{vision_prompt_net_pallas.1} parent=5 // pred_region
      // Predicated region
      $region49: #{vision_prompt_net_pallas.1} parent=47 // pred_check
        %p278 = pneg %p35
      $region50: #{vision_prompt_net_pallas.1} parent=47 // pred_check_branch
        %280 = sbr.rel (%p278) target = $region52
      $region51: #{vision_prompt_net_pallas.1} parent=47 // pred_region
        %p281 = scmp.lt.s32.totalorder %s15, 1
        %s282 = scalar_select %p281, %s15, 1
        %s283 = smul.addr %s282, 32
        %s284 = smul.addr %s283, 4
        %s285 = scalar_lea.vmem %s0, %s284
      $region52: #{vision_prompt_net_pallas.1} parent=47 // pred_fallthru
        _
    $region48: #{vision_prompt_net_pallas.1} parent=5 // pred_fallthru
      _
    %p286 = scmp.le.s32.totalorder 1, %s15
    %p287 = scmp.lt.s32.totalorder %s15, 3
    %p288 = pnand %p286, %p287
    %p289 = pneg %p288
    // Predicated region
    $region53: #{vision_prompt_net_pallas.1} parent=5 // pred_check
      _
    $region54: #{vision_prompt_net_pallas.1} parent=5 // pred_check_branch
      %291 = sbr.rel (%p288) target = $region56
    $region55: #{vision_prompt_net_pallas.1} parent=5 // pred_region
      %s292 = ssub.s32 %s15, 1
      %p293 = scmp.lt.s32.totalorder %s20, 1
      %s294 = scalar_select %p293, %s20, 1
      %s295 = smul.addr %s294, 32
      %s296 = smul.addr %s295, 4
      %s297 = scalar_lea.vmem %s0, %s296
      %p298 = pneg %p41
      %p299 = pneg %p38
      %p300 = pneg %p62
      %p301 = pneg %p59
      %p302 = pneg %p83
      %p303 = pneg %p80
      %p304 = pneg %p104
      %p305 = pneg %p101
      %p306 = pneg %p125
      %p307 = pneg %p122
      %p308 = pneg %p146
      %p309 = pneg %p143
      %p310 = pneg %p167
      %p311 = pneg %p164
      %p312 = pneg %p188
      %p313 = pneg %p185
      %p314 = pneg %p209
      %p315 = pneg %p206
      %p316 = pneg %p235
      %p317 = pneg %p232
      %p318 = scmp.lt.s32.totalorder %s20, 1
      %s319 = scalar_select %p318, %s20, 1
      %s320 = smul.addr %s319, 32
      %s321 = smul.addr %s320, 8
      %s322 = scalar_lea.vmem %s9, %s321
      %p323 = scmp.lt.s32.totalorder %s20, 1
      %s324 = scalar_select %p323, %s20, 1
      %s325 = smul.addr %s324, 32
      %s326 = smul.addr %s325, 4
      %s327 = scalar_lea.vmem %s0, %s326
      %p328 = scmp.lt.s32.totalorder %s20, 1
      %s329 = scalar_select %p328, %s20, 1
      %s330 = smul.addr %s329, 32
      %s331 = smul.addr %s330, 8
      %s332 = scalar_lea.vmem %s9, %s331
      %v334 = vlaneseq
      %v335 = vshrl.u32 %v334, 7
      %v336 = vadd.s32 %v335, 8
      %v337 = vadd.s32 %v335, 16
      %v338 = vadd.s32 %v335, 24
      %v339 = vadd.s32 %v335, 32
      %v340 = vadd.s32 %v335, 40
      %v341 = vadd.s32 %v335, 48
      %v342 = vadd.s32 %v335, 56
      %v343 = vadd.s32 %v335, 64
      %v344 = vadd.s32 %v335, 72
      %v345 = vadd.s32 %v335, 80
      %v346 = vadd.s32 %v335, 88
      %v347 = vadd.s32 %v335, 96
      %v348 = vadd.s32 %v335, 104
      %v349 = vadd.s32 %v335, 112
      %v350 = vadd.s32 %v335, 120
      %v351 = vadd.s32 %v335, 128
      %v352 = vadd.s32 %v335, 136
      %v353 = vadd.s32 %v335, 144
      %v354 = vadd.s32 %v335, 152
      %v355 = vadd.s32 %v335, 160
      %v356 = vadd.s32 %v335, 168
      %v357 = vadd.s32 %v335, 176
      %v358 = vadd.s32 %v335, 184
      %v359 = vadd.s32 %v335, 192
      %v360 = vadd.s32 %v335, 200
      %v361 = vadd.s32 %v335, 208
      %v362 = vadd.s32 %v335, 216
      %v363 = vadd.s32 %v335, 224
      %v364 = vadd.s32 %v335, 232
      %v365 = vadd.s32 %v335, 240
      %v366 = vadd.s32 %v335, 248
      %vm367 = vcmp.lt.s32.totalorder %v335, 0
      %v368 = vsub.s32 0, %v335
      %v369 = vsel %vm367, %v368, %v335
      %v370 = vshrl.u32 %v369, 4
      %v371 = vand.u32 %v369, 15
      %v372 = vsub.s32 0, %v371
      %v373 = vsel %vm367, %v372, %v371
      %vm374 = vcmp.lt.s32.totalorder %v336, 0
      %v375 = vsub.s32 0, %v336
      %v376 = vsel %vm374, %v375, %v336
      %v377 = vshrl.u32 %v376, 4
      %v378 = vand.u32 %v376, 15
      %v379 = vsub.s32 0, %v378
      %v380 = vsel %vm374, %v379, %v378
      %vm381 = vcmp.lt.s32.totalorder %v337, 0
      %v382 = vsub.s32 0, %v337
      %v383 = vsel %vm381, %v382, %v337
      %v384 = vshrl.u32 %v383, 4
      %v385 = vand.u32 %v383, 15
      %v386 = vsub.s32 0, %v385
      %v387 = vsel %vm381, %v386, %v385
      %vm388 = vcmp.lt.s32.totalorder %v338, 0
      %v389 = vsub.s32 0, %v338
      %v390 = vsel %vm388, %v389, %v338
      %v391 = vshrl.u32 %v390, 4
      %v392 = vand.u32 %v390, 15
      %v393 = vsub.s32 0, %v392
      %v394 = vsel %vm388, %v393, %v392
      %vm395 = vcmp.lt.s32.totalorder %v339, 0
      %v396 = vsub.s32 0, %v339
      %v397 = vsel %vm395, %v396, %v339
      %v398 = vshrl.u32 %v397, 4
      %v399 = vand.u32 %v397, 15
      %v400 = vsub.s32 0, %v399
      %v401 = vsel %vm395, %v400, %v399
      %vm402 = vcmp.lt.s32.totalorder %v340, 0
      %v403 = vsub.s32 0, %v340
      %v404 = vsel %vm402, %v403, %v340
      %v405 = vshrl.u32 %v404, 4
      %v406 = vand.u32 %v404, 15
      %v407 = vsub.s32 0, %v406
      %v408 = vsel %vm402, %v407, %v406
      %vm409 = vcmp.lt.s32.totalorder %v341, 0
      %v410 = vsub.s32 0, %v341
      %v411 = vsel %vm409, %v410, %v341
      %v412 = vshrl.u32 %v411, 4
      %v413 = vand.u32 %v411, 15
      %v414 = vsub.s32 0, %v413
      %v415 = vsel %vm409, %v414, %v413
      %vm416 = vcmp.lt.s32.totalorder %v342, 0
      %v417 = vsub.s32 0, %v342
      %v418 = vsel %vm416, %v417, %v342
      %v419 = vshrl.u32 %v418, 4
      %v420 = vand.u32 %v418, 15
      %v421 = vsub.s32 0, %v420
      %v422 = vsel %vm416, %v421, %v420
      %vm423 = vcmp.lt.s32.totalorder %v343, 0
      %v424 = vsub.s32 0, %v343
      %v425 = vsel %vm423, %v424, %v343
      %v426 = vshrl.u32 %v425, 4
      %v427 = vand.u32 %v425, 15
      %v428 = vsub.s32 0, %v427
      %v429 = vsel %vm423, %v428, %v427
      %vm430 = vcmp.lt.s32.totalorder %v344, 0
      %v431 = vsub.s32 0, %v344
      %v432 = vsel %vm430, %v431, %v344
      %v433 = vshrl.u32 %v432, 4
      %v434 = vand.u32 %v432, 15
      %v435 = vsub.s32 0, %v434
      %v436 = vsel %vm430, %v435, %v434
      %vm437 = vcmp.lt.s32.totalorder %v345, 0
      %v438 = vsub.s32 0, %v345
      %v439 = vsel %vm437, %v438, %v345
      %v440 = vshrl.u32 %v439, 4
      %v441 = vand.u32 %v439, 15
      %v442 = vsub.s32 0, %v441
      %v443 = vsel %vm437, %v442, %v441
      %vm444 = vcmp.lt.s32.totalorder %v346, 0
      %v445 = vsub.s32 0, %v346
      %v446 = vsel %vm444, %v445, %v346
      %v447 = vshrl.u32 %v446, 4
      %v448 = vand.u32 %v446, 15
      %v449 = vsub.s32 0, %v448
      %v450 = vsel %vm444, %v449, %v448
      %vm451 = vcmp.lt.s32.totalorder %v347, 0
      %v452 = vsub.s32 0, %v347
      %v453 = vsel %vm451, %v452, %v347
      %v454 = vshrl.u32 %v453, 4
      %v455 = vand.u32 %v453, 15
      %v456 = vsub.s32 0, %v455
      %v457 = vsel %vm451, %v456, %v455
      %vm458 = vcmp.lt.s32.totalorder %v348, 0
      %v459 = vsub.s32 0, %v348
      %v460 = vsel %vm458, %v459, %v348
      %v461 = vshrl.u32 %v460, 4
      %v462 = vand.u32 %v460, 15
      %v463 = vsub.s32 0, %v462
      %v464 = vsel %vm458, %v463, %v462
      %vm465 = vcmp.lt.s32.totalorder %v349, 0
      %v466 = vsub.s32 0, %v349
      %v467 = vsel %vm465, %v466, %v349
      %v468 = vshrl.u32 %v467, 4
      %v469 = vand.u32 %v467, 15
      %v470 = vsub.s32 0, %v469
      %v471 = vsel %vm465, %v470, %v469
      %vm472 = vcmp.lt.s32.totalorder %v350, 0
      %v473 = vsub.s32 0, %v350
      %v474 = vsel %vm472, %v473, %v350
      %v475 = vshrl.u32 %v474, 4
      %v476 = vand.u32 %v474, 15
      %v477 = vsub.s32 0, %v476
      %v478 = vsel %vm472, %v477, %v476
      %vm479 = vcmp.lt.s32.totalorder %v351, 0
      %v480 = vsub.s32 0, %v351
      %v481 = vsel %vm479, %v480, %v351
      %v482 = vshrl.u32 %v481, 4
      %v483 = vand.u32 %v481, 15
      %v484 = vsub.s32 0, %v483
      %v485 = vsel %vm479, %v484, %v483
      %vm486 = vcmp.lt.s32.totalorder %v352, 0
      %v487 = vsub.s32 0, %v352
      %v488 = vsel %vm486, %v487, %v352
      %v489 = vshrl.u32 %v488, 4
      %v490 = vand.u32 %v488, 15
      %v491 = vsub.s32 0, %v490
      %v492 = vsel %vm486, %v491, %v490
      %vm493 = vcmp.lt.s32.totalorder %v353, 0
      %v494 = vsub.s32 0, %v353
      %v495 = vsel %vm493, %v494, %v353
      %v496 = vshrl.u32 %v495, 4
      %v497 = vand.u32 %v495, 15
      %v498 = vsub.s32 0, %v497
      %v499 = vsel %vm493, %v498, %v497
      %vm500 = vcmp.lt.s32.totalorder %v354, 0
      %v501 = vsub.s32 0, %v354
      %v502 = vsel %vm500, %v501, %v354
      %v503 = vshrl.u32 %v502, 4
      %v504 = vand.u32 %v502, 15
      %v505 = vsub.s32 0, %v504
      %v506 = vsel %vm500, %v505, %v504
      %vm507 = vcmp.lt.s32.totalorder %v355, 0
      %v508 = vsub.s32 0, %v355
      %v509 = vsel %vm507, %v508, %v355
      %v510 = vshrl.u32 %v509, 4
      %v511 = vand.u32 %v509, 15
      %v512 = vsub.s32 0, %v511
      %v513 = vsel %vm507, %v512, %v511
      %vm514 = vcmp.lt.s32.totalorder %v356, 0
      %v515 = vsub.s32 0, %v356
      %v516 = vsel %vm514, %v515, %v356
      %v517 = vshrl.u32 %v516, 4
      %v518 = vand.u32 %v516, 15
      %v519 = vsub.s32 0, %v518
      %v520 = vsel %vm514, %v519, %v518
      %vm521 = vcmp.lt.s32.totalorder %v357, 0
      %v522 = vsub.s32 0, %v357
      %v523 = vsel %vm521, %v522, %v357
      %v524 = vshrl.u32 %v523, 4
      %v525 = vand.u32 %v523, 15
      %v526 = vsub.s32 0, %v525
      %v527 = vsel %vm521, %v526, %v525
      %vm528 = vcmp.lt.s32.totalorder %v358, 0
      %v529 = vsub.s32 0, %v358
      %v530 = vsel %vm528, %v529, %v358
      %v531 = vshrl.u32 %v530, 4
      %v532 = vand.u32 %v530, 15
      %v533 = vsub.s32 0, %v532
      %v534 = vsel %vm528, %v533, %v532
      %vm535 = vcmp.lt.s32.totalorder %v359, 0
      %v536 = vsub.s32 0, %v359
      %v537 = vsel %vm535, %v536, %v359
      %v538 = vshrl.u32 %v537, 4
      %v539 = vand.u32 %v537, 15
      %v540 = vsub.s32 0, %v539
      %v541 = vsel %vm535, %v540, %v539
      %vm542 = vcmp.lt.s32.totalorder %v360, 0
      %v543 = vsub.s32 0, %v360
      %v544 = vsel %vm542, %v543, %v360
      %v545 = vshrl.u32 %v544, 4
      %v546 = vand.u32 %v544, 15
      %v547 = vsub.s32 0, %v546
      %v548 = vsel %vm542, %v547, %v546
      %vm549 = vcmp.lt.s32.totalorder %v361, 0
      %v550 = vsub.s32 0, %v361
      %v551 = vsel %vm549, %v550, %v361
      %v552 = vshrl.u32 %v551, 4
      %v553 = vand.u32 %v551, 15
      %v554 = vsub.s32 0, %v553
      %v555 = vsel %vm549, %v554, %v553
      %vm556 = vcmp.lt.s32.totalorder %v362, 0
      %v557 = vsub.s32 0, %v362
      %v558 = vsel %vm556, %v557, %v362
      %v559 = vshrl.u32 %v558, 4
      %v560 = vand.u32 %v558, 15
      %v561 = vsub.s32 0, %v560
      %v562 = vsel %vm556, %v561, %v560
      %vm563 = vcmp.lt.s32.totalorder %v363, 0
      %v564 = vsub.s32 0, %v363
      %v565 = vsel %vm563, %v564, %v363
      %v566 = vshrl.u32 %v565, 4
      %v567 = vand.u32 %v565, 15
      %v568 = vsub.s32 0, %v567
      %v569 = vsel %vm563, %v568, %v567
      %vm570 = vcmp.lt.s32.totalorder %v364, 0
      %v571 = vsub.s32 0, %v364
      %v572 = vsel %vm570, %v571, %v364
      %v573 = vshrl.u32 %v572, 4
      %v574 = vand.u32 %v572, 15
      %v575 = vsub.s32 0, %v574
      %v576 = vsel %vm570, %v575, %v574
      %vm577 = vcmp.lt.s32.totalorder %v365, 0
      %v578 = vsub.s32 0, %v365
      %v579 = vsel %vm577, %v578, %v365
      %v580 = vshrl.u32 %v579, 4
      %v581 = vand.u32 %v579, 15
      %v582 = vsub.s32 0, %v581
      %v583 = vsel %vm577, %v582, %v581
      %vm584 = vcmp.lt.s32.totalorder %v366, 0
      %v585 = vsub.s32 0, %v366
      %v586 = vsel %vm584, %v585, %v366
      %v587 = vshrl.u32 %v586, 4
      %v588 = vand.u32 %v586, 15
      %v589 = vsub.s32 0, %v588
      %v590 = vsel %vm584, %v589, %v588
      %vm591 = vcmp.ne.s32.totalorder %v373, 0
      %vm592 = vcmp.ne.s32.totalorder %v380, 0
      %vm593 = vcmp.ne.s32.totalorder %v387, 0
      %vm594 = vcmp.ne.s32.totalorder %v394, 0
      %vm595 = vcmp.ne.s32.totalorder %v401, 0
      %vm596 = vcmp.ne.s32.totalorder %v408, 0
      %vm597 = vcmp.ne.s32.totalorder %v415, 0
      %vm598 = vcmp.ne.s32.totalorder %v422, 0
      %vm599 = vcmp.ne.s32.totalorder %v429, 0
      %vm600 = vcmp.ne.s32.totalorder %v436, 0
      %vm601 = vcmp.ne.s32.totalorder %v443, 0
      %vm602 = vcmp.ne.s32.totalorder %v450, 0
      %vm603 = vcmp.ne.s32.totalorder %v457, 0
      %vm604 = vcmp.ne.s32.totalorder %v464, 0
      %vm605 = vcmp.ne.s32.totalorder %v471, 0
      %vm606 = vcmp.ne.s32.totalorder %v478, 0
      %vm607 = vcmp.ne.s32.totalorder %v485, 0
      %vm608 = vcmp.ne.s32.totalorder %v492, 0
      %vm609 = vcmp.ne.s32.totalorder %v499, 0
      %vm610 = vcmp.ne.s32.totalorder %v506, 0
      %vm611 = vcmp.ne.s32.totalorder %v513, 0
      %vm612 = vcmp.ne.s32.totalorder %v520, 0
      %vm613 = vcmp.ne.s32.totalorder %v527, 0
      %vm614 = vcmp.ne.s32.totalorder %v534, 0
      %vm615 = vcmp.ne.s32.totalorder %v541, 0
      %vm616 = vcmp.ne.s32.totalorder %v548, 0
      %vm617 = vcmp.ne.s32.totalorder %v555, 0
      %vm618 = vcmp.ne.s32.totalorder %v562, 0
      %vm619 = vcmp.ne.s32.totalorder %v569, 0
      %vm620 = vcmp.ne.s32.totalorder %v576, 0
      %vm621 = vcmp.ne.s32.totalorder %v583, 0
      %vm622 = vcmp.ne.s32.totalorder %v590, 0
      %vm623 = vcmp.lt.s32.totalorder %v373, 0
      %vm624 = vcmp.lt.s32.totalorder %v380, 0
      %vm625 = vcmp.lt.s32.totalorder %v387, 0
      %vm626 = vcmp.lt.s32.totalorder %v394, 0
      %vm627 = vcmp.lt.s32.totalorder %v401, 0
      %vm628 = vcmp.lt.s32.totalorder %v408, 0
      %vm629 = vcmp.lt.s32.totalorder %v415, 0
      %vm630 = vcmp.lt.s32.totalorder %v422, 0
      %vm631 = vcmp.lt.s32.totalorder %v429, 0
      %vm632 = vcmp.lt.s32.totalorder %v436, 0
      %vm633 = vcmp.lt.s32.totalorder %v443, 0
      %vm634 = vcmp.lt.s32.totalorder %v450, 0
      %vm635 = vcmp.lt.s32.totalorder %v457, 0
      %vm636 = vcmp.lt.s32.totalorder %v464, 0
      %vm637 = vcmp.lt.s32.totalorder %v471, 0
      %vm638 = vcmp.lt.s32.totalorder %v478, 0
      %vm639 = vcmp.lt.s32.totalorder %v485, 0
      %vm640 = vcmp.lt.s32.totalorder %v492, 0
      %vm641 = vcmp.lt.s32.totalorder %v499, 0
      %vm642 = vcmp.lt.s32.totalorder %v506, 0
      %vm643 = vcmp.lt.s32.totalorder %v513, 0
      %vm644 = vcmp.lt.s32.totalorder %v520, 0
      %vm645 = vcmp.lt.s32.totalorder %v527, 0
      %vm646 = vcmp.lt.s32.totalorder %v534, 0
      %vm647 = vcmp.lt.s32.totalorder %v541, 0
      %vm648 = vcmp.lt.s32.totalorder %v548, 0
      %vm649 = vcmp.lt.s32.totalorder %v555, 0
      %vm650 = vcmp.lt.s32.totalorder %v562, 0
      %vm651 = vcmp.lt.s32.totalorder %v569, 0
      %vm652 = vcmp.lt.s32.totalorder %v576, 0
      %vm653 = vcmp.lt.s32.totalorder %v583, 0
      %vm654 = vcmp.lt.s32.totalorder %v590, 0
      %vm655 = vmand %vm623, %vm591
      %vm656 = vmand %vm624, %vm592
      %vm657 = vmand %vm625, %vm593
      %vm658 = vmand %vm626, %vm594
      %vm659 = vmand %vm627, %vm595
      %vm660 = vmand %vm628, %vm596
      %vm661 = vmand %vm629, %vm597
      %vm662 = vmand %vm630, %vm598
      %vm663 = vmand %vm631, %vm599
      %vm664 = vmand %vm632, %vm600
      %vm665 = vmand %vm633, %vm601
      %vm666 = vmand %vm634, %vm602
      %vm667 = vmand %vm635, %vm603
      %vm668 = vmand %vm636, %vm604
      %vm669 = vmand %vm637, %vm605
      %vm670 = vmand %vm638, %vm606
      %vm671 = vmand %vm639, %vm607
      %vm672 = vmand %vm640, %vm608
      %vm673 = vmand %vm641, %vm609
      %vm674 = vmand %vm642, %vm610
      %vm675 = vmand %vm643, %vm611
      %vm676 = vmand %vm644, %vm612
      %vm677 = vmand %vm645, %vm613
      %vm678 = vmand %vm646, %vm614
      %vm679 = vmand %vm647, %vm615
      %vm680 = vmand %vm648, %vm616
      %vm681 = vmand %vm649, %vm617
      %vm682 = vmand %vm650, %vm618
      %vm683 = vmand %vm651, %vm619
      %vm684 = vmand %vm652, %vm620
      %vm685 = vmand %vm653, %vm621
      %vm686 = vmand %vm654, %vm622
      %v687 = vadd.s32 %v373, 16
      %v688 = vadd.s32 %v380, 16
      %v689 = vadd.s32 %v387, 16
      %v690 = vadd.s32 %v394, 16
      %v691 = vadd.s32 %v401, 16
      %v692 = vadd.s32 %v408, 16
      %v693 = vadd.s32 %v415, 16
      %v694 = vadd.s32 %v422, 16
      %v695 = vadd.s32 %v429, 16
      %v696 = vadd.s32 %v436, 16
      %v697 = vadd.s32 %v443, 16
      %v698 = vadd.s32 %v450, 16
      %v699 = vadd.s32 %v457, 16
      %v700 = vadd.s32 %v464, 16
      %v701 = vadd.s32 %v471, 16
      %v702 = vadd.s32 %v478, 16
      %v703 = vadd.s32 %v485, 16
      %v704 = vadd.s32 %v492, 16
      %v705 = vadd.s32 %v499, 16
      %v706 = vadd.s32 %v506, 16
      %v707 = vadd.s32 %v513, 16
      %v708 = vadd.s32 %v520, 16
      %v709 = vadd.s32 %v527, 16
      %v710 = vadd.s32 %v534, 16
      %v711 = vadd.s32 %v541, 16
      %v712 = vadd.s32 %v548, 16
      %v713 = vadd.s32 %v555, 16
      %v714 = vadd.s32 %v562, 16
      %v715 = vadd.s32 %v569, 16
      %v716 = vadd.s32 %v576, 16
      %v717 = vadd.s32 %v583, 16
      %v718 = vadd.s32 %v590, 16
      %v719 = vsel %vm655, %v687, %v373
      %v720 = vsel %vm656, %v688, %v380
      %v721 = vsel %vm657, %v689, %v387
      %v722 = vsel %vm658, %v690, %v394
      %v723 = vsel %vm659, %v691, %v401
      %v724 = vsel %vm660, %v692, %v408
      %v725 = vsel %vm661, %v693, %v415
      %v726 = vsel %vm662, %v694, %v422
      %v727 = vsel %vm663, %v695, %v429
      %v728 = vsel %vm664, %v696, %v436
      %v729 = vsel %vm665, %v697, %v443
      %v730 = vsel %vm666, %v698, %v450
      %v731 = vsel %vm667, %v699, %v457
      %v732 = vsel %vm668, %v700, %v464
      %v733 = vsel %vm669, %v701, %v471
      %v734 = vsel %vm670, %v702, %v478
      %v735 = vsel %vm671, %v703, %v485
      %v736 = vsel %vm672, %v704, %v492
      %v737 = vsel %vm673, %v705, %v499
      %v738 = vsel %vm674, %v706, %v506
      %v739 = vsel %vm675, %v707, %v513
      %v740 = vsel %vm676, %v708, %v520
      %v741 = vsel %vm677, %v709, %v527
      %v742 = vsel %vm678, %v710, %v534
      %v743 = vsel %vm679, %v711, %v541
      %v744 = vsel %vm680, %v712, %v548
      %v745 = vsel %vm681, %v713, %v555
      %v746 = vsel %vm682, %v714, %v562
      %v747 = vsel %vm683, %v715, %v569
      %v748 = vsel %vm684, %v716, %v576
      %v749 = vsel %vm685, %v717, %v583
      %v750 = vsel %vm686, %v718, %v590
      %vm751 = vcmp.gt.s32.totalorder %v719, 0
      %vm752 = vcmp.gt.s32.totalorder %v720, 0
      %vm753 = vcmp.gt.s32.totalorder %v721, 0
      %vm754 = vcmp.gt.s32.totalorder %v722, 0
      %vm755 = vcmp.gt.s32.totalorder %v723, 0
      %vm756 = vcmp.gt.s32.totalorder %v724, 0
      %vm757 = vcmp.gt.s32.totalorder %v725, 0
      %vm758 = vcmp.gt.s32.totalorder %v726, 0
      %vm759 = vcmp.gt.s32.totalorder %v727, 0
      %vm760 = vcmp.gt.s32.totalorder %v728, 0
      %vm761 = vcmp.gt.s32.totalorder %v729, 0
      %vm762 = vcmp.gt.s32.totalorder %v730, 0
      %vm763 = vcmp.gt.s32.totalorder %v731, 0
      %vm764 = vcmp.gt.s32.totalorder %v732, 0
      %vm765 = vcmp.gt.s32.totalorder %v733, 0
      %vm766 = vcmp.gt.s32.totalorder %v734, 0
      %vm767 = vcmp.gt.s32.totalorder %v735, 0
      %vm768 = vcmp.gt.s32.totalorder %v736, 0
      %vm769 = vcmp.gt.s32.totalorder %v737, 0
      %vm770 = vcmp.gt.s32.totalorder %v738, 0
      %vm771 = vcmp.gt.s32.totalorder %v739, 0
      %vm772 = vcmp.gt.s32.totalorder %v740, 0
      %vm773 = vcmp.gt.s32.totalorder %v741, 0
      %vm774 = vcmp.gt.s32.totalorder %v742, 0
      %vm775 = vcmp.gt.s32.totalorder %v743, 0
      %vm776 = vcmp.gt.s32.totalorder %v744, 0
      %vm777 = vcmp.gt.s32.totalorder %v745, 0
      %vm778 = vcmp.gt.s32.totalorder %v746, 0
      %vm779 = vcmp.gt.s32.totalorder %v747, 0
      %vm780 = vcmp.gt.s32.totalorder %v748, 0
      %vm781 = vcmp.gt.s32.totalorder %v749, 0
      %vm782 = vcmp.gt.s32.totalorder %v750, 0
      %vm783 = vcmp.lt.s32.totalorder %v719, 15
      %vm784 = vcmp.lt.s32.totalorder %v720, 15
      %vm785 = vcmp.lt.s32.totalorder %v721, 15
      %vm786 = vcmp.lt.s32.totalorder %v722, 15
      %vm787 = vcmp.lt.s32.totalorder %v723, 15
      %vm788 = vcmp.lt.s32.totalorder %v724, 15
      %vm789 = vcmp.lt.s32.totalorder %v725, 15
      %vm790 = vcmp.lt.s32.totalorder %v726, 15
      %vm791 = vcmp.lt.s32.totalorder %v727, 15
      %vm792 = vcmp.lt.s32.totalorder %v728, 15
      %vm793 = vcmp.lt.s32.totalorder %v729, 15
      %vm794 = vcmp.lt.s32.totalorder %v730, 15
      %vm795 = vcmp.lt.s32.totalorder %v731, 15
      %vm796 = vcmp.lt.s32.totalorder %v732, 15
      %vm797 = vcmp.lt.s32.totalorder %v733, 15
      %vm798 = vcmp.lt.s32.totalorder %v734, 15
      %vm799 = vcmp.lt.s32.totalorder %v735, 15
      %vm800 = vcmp.lt.s32.totalorder %v736, 15
      %vm801 = vcmp.lt.s32.totalorder %v737, 15
      %vm802 = vcmp.lt.s32.totalorder %v738, 15
      %vm803 = vcmp.lt.s32.totalorder %v739, 15
      %vm804 = vcmp.lt.s32.totalorder %v740, 15
      %vm805 = vcmp.lt.s32.totalorder %v741, 15
      %vm806 = vcmp.lt.s32.totalorder %v742, 15
      %vm807 = vcmp.lt.s32.totalorder %v743, 15
      %vm808 = vcmp.lt.s32.totalorder %v744, 15
      %vm809 = vcmp.lt.s32.totalorder %v745, 15
      %vm810 = vcmp.lt.s32.totalorder %v746, 15
      %vm811 = vcmp.lt.s32.totalorder %v747, 15
      %vm812 = vcmp.lt.s32.totalorder %v748, 15
      %vm813 = vcmp.lt.s32.totalorder %v749, 15
      %vm814 = vcmp.lt.s32.totalorder %v750, 15
      %v815 = vld [vmem:[%s327] sm:$0xf]
      %v816 = vld [vmem:[%s327 + $0x4] sm:$0xf]
      %v817 = vld [vmem:[%s327 + $0x8] sm:$0xf]
      %v818 = vld [vmem:[%s327 + $0xc] sm:$0xf]
      %v819 = vld [vmem:[%s327 + $0x10] sm:$0xf]
      %v820 = vld [vmem:[%s327 + $0x14] sm:$0xf]
      %v821 = vld [vmem:[%s327 + $0x18] sm:$0xf]
      %v822 = vld [vmem:[%s327 + $0x1c] sm:$0xf]
      %v823 = vld [vmem:[%s327 + $0x20] sm:$0xf]
      %v824 = vld [vmem:[%s327 + $0x24] sm:$0xf]
      %v825 = vld [vmem:[%s327 + $0x28] sm:$0xf]
      %v826 = vld [vmem:[%s327 + $0x2c] sm:$0xf]
      %v827 = vld [vmem:[%s327 + $0x30] sm:$0xf]
      %v828 = vld [vmem:[%s327 + $0x34] sm:$0xf]
      %v829 = vld [vmem:[%s327 + $0x38] sm:$0xf]
      %v830 = vld [vmem:[%s327 + $0x3c] sm:$0xf]
      %v831 = vld [vmem:[%s327 + $0x40] sm:$0xf]
      %v832 = vld [vmem:[%s327 + $0x44] sm:$0xf]
      %v833 = vld [vmem:[%s327 + $0x48] sm:$0xf]
      %v834 = vld [vmem:[%s327 + $0x4c] sm:$0xf]
      %v835 = vld [vmem:[%s327 + $0x50] sm:$0xf]
      %v836 = vld [vmem:[%s327 + $0x54] sm:$0xf]
      %v837 = vld [vmem:[%s327 + $0x58] sm:$0xf]
      %v838 = vld [vmem:[%s327 + $0x5c] sm:$0xf]
      %v839 = vld [vmem:[%s327 + $0x60] sm:$0xf]
      %v840 = vld [vmem:[%s327 + $0x64] sm:$0xf]
      %v841 = vld [vmem:[%s327 + $0x68] sm:$0xf]
      %v842 = vld [vmem:[%s327 + $0x6c] sm:$0xf]
      %v843 = vld [vmem:[%s327 + $0x70] sm:$0xf]
      %v844 = vld [vmem:[%s327 + $0x74] sm:$0xf]
      %v845 = vld [vmem:[%s327 + $0x78] sm:$0xf]
      %v846 = vld [vmem:[%s327 + $0x7c] sm:$0xf]
      %v847 = vld [vmem:[%s1] sm:$0xf]
      %v848 = vld [vmem:[%s1 + $0x4] sm:$0x1]
      %v849 = vld [vmem:[%s2] sm:$0x1]
      %v851 = vlaneseq
      %v852 = vshrl.u32 %v851, 7
      %v853 = vsub.s32 0, %v852
      %v854 = vrot.slane %v849, %v853
      %v888 = vunpack.c.l.b16 %v815
      %v889 = vunpack.c.l.b16 %v816
      %v890 = vunpack.c.l.b16 %v817
      %v891 = vunpack.c.l.b16 %v818
      %v892 = vunpack.c.l.b16 %v819
      %v893 = vunpack.c.l.b16 %v820
      %v894 = vunpack.c.l.b16 %v821
      %v895 = vunpack.c.l.b16 %v822
      %v896 = vunpack.c.l.b16 %v823
      %v897 = vunpack.c.l.b16 %v824
      %v898 = vunpack.c.l.b16 %v825
      %v899 = vunpack.c.l.b16 %v826
      %v900 = vunpack.c.l.b16 %v827
      %v901 = vunpack.c.l.b16 %v828
      %v902 = vunpack.c.l.b16 %v829
      %v903 = vunpack.c.l.b16 %v830
      %v904 = vunpack.c.l.b16 %v831
      %v905 = vunpack.c.l.b16 %v832
      %v906 = vunpack.c.l.b16 %v833
      %v907 = vunpack.c.l.b16 %v834
      %v908 = vunpack.c.l.b16 %v835
      %v909 = vunpack.c.l.b16 %v836
      %v910 = vunpack.c.l.b16 %v837
      %v911 = vunpack.c.l.b16 %v838
      %v912 = vunpack.c.l.b16 %v839
      %v913 = vunpack.c.l.b16 %v840
      %v914 = vunpack.c.l.b16 %v841
      %v915 = vunpack.c.l.b16 %v842
      %v916 = vunpack.c.l.b16 %v843
      %v917 = vunpack.c.l.b16 %v844
      %v918 = vunpack.c.l.b16 %v845
      %v919 = vunpack.c.l.b16 %v846
      %v920 = vpack.c.b16 %v889, %v888
      %v921 = vpack.c.b16 %v891, %v890
      %v922 = vpack.c.b16 %v893, %v892
      %v923 = vpack.c.b16 %v895, %v894
      %v924 = vpack.c.b16 %v897, %v896
      %v925 = vpack.c.b16 %v899, %v898
      %v926 = vpack.c.b16 %v901, %v900
      %v927 = vpack.c.b16 %v903, %v902
      %v928 = vpack.c.b16 %v905, %v904
      %v929 = vpack.c.b16 %v907, %v906
      %v930 = vpack.c.b16 %v909, %v908
      %v931 = vpack.c.b16 %v911, %v910
      %v932 = vpack.c.b16 %v913, %v912
      %v933 = vpack.c.b16 %v915, %v914
      %v934 = vpack.c.b16 %v917, %v916
      %v935 = vpack.c.b16 %v919, %v918
      %v938 = vunpack.c.l.b16 %v847
      %v939 = vunpack.c.l.b16 %v848
      %v940 = vpack.c.b16 %v939, %v938
      %vm941 = vcmask 72704
      %v943 = vsel %vm941, %v920, 0
      %v946 = vsel %vm941, %v921, 0
      %v949 = vsel %vm941, %v922, 0
      %v952 = vsel %vm941, %v923, 0
      %v955 = vsel %vm941, %v924, 0
      %v958 = vsel %vm941, %v925, 0
      %v961 = vsel %vm941, %v926, 0
      %v964 = vsel %vm941, %v927, 0
      %v967 = vsel %vm941, %v928, 0
      %v970 = vsel %vm941, %v929, 0
      %v973 = vsel %vm941, %v930, 0
      %v976 = vsel %vm941, %v931, 0
      %v979 = vsel %vm941, %v932, 0
      %v982 = vsel %vm941, %v933, 0
      %v985 = vsel %vm941, %v934, 0
      %v988 = vsel %vm941, %v935, 0
      %vm990 = vcmask 1043456
      %vm991 = vcmask 1044480
      %v992 = vsel %vm990, 4294967295, 65535
      %v993 = vsel %vm991, %v992, 0
      %v995 = vand.u32 %v940, %v993
      %997 = vmatprep.subr.bf16.mxu0 0
      %998 = vmatpush1.bf16.msra.mxu0 0
      %999 = vmatprep.subr.bf16.mxu0 0
      %1000 = vmatpush1.bf16.msra.mxu0 0
      %1001 = vmatprep.subr.bf16.mxu0 0
      %1002 = vmatpush1.bf16.msra.mxu0 0
      %1003 = vmatprep.subr.bf16.mxu0 0
      %1004 = vmatpush1.bf16.msra.mxu0 0
      %1005 = vmatprep.subr.bf16.mxu0 0
      %1006 = vmatpush1.bf16.msra.mxu0 0
      %1007 = vmatprep.subr.bf16.mxu0 0
      %1008 = vmatpush1.bf16.msra.mxu0 0
      %1009 = vmatprep.subr.bf16.mxu0 0
      %1010 = vmatpush1.bf16.msra.mxu0 0
      %1011 = vmatprep.subr.bf16.mxu0 0
      %1012 = vmatpush1.bf16.msra.mxu0 %v995
      %1013 = vmatprep.subr.bf16.mxu0 0
      %1014 = vmatpush2.bf16.msra.mxu0 0
      %1015 = vmatprep.subr.bf16.mxu0 0
      %1016 = vmatpush2.bf16.msra.mxu0 0
      %1017 = vmatprep.subr.bf16.mxu0 0
      %1018 = vmatpush2.bf16.msra.mxu0 0
      %1019 = vmatprep.subr.bf16.mxu0 0
      %1020 = vmatpush2.bf16.msra.mxu0 0
      %1021 = vmatprep.subr.bf16.mxu0 0
      %1022 = vmatpush2.bf16.msra.mxu0 0
      %1023 = vmatprep.subr.bf16.mxu0 0
      %1024 = vmatpush2.bf16.msra.mxu0 0
      %1025 = vmatprep.subr.bf16.mxu0 0
      %1026 = vmatpush2.bf16.msra.mxu0 0
      %1027 = vmatprep.subr.bf16.mxu0 0
      %1028 = vmatpush2.bf16.msra.mxu0 0
      %1029 = vmatprep.mubr.bf16.mxu0 0
      %1030 = vmatmul.mubr.bf16.gmra.mxu0 %v943
      %v1031 = vpop.f32.mrf.mxu0
      %v1032 = vadd.f32 %v854, %v1031
      %v1033 = vpop.f32.mrf.mxu0
      %v1034 = vpop.f32.mrf.mxu0
      %v1035 = vadd.f32 %v854, %v1034
      %v1036 = vpop.f32.mrf.mxu0
      %1037 = vmatprep.mubr.bf16.mxu0 0
      %1038 = vmatmul.mubr.bf16.gmra.mxu0 %v946
      %v1039 = vpop.f32.mrf.mxu0
      %v1040 = vadd.f32 %v854, %v1039
      %v1041 = vpop.f32.mrf.mxu0
      %v1042 = vpop.f32.mrf.mxu0
      %v1043 = vadd.f32 %v854, %v1042
      %v1044 = vpop.f32.mrf.mxu0
      %1045 = vmatprep.mubr.bf16.mxu0 0
      %1046 = vmatmul.mubr.bf16.gmra.mxu0 %v949
      %v1047 = vpop.f32.mrf.mxu0
      %v1048 = vadd.f32 %v854, %v1047
      %v1049 = vpop.f32.mrf.mxu0
      %v1050 = vpop.f32.mrf.mxu0
      %v1051 = vadd.f32 %v854, %v1050
      %v1052 = vpop.f32.mrf.mxu0
      %1053 = vmatprep.mubr.bf16.mxu0 0
      %1054 = vmatmul.mubr.bf16.gmra.mxu0 %v952
      %v1055 = vpop.f32.mrf.mxu0
      %v1056 = vadd.f32 %v854, %v1055
      %v1057 = vpop.f32.mrf.mxu0
      %v1058 = vpop.f32.mrf.mxu0
      %v1059 = vadd.f32 %v854, %v1058
      %v1060 = vpop.f32.mrf.mxu0
      %1061 = vmatprep.mubr.bf16.mxu0 0
      %1062 = vmatmul.mubr.bf16.gmra.mxu0 %v955
      %v1063 = vpop.f32.mrf.mxu0
      %v1064 = vadd.f32 %v854, %v1063
      %v1065 = vpop.f32.mrf.mxu0
      %v1066 = vpop.f32.mrf.mxu0
      %v1067 = vadd.f32 %v854, %v1066
      %v1068 = vpop.f32.mrf.mxu0
      %1069 = vmatprep.mubr.bf16.mxu0 0
      %1070 = vmatmul.mubr.bf16.gmra.mxu0 %v958
      %v1071 = vpop.f32.mrf.mxu0
      %v1072 = vadd.f32 %v854, %v1071
      %v1073 = vpop.f32.mrf.mxu0
      %v1074 = vpop.f32.mrf.mxu0
      %v1075 = vadd.f32 %v854, %v1074
      %v1076 = vpop.f32.mrf.mxu0
      %1077 = vmatprep.mubr.bf16.mxu0 0
      %1078 = vmatmul.mubr.bf16.gmra.mxu0 %v961
      %v1079 = vpop.f32.mrf.mxu0
      %v1080 = vadd.f32 %v854, %v1079
      %v1081 = vpop.f32.mrf.mxu0
      %v1082 = vpop.f32.mrf.mxu0
      %v1083 = vadd.f32 %v854, %v1082
      %v1084 = vpop.f32.mrf.mxu0
      %1085 = vmatprep.mubr.bf16.mxu0 0
      %1086 = vmatmul.mubr.bf16.gmra.mxu0 %v964
      %v1087 = vpop.f32.mrf.mxu0
      %v1088 = vadd.f32 %v854, %v1087
      %v1089 = vpop.f32.mrf.mxu0
      %v1090 = vpop.f32.mrf.mxu0
      %v1091 = vadd.f32 %v854, %v1090
      %v1092 = vpop.f32.mrf.mxu0
      %1093 = vmatprep.mubr.bf16.mxu0 0
      %1094 = vmatmul.mubr.bf16.gmra.mxu0 %v967
      %v1095 = vpop.f32.mrf.mxu0
      %v1096 = vadd.f32 %v854, %v1095
      %v1097 = vpop.f32.mrf.mxu0
      %v1098 = vpop.f32.mrf.mxu0
      %v1099 = vadd.f32 %v854, %v1098
      %v1100 = vpop.f32.mrf.mxu0
      %1101 = vmatprep.mubr.bf16.mxu0 0
      %1102 = vmatmul.mubr.bf16.gmra.mxu0 %v970
      %v1103 = vpop.f32.mrf.mxu0
      %v1104 = vadd.f32 %v854, %v1103
      %v1105 = vpop.f32.mrf.mxu0
      %v1106 = vpop.f32.mrf.mxu0
      %v1107 = vadd.f32 %v854, %v1106
      %v1108 = vpop.f32.mrf.mxu0
      %1109 = vmatprep.mubr.bf16.mxu0 0
      %1110 = vmatmul.mubr.bf16.gmra.mxu0 %v973
      %v1111 = vpop.f32.mrf.mxu0
      %v1112 = vadd.f32 %v854, %v1111
      %v1113 = vpop.f32.mrf.mxu0
      %v1114 = vpop.f32.mrf.mxu0
      %v1115 = vadd.f32 %v854, %v1114
      %v1116 = vpop.f32.mrf.mxu0
      %1117 = vmatprep.mubr.bf16.mxu0 0
      %1118 = vmatmul.mubr.bf16.gmra.mxu0 %v976
      %v1119 = vpop.f32.mrf.mxu0
      %v1120 = vadd.f32 %v854, %v1119
      %v1121 = vpop.f32.mrf.mxu0
      %v1122 = vpop.f32.mrf.mxu0
      %v1123 = vadd.f32 %v854, %v1122
      %v1124 = vpop.f32.mrf.mxu0
      %1125 = vmatprep.mubr.bf16.mxu0 0
      %1126 = vmatmul.mubr.bf16.gmra.mxu0 %v979
      %v1127 = vpop.f32.mrf.mxu0
      %v1128 = vadd.f32 %v854, %v1127
      %v1129 = vpop.f32.mrf.mxu0
      %v1130 = vpop.f32.mrf.mxu0
      %v1131 = vadd.f32 %v854, %v1130
      %v1132 = vpop.f32.mrf.mxu0
      %1133 = vmatprep.mubr.bf16.mxu0 0
      %1134 = vmatmul.mubr.bf16.gmra.mxu0 %v982
      %v1135 = vpop.f32.mrf.mxu0
      %v1136 = vadd.f32 %v854, %v1135
      %v1137 = vpop.f32.mrf.mxu0
      %v1138 = vpop.f32.mrf.mxu0
      %v1139 = vadd.f32 %v854, %v1138
      %v1140 = vpop.f32.mrf.mxu0
      %1141 = vmatprep.mubr.bf16.mxu0 0
      %1142 = vmatmul.mubr.bf16.gmra.mxu0 %v985
      %v1143 = vpop.f32.mrf.mxu0
      %v1144 = vadd.f32 %v854, %v1143
      %v1145 = vpop.f32.mrf.mxu0
      %v1146 = vpop.f32.mrf.mxu0
      %v1147 = vadd.f32 %v854, %v1146
      %v1148 = vpop.f32.mrf.mxu0
      %1149 = vmatprep.mubr.bf16.mxu0 0
      %1150 = vmatmul.mubr.bf16.gmra.mxu0 %v988
      %v1151 = vpop.f32.mrf.mxu0
      %v1152 = vadd.f32 %v854, %v1151
      %v1153 = vpop.f32.mrf.mxu0
      %v1154 = vpop.f32.mrf.mxu0
      %v1155 = vadd.f32 %v854, %v1154
      %v1156 = vpop.f32.mrf.mxu0
      %1157 = vdwg.mxu0
      %vm1158 = vcmp.gt.f32.partialorder %v1032, 0.0
      %vm1159 = vcmp.gt.f32.partialorder %v1035, 0.0
      %vm1160 = vcmp.gt.f32.partialorder %v1040, 0.0
      %vm1161 = vcmp.gt.f32.partialorder %v1043, 0.0
      %vm1162 = vcmp.gt.f32.partialorder %v1048, 0.0
      %vm1163 = vcmp.gt.f32.partialorder %v1051, 0.0
      %vm1164 = vcmp.gt.f32.partialorder %v1056, 0.0
      %vm1165 = vcmp.gt.f32.partialorder %v1059, 0.0
      %vm1166 = vcmp.gt.f32.partialorder %v1064, 0.0
      %vm1167 = vcmp.gt.f32.partialorder %v1067, 0.0
      %vm1168 = vcmp.gt.f32.partialorder %v1072, 0.0
      %vm1169 = vcmp.gt.f32.partialorder %v1075, 0.0
      %vm1170 = vcmp.gt.f32.partialorder %v1080, 0.0
      %vm1171 = vcmp.gt.f32.partialorder %v1083, 0.0
      %vm1172 = vcmp.gt.f32.partialorder %v1088, 0.0
      %vm1173 = vcmp.gt.f32.partialorder %v1091, 0.0
      %vm1174 = vcmp.gt.f32.partialorder %v1096, 0.0
      %vm1175 = vcmp.gt.f32.partialorder %v1099, 0.0
      %vm1176 = vcmp.gt.f32.partialorder %v1104, 0.0
      %vm1177 = vcmp.gt.f32.partialorder %v1107, 0.0
      %vm1178 = vcmp.gt.f32.partialorder %v1112, 0.0
      %vm1179 = vcmp.gt.f32.partialorder %v1115, 0.0
      %vm1180 = vcmp.gt.f32.partialorder %v1120, 0.0
      %vm1181 = vcmp.gt.f32.partialorder %v1123, 0.0
      %vm1182 = vcmp.gt.f32.partialorder %v1128, 0.0
      %vm1183 = vcmp.gt.f32.partialorder %v1131, 0.0
      %vm1184 = vcmp.gt.f32.partialorder %v1136, 0.0
      %vm1185 = vcmp.gt.f32.partialorder %v1139, 0.0
      %vm1186 = vcmp.gt.f32.partialorder %v1144, 0.0
      %vm1187 = vcmp.gt.f32.partialorder %v1147, 0.0
      %vm1188 = vcmp.gt.f32.partialorder %v1152, 0.0
      %vm1189 = vcmp.gt.f32.partialorder %v1155, 0.0
      %v1190 = vmul.f32 %v1032, 0.05
      %v1191 = vmul.f32 %v1035, 0.05
      %v1192 = vmul.f32 %v1040, 0.05
      %v1193 = vmul.f32 %v1043, 0.05
      %v1194 = vmul.f32 %v1048, 0.05
      %v1195 = vmul.f32 %v1051, 0.05
      %v1196 = vmul.f32 %v1056, 0.05
      %v1197 = vmul.f32 %v1059, 0.05
      %v1198 = vmul.f32 %v1064, 0.05
      %v1199 = vmul.f32 %v1067, 0.05
      %v1200 = vmul.f32 %v1072, 0.05
      %v1201 = vmul.f32 %v1075, 0.05
      %v1202 = vmul.f32 %v1080, 0.05
      %v1203 = vmul.f32 %v1083, 0.05
      %v1204 = vmul.f32 %v1088, 0.05
      %v1205 = vmul.f32 %v1091, 0.05
      %v1206 = vmul.f32 %v1096, 0.05
      %v1207 = vmul.f32 %v1099, 0.05
      %v1208 = vmul.f32 %v1104, 0.05
      %v1209 = vmul.f32 %v1107, 0.05
      %v1210 = vmul.f32 %v1112, 0.05
      %v1211 = vmul.f32 %v1115, 0.05
      %v1212 = vmul.f32 %v1120, 0.05
      %v1213 = vmul.f32 %v1123, 0.05
      %v1214 = vmul.f32 %v1128, 0.05
      %v1215 = vmul.f32 %v1131, 0.05
      %v1216 = vmul.f32 %v1136, 0.05
      %v1217 = vmul.f32 %v1139, 0.05
      %v1218 = vmul.f32 %v1144, 0.05
      %v1219 = vmul.f32 %v1147, 0.05
      %v1220 = vmul.f32 %v1152, 0.05
      %v1221 = vmul.f32 %v1155, 0.05
      %v1222 = vsel %vm1158, %v1032, %v1190
      %v1223 = vsel %vm1159, %v1035, %v1191
      %v1224 = vsel %vm1160, %v1040, %v1192
      %v1225 = vsel %vm1161, %v1043, %v1193
      %v1226 = vsel %vm1162, %v1048, %v1194
      %v1227 = vsel %vm1163, %v1051, %v1195
      %v1228 = vsel %vm1164, %v1056, %v1196
      %v1229 = vsel %vm1165, %v1059, %v1197
      %v1230 = vsel %vm1166, %v1064, %v1198
      %v1231 = vsel %vm1167, %v1067, %v1199
      %v1232 = vsel %vm1168, %v1072, %v1200
      %v1233 = vsel %vm1169, %v1075, %v1201
      %v1234 = vsel %vm1170, %v1080, %v1202
      %v1235 = vsel %vm1171, %v1083, %v1203
      %v1236 = vsel %vm1172, %v1088, %v1204
      %v1237 = vsel %vm1173, %v1091, %v1205
      %v1238 = vsel %vm1174, %v1096, %v1206
      %v1239 = vsel %vm1175, %v1099, %v1207
      %v1240 = vsel %vm1176, %v1104, %v1208
      %v1241 = vsel %vm1177, %v1107, %v1209
      %v1242 = vsel %vm1178, %v1112, %v1210
      %v1243 = vsel %vm1179, %v1115, %v1211
      %v1244 = vsel %vm1180, %v1120, %v1212
      %v1245 = vsel %vm1181, %v1123, %v1213
      %v1246 = vsel %vm1182, %v1128, %v1214
      %v1247 = vsel %vm1183, %v1131, %v1215
      %v1248 = vsel %vm1184, %v1136, %v1216
      %v1249 = vsel %vm1185, %v1139, %v1217
      %v1250 = vsel %vm1186, %v1144, %v1218
      %v1251 = vsel %vm1187, %v1147, %v1219
      %v1252 = vsel %vm1188, %v1152, %v1220
      %v1253 = vsel %vm1189, %v1155, %v1221
      %v1254 = vsel %vm751, 1, 0
      %v1255 = vsel %vm752, 1, 0
      %v1256 = vsel %vm753, 1, 0
      %v1257 = vsel %vm754, 1, 0
      %v1258 = vsel %vm755, 1, 0
      %v1259 = vsel %vm756, 1, 0
      %v1260 = vsel %vm757, 1, 0
      %v1261 = vsel %vm758, 1, 0
      %v1262 = vsel %vm759, 1, 0
      %v1263 = vsel %vm760, 1, 0
      %v1264 = vsel %vm761, 1, 0
      %v1265 = vsel %vm762, 1, 0
      %v1266 = vsel %vm763, 1, 0
      %v1267 = vsel %vm764, 1, 0
      %v1268 = vsel %vm765, 1, 0
      %v1269 = vsel %vm766, 1, 0
      %v1270 = vsel %vm767, 1, 0
      %v1271 = vsel %vm768, 1, 0
      %v1272 = vsel %vm769, 1, 0
      %v1273 = vsel %vm770, 1, 0
      %v1274 = vsel %vm771, 1, 0
      %v1275 = vsel %vm772, 1, 0
      %v1276 = vsel %vm773, 1, 0
      %v1277 = vsel %vm774, 1, 0
      %v1278 = vsel %vm775, 1, 0
      %v1279 = vsel %vm776, 1, 0
      %v1280 = vsel %vm777, 1, 0
      %v1281 = vsel %vm778, 1, 0
      %v1282 = vsel %vm779, 1, 0
      %v1283 = vsel %vm780, 1, 0
      %v1284 = vsel %vm781, 1, 0
      %v1285 = vsel %vm782, 1, 0
      %vm1286 = vcmp.eq.s32.totalorder %v1254, 1
      %vm1287 = vcmp.eq.s32.totalorder %v1255, 1
      %vm1288 = vcmp.eq.s32.totalorder %v1256, 1
      %vm1289 = vcmp.eq.s32.totalorder %v1257, 1
      %vm1290 = vcmp.eq.s32.totalorder %v1258, 1
      %vm1291 = vcmp.eq.s32.totalorder %v1259, 1
      %vm1292 = vcmp.eq.s32.totalorder %v1260, 1
      %vm1293 = vcmp.eq.s32.totalorder %v1261, 1
      %vm1294 = vcmp.eq.s32.totalorder %v1262, 1
      %vm1295 = vcmp.eq.s32.totalorder %v1263, 1
      %vm1296 = vcmp.eq.s32.totalorder %v1264, 1
      %vm1297 = vcmp.eq.s32.totalorder %v1265, 1
      %vm1298 = vcmp.eq.s32.totalorder %v1266, 1
      %vm1299 = vcmp.eq.s32.totalorder %v1267, 1
      %vm1300 = vcmp.eq.s32.totalorder %v1268, 1
      %vm1301 = vcmp.eq.s32.totalorder %v1269, 1
      %vm1302 = vcmp.eq.s32.totalorder %v1270, 1
      %vm1303 = vcmp.eq.s32.totalorder %v1271, 1
      %vm1304 = vcmp.eq.s32.totalorder %v1272, 1
      %vm1305 = vcmp.eq.s32.totalorder %v1273, 1
      %vm1306 = vcmp.eq.s32.totalorder %v1274, 1
      %vm1307 = vcmp.eq.s32.totalorder %v1275, 1
      %vm1308 = vcmp.eq.s32.totalorder %v1276, 1
      %vm1309 = vcmp.eq.s32.totalorder %v1277, 1
      %vm1310 = vcmp.eq.s32.totalorder %v1278, 1
      %vm1311 = vcmp.eq.s32.totalorder %v1279, 1
      %vm1312 = vcmp.eq.s32.totalorder %v1280, 1
      %vm1313 = vcmp.eq.s32.totalorder %v1281, 1
      %vm1314 = vcmp.eq.s32.totalorder %v1282, 1
      %vm1315 = vcmp.eq.s32.totalorder %v1283, 1
      %vm1316 = vcmp.eq.s32.totalorder %v1284, 1
      %vm1317 = vcmp.eq.s32.totalorder %v1285, 1
      %vm1351 = vcmask 1040384
      %v1352 = vrot.slane 0.0, 7
      %v1353 = vrot.slane %v1222, 7
      %v1354 = vsel %vm1351, %v1352, %v1353
      %v1355 = vrot.slane %v1223, 7
      %v1356 = vsel %vm1351, %v1353, %v1355
      %v1357 = vrot.slane %v1224, 7
      %v1358 = vsel %vm1351, %v1355, %v1357
      %v1359 = vrot.slane %v1225, 7
      %v1360 = vsel %vm1351, %v1357, %v1359
      %v1361 = vrot.slane %v1226, 7
      %v1362 = vsel %vm1351, %v1359, %v1361
      %v1363 = vrot.slane %v1227, 7
      %v1364 = vsel %vm1351, %v1361, %v1363
      %v1365 = vrot.slane %v1228, 7
      %v1366 = vsel %vm1351, %v1363, %v1365
      %v1367 = vrot.slane %v1229, 7
      %v1368 = vsel %vm1351, %v1365, %v1367
      %v1369 = vrot.slane %v1230, 7
      %v1370 = vsel %vm1351, %v1367, %v1369
      %v1371 = vrot.slane %v1231, 7
      %v1372 = vsel %vm1351, %v1369, %v1371
      %v1373 = vrot.slane %v1232, 7
      %v1374 = vsel %vm1351, %v1371, %v1373
      %v1375 = vrot.slane %v1233, 7
      %v1376 = vsel %vm1351, %v1373, %v1375
      %v1377 = vrot.slane %v1234, 7
      %v1378 = vsel %vm1351, %v1375, %v1377
      %v1379 = vrot.slane %v1235, 7
      %v1380 = vsel %vm1351, %v1377, %v1379
      %v1381 = vrot.slane %v1236, 7
      %v1382 = vsel %vm1351, %v1379, %v1381
      %v1383 = vrot.slane %v1237, 7
      %v1384 = vsel %vm1351, %v1381, %v1383
      %v1385 = vrot.slane %v1238, 7
      %v1386 = vsel %vm1351, %v1383, %v1385
      %v1387 = vrot.slane %v1239, 7
      %v1388 = vsel %vm1351, %v1385, %v1387
      %v1389 = vrot.slane %v1240, 7
      %v1390 = vsel %vm1351, %v1387, %v1389
      %v1391 = vrot.slane %v1241, 7
      %v1392 = vsel %vm1351, %v1389, %v1391
      %v1393 = vrot.slane %v1242, 7
      %v1394 = vsel %vm1351, %v1391, %v1393
      %v1395 = vrot.slane %v1243, 7
      %v1396 = vsel %vm1351, %v1393, %v1395
      %v1397 = vrot.slane %v1244, 7
      %v1398 = vsel %vm1351, %v1395, %v1397
      %v1399 = vrot.slane %v1245, 7
      %v1400 = vsel %vm1351, %v1397, %v1399
      %v1401 = vrot.slane %v1246, 7
      %v1402 = vsel %vm1351, %v1399, %v1401
      %v1403 = vrot.slane %v1247, 7
      %v1404 = vsel %vm1351, %v1401, %v1403
      %v1405 = vrot.slane %v1248, 7
      %v1406 = vsel %vm1351, %v1403, %v1405
      %v1407 = vrot.slane %v1249, 7
      %v1408 = vsel %vm1351, %v1405, %v1407
      %v1409 = vrot.slane %v1250, 7
      %v1410 = vsel %vm1351, %v1407, %v1409
      %v1411 = vrot.slane %v1251, 7
      %v1412 = vsel %vm1351, %v1409, %v1411
      %v1413 = vrot.slane %v1252, 7
      %v1414 = vsel %vm1351, %v1411, %v1413
      %v1415 = vrot.slane %v1253, 7
      %v1416 = vsel %vm1351, %v1413, %v1415
      %v1449 = vsel %vm1286, %v1354, 0.0
      %v1450 = vsel %vm1287, %v1356, 0.0
      %v1451 = vsel %vm1288, %v1358, 0.0
      %v1452 = vsel %vm1289, %v1360, 0.0
      %v1453 = vsel %vm1290, %v1362, 0.0
      %v1454 = vsel %vm1291, %v1364, 0.0
      %v1455 = vsel %vm1292, %v1366, 0.0
      %v1456 = vsel %vm1293, %v1368, 0.0
      %v1457 = vsel %vm1294, %v1370, 0.0
      %v1458 = vsel %vm1295, %v1372, 0.0
      %v1459 = vsel %vm1296, %v1374, 0.0
      %v1460 = vsel %vm1297, %v1376, 0.0
      %v1461 = vsel %vm1298, %v1378, 0.0
      %v1462 = vsel %vm1299, %v1380, 0.0
      %v1463 = vsel %vm1300, %v1382, 0.0
      %v1464 = vsel %vm1301, %v1384, 0.0
      %v1465 = vsel %vm1302, %v1386, 0.0
      %v1466 = vsel %vm1303, %v1388, 0.0
      %v1467 = vsel %vm1304, %v1390, 0.0
      %v1468 = vsel %vm1305, %v1392, 0.0
      %v1469 = vsel %vm1306, %v1394, 0.0
      %v1470 = vsel %vm1307, %v1396, 0.0
      %v1471 = vsel %vm1308, %v1398, 0.0
      %v1472 = vsel %vm1309, %v1400, 0.0
      %v1473 = vsel %vm1310, %v1402, 0.0
      %v1474 = vsel %vm1311, %v1404, 0.0
      %v1475 = vsel %vm1312, %v1406, 0.0
      %v1476 = vsel %vm1313, %v1408, 0.0
      %v1477 = vsel %vm1314, %v1410, 0.0
      %v1478 = vsel %vm1315, %v1412, 0.0
      %v1479 = vsel %vm1316, %v1414, 0.0
      %v1480 = vsel %vm1317, %v1416, 0.0
      %v1481 = vsel %vm783, 1, 0
      %v1482 = vsel %vm784, 1, 0
      %v1483 = vsel %vm785, 1, 0
      %v1484 = vsel %vm786, 1, 0
      %v1485 = vsel %vm787, 1, 0
      %v1486 = vsel %vm788, 1, 0
      %v1487 = vsel %vm789, 1, 0
      %v1488 = vsel %vm790, 1, 0
      %v1489 = vsel %vm791, 1, 0
      %v1490 = vsel %vm792, 1, 0
      %v1491 = vsel %vm793, 1, 0
      %v1492 = vsel %vm794, 1, 0
      %v1493 = vsel %vm795, 1, 0
      %v1494 = vsel %vm796, 1, 0
      %v1495 = vsel %vm797, 1, 0
      %v1496 = vsel %vm798, 1, 0
      %v1497 = vsel %vm799, 1, 0
      %v1498 = vsel %vm800, 1, 0
      %v1499 = vsel %vm801, 1, 0
      %v1500 = vsel %vm802, 1, 0
      %v1501 = vsel %vm803, 1, 0
      %v1502 = vsel %vm804, 1, 0
      %v1503 = vsel %vm805, 1, 0
      %v1504 = vsel %vm806, 1, 0
      %v1505 = vsel %vm807, 1, 0
      %v1506 = vsel %vm808, 1, 0
      %v1507 = vsel %vm809, 1, 0
      %v1508 = vsel %vm810, 1, 0
      %v1509 = vsel %vm811, 1, 0
      %v1510 = vsel %vm812, 1, 0
      %v1511 = vsel %vm813, 1, 0
      %v1512 = vsel %vm814, 1, 0
      %vm1513 = vcmp.eq.s32.totalorder %v1481, 1
      %vm1514 = vcmp.eq.s32.totalorder %v1482, 1
      %vm1515 = vcmp.eq.s32.totalorder %v1483, 1
      %vm1516 = vcmp.eq.s32.totalorder %v1484, 1
      %vm1517 = vcmp.eq.s32.totalorder %v1485, 1
      %vm1518 = vcmp.eq.s32.totalorder %v1486, 1
      %vm1519 = vcmp.eq.s32.totalorder %v1487, 1
      %vm1520 = vcmp.eq.s32.totalorder %v1488, 1
      %vm1521 = vcmp.eq.s32.totalorder %v1489, 1
      %vm1522 = vcmp.eq.s32.totalorder %v1490, 1
      %vm1523 = vcmp.eq.s32.totalorder %v1491, 1
      %vm1524 = vcmp.eq.s32.totalorder %v1492, 1
      %vm1525 = vcmp.eq.s32.totalorder %v1493, 1
      %vm1526 = vcmp.eq.s32.totalorder %v1494, 1
      %vm1527 = vcmp.eq.s32.totalorder %v1495, 1
      %vm1528 = vcmp.eq.s32.totalorder %v1496, 1
      %vm1529 = vcmp.eq.s32.totalorder %v1497, 1
      %vm1530 = vcmp.eq.s32.totalorder %v1498, 1
      %vm1531 = vcmp.eq.s32.totalorder %v1499, 1
      %vm1532 = vcmp.eq.s32.totalorder %v1500, 1
      %vm1533 = vcmp.eq.s32.totalorder %v1501, 1
      %vm1534 = vcmp.eq.s32.totalorder %v1502, 1
      %vm1535 = vcmp.eq.s32.totalorder %v1503, 1
      %vm1536 = vcmp.eq.s32.totalorder %v1504, 1
      %vm1537 = vcmp.eq.s32.totalorder %v1505, 1
      %vm1538 = vcmp.eq.s32.totalorder %v1506, 1
      %vm1539 = vcmp.eq.s32.totalorder %v1507, 1
      %vm1540 = vcmp.eq.s32.totalorder %v1508, 1
      %vm1541 = vcmp.eq.s32.totalorder %v1509, 1
      %vm1542 = vcmp.eq.s32.totalorder %v1510, 1
      %vm1543 = vcmp.eq.s32.totalorder %v1511, 1
      %vm1544 = vcmp.eq.s32.totalorder %v1512, 1
      %vm1545 = vcmask 1046528
      %v1546 = vrot.slane %v1222, 1
      %v1547 = vrot.slane %v1223, 1
      %v1548 = vsel %vm1545, %v1546, %v1547
      %v1549 = vrot.slane %v1224, 1
      %v1550 = vsel %vm1545, %v1547, %v1549
      %v1551 = vrot.slane %v1225, 1
      %v1552 = vsel %vm1545, %v1549, %v1551
      %v1553 = vrot.slane %v1226, 1
      %v1554 = vsel %vm1545, %v1551, %v1553
      %v1555 = vrot.slane %v1227, 1
      %v1556 = vsel %vm1545, %v1553, %v1555
      %v1557 = vrot.slane %v1228, 1
      %v1558 = vsel %vm1545, %v1555, %v1557
      %v1559 = vrot.slane %v1229, 1
      %v1560 = vsel %vm1545, %v1557, %v1559
      %v1561 = vrot.slane %v1230, 1
      %v1562 = vsel %vm1545, %v1559, %v1561
      %v1563 = vrot.slane %v1231, 1
      %v1564 = vsel %vm1545, %v1561, %v1563
      %v1565 = vrot.slane %v1232, 1
      %v1566 = vsel %vm1545, %v1563, %v1565
      %v1567 = vrot.slane %v1233, 1
      %v1568 = vsel %vm1545, %v1565, %v1567
      %v1569 = vrot.slane %v1234, 1
      %v1570 = vsel %vm1545, %v1567, %v1569
      %v1571 = vrot.slane %v1235, 1
      %v1572 = vsel %vm1545, %v1569, %v1571
      %v1573 = vrot.slane %v1236, 1
      %v1574 = vsel %vm1545, %v1571, %v1573
      %v1575 = vrot.slane %v1237, 1
      %v1576 = vsel %vm1545, %v1573, %v1575
      %v1577 = vrot.slane %v1238, 1
      %v1578 = vsel %vm1545, %v1575, %v1577
      %v1579 = vrot.slane %v1239, 1
      %v1580 = vsel %vm1545, %v1577, %v1579
      %v1581 = vrot.slane %v1240, 1
      %v1582 = vsel %vm1545, %v1579, %v1581
      %v1583 = vrot.slane %v1241, 1
      %v1584 = vsel %vm1545, %v1581, %v1583
      %v1585 = vrot.slane %v1242, 1
      %v1586 = vsel %vm1545, %v1583, %v1585
      %v1587 = vrot.slane %v1243, 1
      %v1588 = vsel %vm1545, %v1585, %v1587
      %v1589 = vrot.slane %v1244, 1
      %v1590 = vsel %vm1545, %v1587, %v1589
      %v1591 = vrot.slane %v1245, 1
      %v1592 = vsel %vm1545, %v1589, %v1591
      %v1593 = vrot.slane %v1246, 1
      %v1594 = vsel %vm1545, %v1591, %v1593
      %v1595 = vrot.slane %v1247, 1
      %v1596 = vsel %vm1545, %v1593, %v1595
      %v1597 = vrot.slane %v1248, 1
      %v1598 = vsel %vm1545, %v1595, %v1597
      %v1599 = vrot.slane %v1249, 1
      %v1600 = vsel %vm1545, %v1597, %v1599
      %v1601 = vrot.slane %v1250, 1
      %v1602 = vsel %vm1545, %v1599, %v1601
      %v1603 = vrot.slane %v1251, 1
      %v1604 = vsel %vm1545, %v1601, %v1603
      %v1605 = vrot.slane %v1252, 1
      %v1606 = vsel %vm1545, %v1603, %v1605
      %v1607 = vrot.slane %v1253, 1
      %v1608 = vsel %vm1545, %v1605, %v1607
      %v1609 = vrot.slane 0.0, 1
      %v1610 = vsel %vm1545, %v1607, %v1609
      %v1643 = vsel %vm1513, %v1548, 0.0
      %v1644 = vsel %vm1514, %v1550, 0.0
      %v1645 = vsel %vm1515, %v1552, 0.0
      %v1646 = vsel %vm1516, %v1554, 0.0
      %v1647 = vsel %vm1517, %v1556, 0.0
      %v1648 = vsel %vm1518, %v1558, 0.0
      %v1649 = vsel %vm1519, %v1560, 0.0
      %v1650 = vsel %vm1520, %v1562, 0.0
      %v1651 = vsel %vm1521, %v1564, 0.0
      %v1652 = vsel %vm1522, %v1566, 0.0
      %v1653 = vsel %vm1523, %v1568, 0.0
      %v1654 = vsel %vm1524, %v1570, 0.0
      %v1655 = vsel %vm1525, %v1572, 0.0
      %v1656 = vsel %vm1526, %v1574, 0.0
      %v1657 = vsel %vm1527, %v1576, 0.0
      %v1658 = vsel %vm1528, %v1578, 0.0
      %v1659 = vsel %vm1529, %v1580, 0.0
      %v1660 = vsel %vm1530, %v1582, 0.0
      %v1661 = vsel %vm1531, %v1584, 0.0
      %v1662 = vsel %vm1532, %v1586, 0.0
      %v1663 = vsel %vm1533, %v1588, 0.0
      %v1664 = vsel %vm1534, %v1590, 0.0
      %v1665 = vsel %vm1535, %v1592, 0.0
      %v1666 = vsel %vm1536, %v1594, 0.0
      %v1667 = vsel %vm1537, %v1596, 0.0
      %v1668 = vsel %vm1538, %v1598, 0.0
      %v1669 = vsel %vm1539, %v1600, 0.0
      %v1670 = vsel %vm1540, %v1602, 0.0
      %v1671 = vsel %vm1541, %v1604, 0.0
      %v1672 = vsel %vm1542, %v1606, 0.0
      %v1673 = vsel %vm1543, %v1608, 0.0
      %v1674 = vsel %vm1544, %v1610, 0.0
      %1675 = vrot.lane.b32.xlu0 %v1222, 64
      %v1676 = vpop.permute.xlu0 %1675
      %1677 = vrot.lane.b32.xlu0 %v1223, 64
      %v1678 = vpop.permute.xlu0 %1677
      %1679 = vrot.lane.b32.xlu0 %v1224, 64
      %v1680 = vpop.permute.xlu0 %1679
      %1681 = vrot.lane.b32.xlu0 %v1225, 64
      %v1682 = vpop.permute.xlu0 %1681
      %1683 = vrot.lane.b32.xlu0 %v1226, 64
      %v1684 = vpop.permute.xlu0 %1683
      %1685 = vrot.lane.b32.xlu0 %v1227, 64
      %v1686 = vpop.permute.xlu0 %1685
      %1687 = vrot.lane.b32.xlu0 %v1228, 64
      %v1688 = vpop.permute.xlu0 %1687
      %1689 = vrot.lane.b32.xlu0 %v1229, 64
      %v1690 = vpop.permute.xlu0 %1689
      %1691 = vrot.lane.b32.xlu0 %v1230, 64
      %v1692 = vpop.permute.xlu0 %1691
      %1693 = vrot.lane.b32.xlu0 %v1231, 64
      %v1694 = vpop.permute.xlu0 %1693
      %1695 = vrot.lane.b32.xlu0 %v1232, 64
      %v1696 = vpop.permute.xlu0 %1695
      %1697 = vrot.lane.b32.xlu0 %v1233, 64
      %v1698 = vpop.permute.xlu0 %1697
      %1699 = vrot.lane.b32.xlu0 %v1234, 64
      %v1700 = vpop.permute.xlu0 %1699
      %1701 = vrot.lane.b32.xlu0 %v1235, 64
      %v1702 = vpop.permute.xlu0 %1701
      %1703 = vrot.lane.b32.xlu0 %v1236, 64
      %v1704 = vpop.permute.xlu0 %1703
      %1705 = vrot.lane.b32.xlu0 %v1237, 64
      %v1706 = vpop.permute.xlu0 %1705
      %1707 = vrot.lane.b32.xlu0 %v1238, 64
      %v1708 = vpop.permute.xlu0 %1707
      %1709 = vrot.lane.b32.xlu0 %v1239, 64
      %v1710 = vpop.permute.xlu0 %1709
      %1711 = vrot.lane.b32.xlu0 %v1240, 64
      %v1712 = vpop.permute.xlu0 %1711
      %1713 = vrot.lane.b32.xlu0 %v1241, 64
      %v1714 = vpop.permute.xlu0 %1713
      %1715 = vrot.lane.b32.xlu0 %v1242, 64
      %v1716 = vpop.permute.xlu0 %1715
      %1717 = vrot.lane.b32.xlu0 %v1243, 64
      %v1718 = vpop.permute.xlu0 %1717
      %1719 = vrot.lane.b32.xlu0 %v1244, 64
      %v1720 = vpop.permute.xlu0 %1719
      %1721 = vrot.lane.b32.xlu0 %v1245, 64
      %v1722 = vpop.permute.xlu0 %1721
      %1723 = vrot.lane.b32.xlu0 %v1246, 64
      %v1724 = vpop.permute.xlu0 %1723
      %1725 = vrot.lane.b32.xlu0 %v1247, 64
      %v1726 = vpop.permute.xlu0 %1725
      %1727 = vrot.lane.b32.xlu0 %v1248, 64
      %v1728 = vpop.permute.xlu0 %1727
      %1729 = vrot.lane.b32.xlu0 %v1249, 64
      %v1730 = vpop.permute.xlu0 %1729
      %1731 = vrot.lane.b32.xlu0 %v1250, 64
      %v1732 = vpop.permute.xlu0 %1731
      %1733 = vrot.lane.b32.xlu0 %v1251, 64
      %v1734 = vpop.permute.xlu0 %1733
      %1735 = vrot.lane.b32.xlu0 %v1252, 64
      %v1736 = vpop.permute.xlu0 %1735
      %1737 = vrot.lane.b32.xlu0 %v1253, 64
      %v1738 = vpop.permute.xlu0 %1737
      %vm1771 = vcmask 523264
      %v1772 = vsel %vm1771, %v1449, %v1676
      %v1773 = vsel %vm1771, %v1450, %v1678
      %v1774 = vsel %vm1771, %v1451, %v1680
      %v1775 = vsel %vm1771, %v1452, %v1682
      %v1776 = vsel %vm1771, %v1453, %v1684
      %v1777 = vsel %vm1771, %v1454, %v1686
      %v1778 = vsel %vm1771, %v1455, %v1688
      %v1779 = vsel %vm1771, %v1456, %v1690
      %v1780 = vsel %vm1771, %v1457, %v1692
      %v1781 = vsel %vm1771, %v1458, %v1694
      %v1782 = vsel %vm1771, %v1459, %v1696
      %v1783 = vsel %vm1771, %v1460, %v1698
      %v1784 = vsel %vm1771, %v1461, %v1700
      %v1785 = vsel %vm1771, %v1462, %v1702
      %v1786 = vsel %vm1771, %v1463, %v1704
      %v1787 = vsel %vm1771, %v1464, %v1706
      %v1788 = vsel %vm1771, %v1465, %v1708
      %v1789 = vsel %vm1771, %v1466, %v1710
      %v1790 = vsel %vm1771, %v1467, %v1712
      %v1791 = vsel %vm1771, %v1468, %v1714
      %v1792 = vsel %vm1771, %v1469, %v1716
      %v1793 = vsel %vm1771, %v1470, %v1718
      %v1794 = vsel %vm1771, %v1471, %v1720
      %v1795 = vsel %vm1771, %v1472, %v1722
      %v1796 = vsel %vm1771, %v1473, %v1724
      %v1797 = vsel %vm1771, %v1474, %v1726
      %v1798 = vsel %vm1771, %v1475, %v1728
      %v1799 = vsel %vm1771, %v1476, %v1730
      %v1800 = vsel %vm1771, %v1477, %v1732
      %v1801 = vsel %vm1771, %v1478, %v1734
      %v1802 = vsel %vm1771, %v1479, %v1736
      %v1803 = vsel %vm1771, %v1480, %v1738
      %v1804 = vpack.c.bf16 0.0, 0.0
      %v1805 = vpack.c.bf16 %v1773, %v1772
      %v1806 = vpack.c.bf16 %v1644, %v1643
      %v1807 = vpack.c.bf16 %v1775, %v1774
      %v1808 = vpack.c.bf16 %v1646, %v1645
      %v1809 = vpack.c.bf16 %v1777, %v1776
      %v1810 = vpack.c.bf16 %v1648, %v1647
      %v1811 = vpack.c.bf16 %v1779, %v1778
      %v1812 = vpack.c.bf16 %v1650, %v1649
      %v1813 = vpack.c.bf16 %v1781, %v1780
      %v1814 = vpack.c.bf16 %v1652, %v1651
      %v1815 = vpack.c.bf16 %v1783, %v1782
      %v1816 = vpack.c.bf16 %v1654, %v1653
      %v1817 = vpack.c.bf16 %v1785, %v1784
      %v1818 = vpack.c.bf16 %v1656, %v1655
      %v1819 = vpack.c.bf16 %v1787, %v1786
      %v1820 = vpack.c.bf16 %v1658, %v1657
      %v1821 = vpack.c.bf16 %v1789, %v1788
      %v1822 = vpack.c.bf16 %v1660, %v1659
      %v1823 = vpack.c.bf16 %v1791, %v1790
      %v1824 = vpack.c.bf16 %v1662, %v1661
      %v1825 = vpack.c.bf16 %v1793, %v1792
      %v1826 = vpack.c.bf16 %v1664, %v1663
      %v1827 = vpack.c.bf16 %v1795, %v1794
      %v1828 = vpack.c.bf16 %v1666, %v1665
      %v1829 = vpack.c.bf16 %v1797, %v1796
      %v1830 = vpack.c.bf16 %v1668, %v1667
      %v1831 = vpack.c.bf16 %v1799, %v1798
      %v1832 = vpack.c.bf16 %v1670, %v1669
      %v1833 = vpack.c.bf16 %v1801, %v1800
      %v1834 = vpack.c.bf16 %v1672, %v1671
      %v1835 = vld [vmem:[%s3] sm:$0xf]
      %v1836 = vld [vmem:[%s3 + $0x4] sm:$0xf]
      %v1837 = vld [vmem:[%s3 + $0x8] sm:$0xf]
      %v1838 = vld [vmem:[%s3 + $0xc] sm:$0xf]
      %v1839 = vld [vmem:[%s3 + $0x10] sm:$0xf]
      %v1840 = vld [vmem:[%s3 + $0x14] sm:$0xf]
      %v1841 = vld [vmem:[%s3 + $0x18] sm:$0xf]
      %v1842 = vld [vmem:[%s3 + $0x1c] sm:$0xf]
      %v1843 = vld [vmem:[%s3 + $0x20] sm:$0xf]
      %v1844 = vld [vmem:[%s3 + $0x24] sm:$0xf]
      %v1845 = vld [vmem:[%s3 + $0x28] sm:$0xf]
      %v1846 = vld [vmem:[%s3 + $0x2c] sm:$0xf]
      %v1847 = vld [vmem:[%s3 + $0x30] sm:$0xf]
      %v1848 = vld [vmem:[%s3 + $0x34] sm:$0xf]
      %v1849 = vld [vmem:[%s3 + $0x38] sm:$0xf]
      %v1850 = vld [vmem:[%s3 + $0x3c] sm:$0xf]
      %v1851 = vld [vmem:[%s3 + $0x40] sm:$0xf]
      %v1852 = vld [vmem:[%s3 + $0x44] sm:$0xf]
      %v1853 = vld [vmem:[%s3 + $0x48] sm:$0xf]
      %v1854 = vld [vmem:[%s3 + $0x4c] sm:$0xf]
      %v1855 = vld [vmem:[%s3 + $0x50] sm:$0xf]
      %v1856 = vld [vmem:[%s3 + $0x54] sm:$0xf]
      %v1857 = vld [vmem:[%s3 + $0x58] sm:$0xf]
      %v1858 = vld [vmem:[%s3 + $0x5c] sm:$0xf]
      %v1859 = vpack.c.bf16 %v1803, %v1802
      %v1860 = vpack.c.bf16 %v1674, %v1673
      %s1861 = scalar_lea.vmem %s3, 96
      %v1862 = vld [vmem:[%s1861] sm:$0xf]
      %v1863 = vld [vmem:[%s1861 + $0x4] sm:$0xf]
      %v1864 = vld [vmem:[%s1861 + $0x8] sm:$0xf]
      %v1865 = vld [vmem:[%s1861 + $0xc] sm:$0xf]
      %v1866 = vld [vmem:[%s1861 + $0x10] sm:$0xf]
      %v1867 = vld [vmem:[%s1861 + $0x14] sm:$0xf]
      %v1868 = vld [vmem:[%s1861 + $0x18] sm:$0xf]
      %v1869 = vld [vmem:[%s1861 + $0x1c] sm:$0xf]
      %v1870 = vld [vmem:[%s1861 + $0x20] sm:$0xf]
      %v1871 = vld [vmem:[%s1861 + $0x24] sm:$0xf]
      %v1872 = vld [vmem:[%s1861 + $0x28] sm:$0xf]
      %v1873 = vld [vmem:[%s1861 + $0x2c] sm:$0xf]
      %v1874 = vld [vmem:[%s1861 + $0x30] sm:$0xf]
      %v1875 = vld [vmem:[%s1861 + $0x34] sm:$0xf]
      %v1876 = vld [vmem:[%s1861 + $0x38] sm:$0xf]
      %v1877 = vld [vmem:[%s1861 + $0x3c] sm:$0xf]
      %v1878 = vld [vmem:[%s1861 + $0x40] sm:$0xf]
      %v1879 = vld [vmem:[%s1861 + $0x44] sm:$0xf]
      %v1880 = vld [vmem:[%s1861 + $0x48] sm:$0xf]
      %v1881 = vld [vmem:[%s1861 + $0x4c] sm:$0xf]
      %v1882 = vld [vmem:[%s1861 + $0x50] sm:$0xf]
      %v1883 = vld [vmem:[%s1861 + $0x54] sm:$0xf]
      %v1884 = vld [vmem:[%s1861 + $0x58] sm:$0xf]
      %v1885 = vld [vmem:[%s1861 + $0x5c] sm:$0xf]
      %v1910 = vunpack.c.l.b16 %v1862
      %v1911 = vunpack.c.l.b16 %v1863
      %v1912 = vunpack.c.l.b16 %v1864
      %v1913 = vunpack.c.l.b16 %v1865
      %v1914 = vunpack.c.l.b16 %v1866
      %v1915 = vunpack.c.l.b16 %v1867
      %v1916 = vunpack.c.l.b16 %v1868
      %v1917 = vunpack.c.l.b16 %v1869
      %v1918 = vunpack.c.l.b16 %v1870
      %v1919 = vunpack.c.l.b16 %v1871
      %v1920 = vunpack.c.l.b16 %v1872
      %v1921 = vunpack.c.l.b16 %v1873
      %v1922 = vunpack.c.l.b16 %v1874
      %v1923 = vunpack.c.l.b16 %v1875
      %v1924 = vunpack.c.l.b16 %v1876
      %v1925 = vunpack.c.l.b16 %v1877
      %v1926 = vunpack.c.l.b16 %v1878
      %v1927 = vunpack.c.l.b16 %v1879
      %v1928 = vunpack.c.l.b16 %v1880
      %v1929 = vunpack.c.l.b16 %v1881
      %v1930 = vunpack.c.l.b16 %v1882
      %v1931 = vunpack.c.l.b16 %v1883
      %v1932 = vunpack.c.l.b16 %v1884
      %v1933 = vunpack.c.l.b16 %v1885
      %v1934 = vpack.c.b16 %v1911, %v1910
      %v1935 = vpack.c.b16 %v1913, %v1912
      %v1936 = vpack.c.b16 %v1915, %v1914
      %v1937 = vpack.c.b16 %v1917, %v1916
      %v1938 = vpack.c.b16 %v1919, %v1918
      %v1939 = vpack.c.b16 %v1921, %v1920
      %v1940 = vpack.c.b16 %v1923, %v1922
      %v1941 = vpack.c.b16 %v1925, %v1924
      %v1942 = vpack.c.b16 %v1927, %v1926
      %v1943 = vpack.c.b16 %v1929, %v1928
      %v1944 = vpack.c.b16 %v1931, %v1930
      %v1945 = vpack.c.b16 %v1933, %v1932
      %v1959 = vsel %vm1771, %v1806, 0
      %v1962 = vsel %vm1771, %v1808, 0
      %v1965 = vsel %vm1771, %v1810, 0
      %v1968 = vsel %vm1771, %v1812, 0
      %v1971 = vsel %vm1771, %v1814, 0
      %v1974 = vsel %vm1771, %v1816, 0
      %v1977 = vsel %vm1771, %v1818, 0
      %v1980 = vsel %vm1771, %v1820, 0
      %v1983 = vsel %vm1771, %v1822, 0
      %v1986 = vsel %vm1771, %v1824, 0
      %v1989 = vsel %vm1771, %v1826, 0
      %v1992 = vsel %vm1771, %v1828, 0
      %v1995 = vsel %vm1771, %v1830, 0
      %v1998 = vsel %vm1771, %v1832, 0
      %v2001 = vsel %vm1771, %v1834, 0
      %v2004 = vsel %vm1771, %v1860, 0
      %2006 = vmatprep.subr.bf16.mxu0 0
      %2007 = vmatpush1.bf16.msra.mxu0 %v1941
      %2008 = vmatprep.subr.bf16.mxu0 0
      %2009 = vmatpush1.bf16.msra.mxu0 %v1940
      %2010 = vmatprep.subr.bf16.mxu0 0
      %2011 = vmatpush1.bf16.msra.mxu0 %v1939
      %2012 = vmatprep.subr.bf16.mxu0 0
      %2013 = vmatpush1.bf16.msra.mxu0 %v1938
      %2014 = vmatprep.subr.bf16.mxu0 0
      %2015 = vmatpush1.bf16.msra.mxu0 %v1937
      %2016 = vmatprep.subr.bf16.mxu0 0
      %2017 = vmatpush1.bf16.msra.mxu0 %v1936
      %2018 = vmatprep.subr.bf16.mxu0 0
      %2019 = vmatpush1.bf16.msra.mxu0 %v1935
      %2020 = vmatprep.subr.bf16.mxu0 0
      %2021 = vmatpush1.bf16.msra.mxu0 %v1934
      %2022 = vmatprep.subr.bf16.mxu0 0
      %2023 = vmatpush2.bf16.msra.mxu0 0
      %2024 = vmatprep.subr.bf16.mxu0 0
      %2025 = vmatpush2.bf16.msra.mxu0 0
      %2026 = vmatprep.subr.bf16.mxu0 0
      %2027 = vmatpush2.bf16.msra.mxu0 0
      %2028 = vmatprep.subr.bf16.mxu0 0
      %2029 = vmatpush2.bf16.msra.mxu0 0
      %2030 = vmatprep.subr.bf16.mxu0 0
      %2031 = vmatpush2.bf16.msra.mxu0 %v1945
      %2032 = vmatprep.subr.bf16.mxu0 0
      %2033 = vmatpush2.bf16.msra.mxu0 %v1944
      %2034 = vmatprep.subr.bf16.mxu0 0
      %2035 = vmatpush2.bf16.msra.mxu0 %v1943
      %2036 = vmatprep.subr.bf16.mxu0 0
      %2037 = vmatpush2.bf16.msra.mxu0 %v1942
      %2038 = vmatprep.mubr.bf16.mxu0 %v1959
      %2039 = vmatmul.mubr.bf16.gmra.mxu0 %v1805
      %v2040 = vpop.f32.mrf.mxu0
      %v2041 = vadd.f32 0.0, %v2040
      %v2042 = vpop.f32.mrf.mxu0
      %v2043 = vpop.f32.mrf.mxu0
      %v2044 = vadd.f32 0.0, %v2043
      %v2045 = vpop.f32.mrf.mxu0
      %2046 = vmatprep.mubr.bf16.mxu0 %v1962
      %2047 = vmatmul.mubr.bf16.gmra.mxu0 %v1807
      %v2048 = vpop.f32.mrf.mxu0
      %v2049 = vadd.f32 0.0, %v2048
      %v2050 = vpop.f32.mrf.mxu0
      %v2051 = vpop.f32.mrf.mxu0
      %v2052 = vadd.f32 0.0, %v2051
      %v2053 = vpop.f32.mrf.mxu0
      %2054 = vmatprep.mubr.bf16.mxu0 %v1965
      %2055 = vmatmul.mubr.bf16.gmra.mxu0 %v1809
      %v2056 = vpop.f32.mrf.mxu0
      %v2057 = vadd.f32 0.0, %v2056
      %v2058 = vpop.f32.mrf.mxu0
      %v2059 = vpop.f32.mrf.mxu0
      %v2060 = vadd.f32 0.0, %v2059
      %v2061 = vpop.f32.mrf.mxu0
      %2062 = vmatprep.mubr.bf16.mxu0 %v1968
      %2063 = vmatmul.mubr.bf16.gmra.mxu0 %v1811
      %v2064 = vpop.f32.mrf.mxu0
      %v2065 = vadd.f32 0.0, %v2064
      %v2066 = vpop.f32.mrf.mxu0
      %v2067 = vpop.f32.mrf.mxu0
      %v2068 = vadd.f32 0.0, %v2067
      %v2069 = vpop.f32.mrf.mxu0
      %2070 = vmatprep.mubr.bf16.mxu0 %v1971
      %2071 = vmatmul.mubr.bf16.gmra.mxu0 %v1813
      %v2072 = vpop.f32.mrf.mxu0
      %v2073 = vadd.f32 0.0, %v2072
      %v2074 = vpop.f32.mrf.mxu0
      %v2075 = vpop.f32.mrf.mxu0
      %v2076 = vadd.f32 0.0, %v2075
      %v2077 = vpop.f32.mrf.mxu0
      %2078 = vmatprep.mubr.bf16.mxu0 %v1974
      %2079 = vmatmul.mubr.bf16.gmra.mxu0 %v1815
      %v2080 = vpop.f32.mrf.mxu0
      %v2081 = vadd.f32 0.0, %v2080
      %v2082 = vpop.f32.mrf.mxu0
      %v2083 = vpop.f32.mrf.mxu0
      %v2084 = vadd.f32 0.0, %v2083
      %v2085 = vpop.f32.mrf.mxu0
      %2086 = vmatprep.mubr.bf16.mxu0 %v1977
      %2087 = vmatmul.mubr.bf16.gmra.mxu0 %v1817
      %v2088 = vpop.f32.mrf.mxu0
      %v2089 = vadd.f32 0.0, %v2088
      %v2090 = vpop.f32.mrf.mxu0
      %v2091 = vpop.f32.mrf.mxu0
      %v2092 = vadd.f32 0.0, %v2091
      %v2093 = vpop.f32.mrf.mxu0
      %2094 = vmatprep.mubr.bf16.mxu0 %v1980
      %2095 = vmatmul.mubr.bf16.gmra.mxu0 %v1819
      %v2096 = vpop.f32.mrf.mxu0
      %v2097 = vadd.f32 0.0, %v2096
      %v2098 = vpop.f32.mrf.mxu0
      %v2099 = vpop.f32.mrf.mxu0
      %v2100 = vadd.f32 0.0, %v2099
      %v2101 = vpop.f32.mrf.mxu0
      %2102 = vmatprep.mubr.bf16.mxu0 %v1983
      %2103 = vmatmul.mubr.bf16.gmra.mxu0 %v1821
      %v2104 = vpop.f32.mrf.mxu0
      %v2105 = vadd.f32 0.0, %v2104
      %v2106 = vpop.f32.mrf.mxu0
      %v2107 = vpop.f32.mrf.mxu0
      %v2108 = vadd.f32 0.0, %v2107
      %v2109 = vpop.f32.mrf.mxu0
      %2110 = vmatprep.mubr.bf16.mxu0 %v1986
      %2111 = vmatmul.mubr.bf16.gmra.mxu0 %v1823
      %v2112 = vpop.f32.mrf.mxu0
      %v2113 = vadd.f32 0.0, %v2112
      %v2114 = vpop.f32.mrf.mxu0
      %v2115 = vpop.f32.mrf.mxu0
      %v2116 = vadd.f32 0.0, %v2115
      %v2117 = vpop.f32.mrf.mxu0
      %2118 = vmatprep.mubr.bf16.mxu0 %v1989
      %2119 = vmatmul.mubr.bf16.gmra.mxu0 %v1825
      %v2120 = vpop.f32.mrf.mxu0
      %v2121 = vadd.f32 0.0, %v2120
      %v2122 = vpop.f32.mrf.mxu0
      %v2123 = vpop.f32.mrf.mxu0
      %v2124 = vadd.f32 0.0, %v2123
      %v2125 = vpop.f32.mrf.mxu0
      %2126 = vmatprep.mubr.bf16.mxu0 %v1992
      %2127 = vmatmul.mubr.bf16.gmra.mxu0 %v1827
      %v2128 = vpop.f32.mrf.mxu0
      %v2129 = vadd.f32 0.0, %v2128
      %v2130 = vpop.f32.mrf.mxu0
      %v2131 = vpop.f32.mrf.mxu0
      %v2132 = vadd.f32 0.0, %v2131
      %v2133 = vpop.f32.mrf.mxu0
      %2134 = vmatprep.mubr.bf16.mxu0 %v1995
      %2135 = vmatmul.mubr.bf16.gmra.mxu0 %v1829
      %v2136 = vpop.f32.mrf.mxu0
      %v2137 = vadd.f32 0.0, %v2136
      %v2138 = vpop.f32.mrf.mxu0
      %v2139 = vpop.f32.mrf.mxu0
      %v2140 = vadd.f32 0.0, %v2139
      %v2141 = vpop.f32.mrf.mxu0
      %2142 = vmatprep.mubr.bf16.mxu0 %v1998
      %2143 = vmatmul.mubr.bf16.gmra.mxu0 %v1831
      %v2144 = vpop.f32.mrf.mxu0
      %v2145 = vadd.f32 0.0, %v2144
      %v2146 = vpop.f32.mrf.mxu0
      %v2147 = vpop.f32.mrf.mxu0
      %v2148 = vadd.f32 0.0, %v2147
      %v2149 = vpop.f32.mrf.mxu0
      %2150 = vmatprep.mubr.bf16.mxu0 %v2001
      %2151 = vmatmul.mubr.bf16.gmra.mxu0 %v1833
      %v2152 = vpop.f32.mrf.mxu0
      %v2153 = vadd.f32 0.0, %v2152
      %v2154 = vpop.f32.mrf.mxu0
      %v2155 = vpop.f32.mrf.mxu0
      %v2156 = vadd.f32 0.0, %v2155
      %v2157 = vpop.f32.mrf.mxu0
      %2158 = vmatprep.mubr.bf16.mxu0 %v2004
      %2159 = vmatmul.mubr.bf16.gmra.mxu0 %v1859
      %v2160 = vpop.f32.mrf.mxu0
      %v2161 = vadd.f32 0.0, %v2160
      %v2162 = vpop.f32.mrf.mxu0
      %v2163 = vpop.f32.mrf.mxu0
      %v2164 = vadd.f32 0.0, %v2163
      %v2165 = vpop.f32.mrf.mxu0
      %2166 = vdwg.mxu0
      %v2191 = vunpack.c.l.b16 %v1835
      %v2192 = vunpack.c.l.b16 %v1836
      %v2193 = vunpack.c.l.b16 %v1837
      %v2194 = vunpack.c.l.b16 %v1838
      %v2195 = vunpack.c.l.b16 %v1839
      %v2196 = vunpack.c.l.b16 %v1840
      %v2197 = vunpack.c.l.b16 %v1841
      %v2198 = vunpack.c.l.b16 %v1842
      %v2199 = vunpack.c.l.b16 %v1843
      %v2200 = vunpack.c.l.b16 %v1844
      %v2201 = vunpack.c.l.b16 %v1845
      %v2202 = vunpack.c.l.b16 %v1846
      %v2203 = vunpack.c.l.b16 %v1847
      %v2204 = vunpack.c.l.b16 %v1848
      %v2205 = vunpack.c.l.b16 %v1849
      %v2206 = vunpack.c.l.b16 %v1850
      %v2207 = vunpack.c.l.b16 %v1851
      %v2208 = vunpack.c.l.b16 %v1852
      %v2209 = vunpack.c.l.b16 %v1853
      %v2210 = vunpack.c.l.b16 %v1854
      %v2211 = vunpack.c.l.b16 %v1855
      %v2212 = vunpack.c.l.b16 %v1856
      %v2213 = vunpack.c.l.b16 %v1857
      %v2214 = vunpack.c.l.b16 %v1858
      %v2215 = vpack.c.b16 %v2192, %v2191
      %v2216 = vpack.c.b16 %v2194, %v2193
      %v2217 = vpack.c.b16 %v2196, %v2195
      %v2218 = vpack.c.b16 %v2198, %v2197
      %v2219 = vpack.c.b16 %v2200, %v2199
      %v2220 = vpack.c.b16 %v2202, %v2201
      %v2221 = vpack.c.b16 %v2204, %v2203
      %v2222 = vpack.c.b16 %v2206, %v2205
      %v2223 = vpack.c.b16 %v2208, %v2207
      %v2224 = vpack.c.b16 %v2210, %v2209
      %v2225 = vpack.c.b16 %v2212, %v2211
      %v2226 = vpack.c.b16 %v2214, %v2213
      %v2240 = vsel %vm1771, %v1804, 0
      %2242 = vmatprep.subr.bf16.mxu0 0
      %2243 = vmatpush1.bf16.msra.mxu0 %v2222
      %2244 = vmatprep.subr.bf16.mxu0 0
      %2245 = vmatpush1.bf16.msra.mxu0 %v2221
      %2246 = vmatprep.subr.bf16.mxu0 0
      %2247 = vmatpush1.bf16.msra.mxu0 %v2220
      %2248 = vmatprep.subr.bf16.mxu0 0
      %2249 = vmatpush1.bf16.msra.mxu0 %v2219
      %2250 = vmatprep.subr.bf16.mxu0 0
      %2251 = vmatpush1.bf16.msra.mxu0 %v2218
      %2252 = vmatprep.subr.bf16.mxu0 0
      %2253 = vmatpush1.bf16.msra.mxu0 %v2217
      %2254 = vmatprep.subr.bf16.mxu0 0
      %2255 = vmatpush1.bf16.msra.mxu0 %v2216
      %2256 = vmatprep.subr.bf16.mxu0 0
      %2257 = vmatpush1.bf16.msra.mxu0 %v2215
      %2258 = vmatprep.subr.bf16.mxu0 0
      %2259 = vmatpush2.bf16.msra.mxu0 0
      %2260 = vmatprep.subr.bf16.mxu0 0
      %2261 = vmatpush2.bf16.msra.mxu0 0
      %2262 = vmatprep.subr.bf16.mxu0 0
      %2263 = vmatpush2.bf16.msra.mxu0 0
      %2264 = vmatprep.subr.bf16.mxu0 0
      %2265 = vmatpush2.bf16.msra.mxu0 0
      %2266 = vmatprep.subr.bf16.mxu0 0
      %2267 = vmatpush2.bf16.msra.mxu0 %v2226
      %2268 = vmatprep.subr.bf16.mxu0 0
      %2269 = vmatpush2.bf16.msra.mxu0 %v2225
      %2270 = vmatprep.subr.bf16.mxu0 0
      %2271 = vmatpush2.bf16.msra.mxu0 %v2224
      %2272 = vmatprep.subr.bf16.mxu0 0
      %2273 = vmatpush2.bf16.msra.mxu0 %v2223
      %2274 = vmatprep.mubr.bf16.mxu0 %v2240
      %2275 = vmatmul.mubr.bf16.gmra.mxu0 %v1804
      %v2276 = vpop.f32.mrf.mxu0
      %v2277 = vadd.f32 %v2041, %v2276
      %v2278 = vpop.f32.mrf.mxu0
      %v2279 = vpop.f32.mrf.mxu0
      %v2280 = vadd.f32 %v2044, %v2279
      %v2281 = vpop.f32.mrf.mxu0
      %2282 = vmatprep.mubr.bf16.mxu0 %v1959
      %2283 = vmatmul.mubr.bf16.gmra.mxu0 %v1805
      %v2284 = vpop.f32.mrf.mxu0
      %v2285 = vadd.f32 %v2049, %v2284
      %v2286 = vpop.f32.mrf.mxu0
      %v2287 = vpop.f32.mrf.mxu0
      %v2288 = vadd.f32 %v2052, %v2287
      %v2289 = vpop.f32.mrf.mxu0
      %2290 = vmatprep.mubr.bf16.mxu0 %v1962
      %2291 = vmatmul.mubr.bf16.gmra.mxu0 %v1807
      %v2292 = vpop.f32.mrf.mxu0
      %v2293 = vadd.f32 %v2057, %v2292
      %v2294 = vpop.f32.mrf.mxu0
      %v2295 = vpop.f32.mrf.mxu0
      %v2296 = vadd.f32 %v2060, %v2295
      %v2297 = vpop.f32.mrf.mxu0
      %2298 = vmatprep.mubr.bf16.mxu0 %v1965
      %2299 = vmatmul.mubr.bf16.gmra.mxu0 %v1809
      %v2300 = vpop.f32.mrf.mxu0
      %v2301 = vadd.f32 %v2065, %v2300
      %v2302 = vpop.f32.mrf.mxu0
      %v2303 = vpop.f32.mrf.mxu0
      %v2304 = vadd.f32 %v2068, %v2303
      %v2305 = vpop.f32.mrf.mxu0
      %2306 = vmatprep.mubr.bf16.mxu0 %v1968
      %2307 = vmatmul.mubr.bf16.gmra.mxu0 %v1811
      %v2308 = vpop.f32.mrf.mxu0
      %v2309 = vadd.f32 %v2073, %v2308
      %v2310 = vpop.f32.mrf.mxu0
      %v2311 = vpop.f32.mrf.mxu0
      %v2312 = vadd.f32 %v2076, %v2311
      %v2313 = vpop.f32.mrf.mxu0
      %2314 = vmatprep.mubr.bf16.mxu0 %v1971
      %2315 = vmatmul.mubr.bf16.gmra.mxu0 %v1813
      %v2316 = vpop.f32.mrf.mxu0
      %v2317 = vadd.f32 %v2081, %v2316
      %v2318 = vpop.f32.mrf.mxu0
      %v2319 = vpop.f32.mrf.mxu0
      %v2320 = vadd.f32 %v2084, %v2319
      %v2321 = vpop.f32.mrf.mxu0
      %2322 = vmatprep.mubr.bf16.mxu0 %v1974
      %2323 = vmatmul.mubr.bf16.gmra.mxu0 %v1815
      %v2324 = vpop.f32.mrf.mxu0
      %v2325 = vadd.f32 %v2089, %v2324
      %v2326 = vpop.f32.mrf.mxu0
      %v2327 = vpop.f32.mrf.mxu0
      %v2328 = vadd.f32 %v2092, %v2327
      %v2329 = vpop.f32.mrf.mxu0
      %2330 = vmatprep.mubr.bf16.mxu0 %v1977
      %2331 = vmatmul.mubr.bf16.gmra.mxu0 %v1817
      %v2332 = vpop.f32.mrf.mxu0
      %v2333 = vadd.f32 %v2097, %v2332
      %v2334 = vpop.f32.mrf.mxu0
      %v2335 = vpop.f32.mrf.mxu0
      %v2336 = vadd.f32 %v2100, %v2335
      %v2337 = vpop.f32.mrf.mxu0
      %2338 = vmatprep.mubr.bf16.mxu0 %v1980
      %2339 = vmatmul.mubr.bf16.gmra.mxu0 %v1819
      %v2340 = vpop.f32.mrf.mxu0
      %v2341 = vadd.f32 %v2105, %v2340
      %v2342 = vpop.f32.mrf.mxu0
      %v2343 = vpop.f32.mrf.mxu0
      %v2344 = vadd.f32 %v2108, %v2343
      %v2345 = vpop.f32.mrf.mxu0
      %2346 = vmatprep.mubr.bf16.mxu0 %v1983
      %2347 = vmatmul.mubr.bf16.gmra.mxu0 %v1821
      %v2348 = vpop.f32.mrf.mxu0
      %v2349 = vadd.f32 %v2113, %v2348
      %v2350 = vpop.f32.mrf.mxu0
      %v2351 = vpop.f32.mrf.mxu0
      %v2352 = vadd.f32 %v2116, %v2351
      %v2353 = vpop.f32.mrf.mxu0
      %2354 = vmatprep.mubr.bf16.mxu0 %v1986
      %2355 = vmatmul.mubr.bf16.gmra.mxu0 %v1823
      %v2356 = vpop.f32.mrf.mxu0
      %v2357 = vadd.f32 %v2121, %v2356
      %v2358 = vpop.f32.mrf.mxu0
      %v2359 = vpop.f32.mrf.mxu0
      %v2360 = vadd.f32 %v2124, %v2359
      %v2361 = vpop.f32.mrf.mxu0
      %2362 = vmatprep.mubr.bf16.mxu0 %v1989
      %2363 = vmatmul.mubr.bf16.gmra.mxu0 %v1825
      %v2364 = vpop.f32.mrf.mxu0
      %v2365 = vadd.f32 %v2129, %v2364
      %v2366 = vpop.f32.mrf.mxu0
      %v2367 = vpop.f32.mrf.mxu0
      %v2368 = vadd.f32 %v2132, %v2367
      %v2369 = vpop.f32.mrf.mxu0
      %2370 = vmatprep.mubr.bf16.mxu0 %v1992
      %2371 = vmatmul.mubr.bf16.gmra.mxu0 %v1827
      %v2372 = vpop.f32.mrf.mxu0
      %v2373 = vadd.f32 %v2137, %v2372
      %v2374 = vpop.f32.mrf.mxu0
      %v2375 = vpop.f32.mrf.mxu0
      %v2376 = vadd.f32 %v2140, %v2375
      %v2377 = vpop.f32.mrf.mxu0
      %2378 = vmatprep.mubr.bf16.mxu0 %v1995
      %2379 = vmatmul.mubr.bf16.gmra.mxu0 %v1829
      %v2380 = vpop.f32.mrf.mxu0
      %v2381 = vadd.f32 %v2145, %v2380
      %v2382 = vpop.f32.mrf.mxu0
      %v2383 = vpop.f32.mrf.mxu0
      %v2384 = vadd.f32 %v2148, %v2383
      %v2385 = vpop.f32.mrf.mxu0
      %2386 = vmatprep.mubr.bf16.mxu0 %v1998
      %2387 = vmatmul.mubr.bf16.gmra.mxu0 %v1831
      %v2388 = vpop.f32.mrf.mxu0
      %v2389 = vadd.f32 %v2153, %v2388
      %v2390 = vpop.f32.mrf.mxu0
      %v2391 = vpop.f32.mrf.mxu0
      %v2392 = vadd.f32 %v2156, %v2391
      %v2393 = vpop.f32.mrf.mxu0
      %2394 = vmatprep.mubr.bf16.mxu0 %v2001
      %2395 = vmatmul.mubr.bf16.gmra.mxu0 %v1833
      %v2396 = vpop.f32.mrf.mxu0
      %v2397 = vadd.f32 %v2161, %v2396
      %v2398 = vpop.f32.mrf.mxu0
      %v2399 = vpop.f32.mrf.mxu0
      %v2400 = vadd.f32 %v2164, %v2399
      %v2401 = vpop.f32.mrf.mxu0
      %2402 = vdwg.mxu0
      %s2403 = scalar_lea.vmem %s3, 192
      %v2404 = vld [vmem:[%s2403] sm:$0xf]
      %v2405 = vld [vmem:[%s2403 + $0x4] sm:$0xf]
      %v2406 = vld [vmem:[%s2403 + $0x8] sm:$0xf]
      %v2407 = vld [vmem:[%s2403 + $0xc] sm:$0xf]
      %v2408 = vld [vmem:[%s2403 + $0x10] sm:$0xf]
      %v2409 = vld [vmem:[%s2403 + $0x14] sm:$0xf]
      %v2410 = vld [vmem:[%s2403 + $0x18] sm:$0xf]
      %v2411 = vld [vmem:[%s2403 + $0x1c] sm:$0xf]
      %v2412 = vld [vmem:[%s2403 + $0x20] sm:$0xf]
      %v2413 = vld [vmem:[%s2403 + $0x24] sm:$0xf]
      %v2414 = vld [vmem:[%s2403 + $0x28] sm:$0xf]
      %v2415 = vld [vmem:[%s2403 + $0x2c] sm:$0xf]
      %v2416 = vld [vmem:[%s2403 + $0x30] sm:$0xf]
      %v2417 = vld [vmem:[%s2403 + $0x34] sm:$0xf]
      %v2418 = vld [vmem:[%s2403 + $0x38] sm:$0xf]
      %v2419 = vld [vmem:[%s2403 + $0x3c] sm:$0xf]
      %v2420 = vld [vmem:[%s2403 + $0x40] sm:$0xf]
      %v2421 = vld [vmem:[%s2403 + $0x44] sm:$0xf]
      %v2422 = vld [vmem:[%s2403 + $0x48] sm:$0xf]
      %v2423 = vld [vmem:[%s2403 + $0x4c] sm:$0xf]
      %v2424 = vld [vmem:[%s2403 + $0x50] sm:$0xf]
      %v2425 = vld [vmem:[%s2403 + $0x54] sm:$0xf]
      %v2426 = vld [vmem:[%s2403 + $0x58] sm:$0xf]
      %v2427 = vld [vmem:[%s2403 + $0x5c] sm:$0xf]
      %v2452 = vunpack.c.l.b16 %v2404
      %v2453 = vunpack.c.l.b16 %v2405
      %v2454 = vunpack.c.l.b16 %v2406
      %v2455 = vunpack.c.l.b16 %v2407
      %v2456 = vunpack.c.l.b16 %v2408
      %v2457 = vunpack.c.l.b16 %v2409
      %v2458 = vunpack.c.l.b16 %v2410
      %v2459 = vunpack.c.l.b16 %v2411
      %v2460 = vunpack.c.l.b16 %v2412
      %v2461 = vunpack.c.l.b16 %v2413
      %v2462 = vunpack.c.l.b16 %v2414
      %v2463 = vunpack.c.l.b16 %v2415
      %v2464 = vunpack.c.l.b16 %v2416
      %v2465 = vunpack.c.l.b16 %v2417
      %v2466 = vunpack.c.l.b16 %v2418
      %v2467 = vunpack.c.l.b16 %v2419
      %v2468 = vunpack.c.l.b16 %v2420
      %v2469 = vunpack.c.l.b16 %v2421
      %v2470 = vunpack.c.l.b16 %v2422
      %v2471 = vunpack.c.l.b16 %v2423
      %v2472 = vunpack.c.l.b16 %v2424
      %v2473 = vunpack.c.l.b16 %v2425
      %v2474 = vunpack.c.l.b16 %v2426
      %v2475 = vunpack.c.l.b16 %v2427
      %v2476 = vpack.c.b16 %v2453, %v2452
      %v2477 = vpack.c.b16 %v2455, %v2454
      %v2478 = vpack.c.b16 %v2457, %v2456
      %v2479 = vpack.c.b16 %v2459, %v2458
      %v2480 = vpack.c.b16 %v2461, %v2460
      %v2481 = vpack.c.b16 %v2463, %v2462
      %v2482 = vpack.c.b16 %v2465, %v2464
      %v2483 = vpack.c.b16 %v2467, %v2466
      %v2484 = vpack.c.b16 %v2469, %v2468
      %v2485 = vpack.c.b16 %v2471, %v2470
      %v2486 = vpack.c.b16 %v2473, %v2472
      %v2487 = vpack.c.b16 %v2475, %v2474
      %2500 = vmatprep.subr.bf16.mxu0 0
      %2501 = vmatpush1.bf16.msra.mxu0 %v2483
      %2502 = vmatprep.subr.bf16.mxu0 0
      %2503 = vmatpush1.bf16.msra.mxu0 %v2482
      %2504 = vmatprep.subr.bf16.mxu0 0
      %2505 = vmatpush1.bf16.msra.mxu0 %v2481
      %2506 = vmatprep.subr.bf16.mxu0 0
      %2507 = vmatpush1.bf16.msra.mxu0 %v2480
      %2508 = vmatprep.subr.bf16.mxu0 0
      %2509 = vmatpush1.bf16.msra.mxu0 %v2479
      %2510 = vmatprep.subr.bf16.mxu0 0
      %2511 = vmatpush1.bf16.msra.mxu0 %v2478
      %2512 = vmatprep.subr.bf16.mxu0 0
      %2513 = vmatpush1.bf16.msra.mxu0 %v2477
      %2514 = vmatprep.subr.bf16.mxu0 0
      %2515 = vmatpush1.bf16.msra.mxu0 %v2476
      %2516 = vmatprep.subr.bf16.mxu0 0
      %2517 = vmatpush2.bf16.msra.mxu0 0
      %2518 = vmatprep.subr.bf16.mxu0 0
      %2519 = vmatpush2.bf16.msra.mxu0 0
      %2520 = vmatprep.subr.bf16.mxu0 0
      %2521 = vmatpush2.bf16.msra.mxu0 0
      %2522 = vmatprep.subr.bf16.mxu0 0
      %2523 = vmatpush2.bf16.msra.mxu0 0
      %2524 = vmatprep.subr.bf16.mxu0 0
      %2525 = vmatpush2.bf16.msra.mxu0 %v2487
      %2526 = vmatprep.subr.bf16.mxu0 0
      %2527 = vmatpush2.bf16.msra.mxu0 %v2486
      %2528 = vmatprep.subr.bf16.mxu0 0
      %2529 = vmatpush2.bf16.msra.mxu0 %v2485
      %2530 = vmatprep.subr.bf16.mxu0 0
      %2531 = vmatpush2.bf16.msra.mxu0 %v2484
      %2532 = vmatprep.mubr.bf16.mxu0 %v1962
      %2533 = vmatmul.mubr.bf16.gmra.mxu0 %v1807
      %v2534 = vpop.f32.mrf.mxu0
      %v2535 = vadd.f32 0.0, %v2534
      %v2536 = vpop.f32.mrf.mxu0
      %v2537 = vpop.f32.mrf.mxu0
      %v2538 = vadd.f32 0.0, %v2537
      %v2539 = vpop.f32.mrf.mxu0
      %2540 = vmatprep.mubr.bf16.mxu0 %v1965
      %2541 = vmatmul.mubr.bf16.gmra.mxu0 %v1809
      %v2542 = vpop.f32.mrf.mxu0
      %v2543 = vadd.f32 0.0, %v2542
      %v2544 = vpop.f32.mrf.mxu0
      %v2545 = vpop.f32.mrf.mxu0
      %v2546 = vadd.f32 0.0, %v2545
      %v2547 = vpop.f32.mrf.mxu0
      %2548 = vmatprep.mubr.bf16.mxu0 %v1968
      %2549 = vmatmul.mubr.bf16.gmra.mxu0 %v1811
      %v2550 = vpop.f32.mrf.mxu0
      %v2551 = vadd.f32 0.0, %v2550
      %v2552 = vpop.f32.mrf.mxu0
      %v2553 = vpop.f32.mrf.mxu0
      %v2554 = vadd.f32 0.0, %v2553
      %v2555 = vpop.f32.mrf.mxu0
      %2556 = vmatprep.mubr.bf16.mxu0 %v1971
      %2557 = vmatmul.mubr.bf16.gmra.mxu0 %v1813
      %v2558 = vpop.f32.mrf.mxu0
      %v2559 = vadd.f32 0.0, %v2558
      %v2560 = vpop.f32.mrf.mxu0
      %v2561 = vpop.f32.mrf.mxu0
      %v2562 = vadd.f32 0.0, %v2561
      %v2563 = vpop.f32.mrf.mxu0
      %2564 = vmatprep.mubr.bf16.mxu0 %v1974
      %2565 = vmatmul.mubr.bf16.gmra.mxu0 %v1815
      %v2566 = vpop.f32.mrf.mxu0
      %v2567 = vadd.f32 0.0, %v2566
      %v2568 = vpop.f32.mrf.mxu0
      %v2569 = vpop.f32.mrf.mxu0
      %v2570 = vadd.f32 0.0, %v2569
      %v2571 = vpop.f32.mrf.mxu0
      %2572 = vmatprep.mubr.bf16.mxu0 %v1977
      %2573 = vmatmul.mubr.bf16.gmra.mxu0 %v1817
      %v2574 = vpop.f32.mrf.mxu0
      %v2575 = vadd.f32 0.0, %v2574
      %v2576 = vpop.f32.mrf.mxu0
      %v2577 = vpop.f32.mrf.mxu0
      %v2578 = vadd.f32 0.0, %v2577
      %v2579 = vpop.f32.mrf.mxu0
      %2580 = vmatprep.mubr.bf16.mxu0 %v1980
      %2581 = vmatmul.mubr.bf16.gmra.mxu0 %v1819
      %v2582 = vpop.f32.mrf.mxu0
      %v2583 = vadd.f32 0.0, %v2582
      %v2584 = vpop.f32.mrf.mxu0
      %v2585 = vpop.f32.mrf.mxu0
      %v2586 = vadd.f32 0.0, %v2585
      %v2587 = vpop.f32.mrf.mxu0
      %2588 = vmatprep.mubr.bf16.mxu0 %v1983
      %2589 = vmatmul.mubr.bf16.gmra.mxu0 %v1821
      %v2590 = vpop.f32.mrf.mxu0
      %v2591 = vadd.f32 0.0, %v2590
      %v2592 = vpop.f32.mrf.mxu0
      %v2593 = vpop.f32.mrf.mxu0
      %v2594 = vadd.f32 0.0, %v2593
      %v2595 = vpop.f32.mrf.mxu0
      %2596 = vmatprep.mubr.bf16.mxu0 %v1986
      %2597 = vmatmul.mubr.bf16.gmra.mxu0 %v1823
      %v2598 = vpop.f32.mrf.mxu0
      %v2599 = vadd.f32 0.0, %v2598
      %v2600 = vpop.f32.mrf.mxu0
      %v2601 = vpop.f32.mrf.mxu0
      %v2602 = vadd.f32 0.0, %v2601
      %v2603 = vpop.f32.mrf.mxu0
      %2604 = vmatprep.mubr.bf16.mxu0 %v1989
      %2605 = vmatmul.mubr.bf16.gmra.mxu0 %v1825
      %v2606 = vpop.f32.mrf.mxu0
      %v2607 = vadd.f32 0.0, %v2606
      %v2608 = vpop.f32.mrf.mxu0
      %v2609 = vpop.f32.mrf.mxu0
      %v2610 = vadd.f32 0.0, %v2609
      %v2611 = vpop.f32.mrf.mxu0
      %2612 = vmatprep.mubr.bf16.mxu0 %v1992
      %2613 = vmatmul.mubr.bf16.gmra.mxu0 %v1827
      %v2614 = vpop.f32.mrf.mxu0
      %v2615 = vadd.f32 0.0, %v2614
      %v2616 = vpop.f32.mrf.mxu0
      %v2617 = vpop.f32.mrf.mxu0
      %v2618 = vadd.f32 0.0, %v2617
      %v2619 = vpop.f32.mrf.mxu0
      %2620 = vmatprep.mubr.bf16.mxu0 %v1995
      %2621 = vmatmul.mubr.bf16.gmra.mxu0 %v1829
      %v2622 = vpop.f32.mrf.mxu0
      %v2623 = vadd.f32 0.0, %v2622
      %v2624 = vpop.f32.mrf.mxu0
      %v2625 = vpop.f32.mrf.mxu0
      %v2626 = vadd.f32 0.0, %v2625
      %v2627 = vpop.f32.mrf.mxu0
      %2628 = vmatprep.mubr.bf16.mxu0 %v1998
      %2629 = vmatmul.mubr.bf16.gmra.mxu0 %v1831
      %v2630 = vpop.f32.mrf.mxu0
      %v2631 = vadd.f32 0.0, %v2630
      %v2632 = vpop.f32.mrf.mxu0
      %v2633 = vpop.f32.mrf.mxu0
      %v2634 = vadd.f32 0.0, %v2633
      %v2635 = vpop.f32.mrf.mxu0
      %2636 = vmatprep.mubr.bf16.mxu0 %v2001
      %2637 = vmatmul.mubr.bf16.gmra.mxu0 %v1833
      %v2638 = vpop.f32.mrf.mxu0
      %v2639 = vadd.f32 0.0, %v2638
      %v2640 = vpop.f32.mrf.mxu0
      %v2641 = vpop.f32.mrf.mxu0
      %v2642 = vadd.f32 0.0, %v2641
      %v2643 = vpop.f32.mrf.mxu0
      %2644 = vmatprep.mubr.bf16.mxu0 %v2004
      %2645 = vmatmul.mubr.bf16.gmra.mxu0 %v1859
      %v2646 = vpop.f32.mrf.mxu0
      %v2647 = vadd.f32 0.0, %v2646
      %v2648 = vpop.f32.mrf.mxu0
      %v2649 = vpop.f32.mrf.mxu0
      %v2650 = vadd.f32 0.0, %v2649
      %v2651 = vpop.f32.mrf.mxu0
      %2652 = vmatprep.mubr.bf16.mxu0 %v2240
      %2653 = vmatmul.mubr.bf16.gmra.mxu0 %v1804
      %v2654 = vpop.f32.mrf.mxu0
      %v2655 = vadd.f32 0.0, %v2654
      %v2656 = vpop.f32.mrf.mxu0
      %v2657 = vpop.f32.mrf.mxu0
      %v2658 = vadd.f32 0.0, %v2657
      %v2659 = vpop.f32.mrf.mxu0
      %2660 = vdwg.mxu0
      %v2661 = vadd.f32 %v2277, %v2535
      %v2662 = vadd.f32 %v2280, %v2538
      %v2663 = vadd.f32 %v2285, %v2543
      %v2664 = vadd.f32 %v2288, %v2546
      %v2665 = vadd.f32 %v2293, %v2551
      %v2666 = vadd.f32 %v2296, %v2554
      %v2667 = vadd.f32 %v2301, %v2559
      %v2668 = vadd.f32 %v2304, %v2562
      %v2669 = vadd.f32 %v2309, %v2567
      %v2670 = vadd.f32 %v2312, %v2570
      %v2671 = vadd.f32 %v2317, %v2575
      %v2672 = vadd.f32 %v2320, %v2578
      %v2673 = vadd.f32 %v2325, %v2583
      %v2674 = vadd.f32 %v2328, %v2586
      %v2675 = vadd.f32 %v2333, %v2591
      %v2676 = vadd.f32 %v2336, %v2594
      %v2677 = vadd.f32 %v2341, %v2599
      %v2678 = vadd.f32 %v2344, %v2602
      %v2679 = vadd.f32 %v2349, %v2607
      %v2680 = vadd.f32 %v2352, %v2610
      %v2681 = vadd.f32 %v2357, %v2615
      %v2682 = vadd.f32 %v2360, %v2618
      %v2683 = vadd.f32 %v2365, %v2623
      %v2684 = vadd.f32 %v2368, %v2626
      %v2685 = vadd.f32 %v2373, %v2631
      %v2686 = vadd.f32 %v2376, %v2634
      %v2687 = vadd.f32 %v2381, %v2639
      %v2688 = vadd.f32 %v2384, %v2642
      %v2689 = vadd.f32 %v2389, %v2647
      %v2690 = vadd.f32 %v2392, %v2650
      %v2691 = vadd.f32 %v2397, %v2655
      %v2692 = vadd.f32 %v2400, %v2658
      %v2693 = vld [vmem:[%s4] sm:$0x1]
      %v2695 = vlaneseq
      %v2696 = vshrl.u32 %v2695, 7
      %v2697 = vsub.s32 0, %v2696
      %v2698 = vrot.slane %v2693, %v2697
      %v2700 = vadd.f32 %v2661, %v2698
      %v2701 = vadd.f32 %v2662, %v2698
      %v2702 = vadd.f32 %v2663, %v2698
      %v2703 = vadd.f32 %v2664, %v2698
      %v2704 = vadd.f32 %v2665, %v2698
      %v2705 = vadd.f32 %v2666, %v2698
      %v2706 = vadd.f32 %v2667, %v2698
      %v2707 = vadd.f32 %v2668, %v2698
      %v2708 = vadd.f32 %v2669, %v2698
      %v2709 = vadd.f32 %v2670, %v2698
      %v2710 = vadd.f32 %v2671, %v2698
      %v2711 = vadd.f32 %v2672, %v2698
      %v2712 = vadd.f32 %v2673, %v2698
      %v2713 = vadd.f32 %v2674, %v2698
      %v2714 = vadd.f32 %v2675, %v2698
      %v2715 = vadd.f32 %v2676, %v2698
      %v2716 = vadd.f32 %v2677, %v2698
      %v2717 = vadd.f32 %v2678, %v2698
      %v2718 = vadd.f32 %v2679, %v2698
      %v2719 = vadd.f32 %v2680, %v2698
      %v2720 = vadd.f32 %v2681, %v2698
      %v2721 = vadd.f32 %v2682, %v2698
      %v2722 = vadd.f32 %v2683, %v2698
      %v2723 = vadd.f32 %v2684, %v2698
      %v2724 = vadd.f32 %v2685, %v2698
      %v2725 = vadd.f32 %v2686, %v2698
      %v2726 = vadd.f32 %v2687, %v2698
      %v2727 = vadd.f32 %v2688, %v2698
      %v2728 = vadd.f32 %v2689, %v2698
      %v2729 = vadd.f32 %v2690, %v2698
      %v2730 = vadd.f32 %v2691, %v2698
      %v2731 = vadd.f32 %v2692, %v2698
      %vm2732 = vcmp.gt.f32.partialorder %v2700, 0.0
      %vm2733 = vcmp.gt.f32.partialorder %v2701, 0.0
      %vm2734 = vcmp.gt.f32.partialorder %v2702, 0.0
      %vm2735 = vcmp.gt.f32.partialorder %v2703, 0.0
      %vm2736 = vcmp.gt.f32.partialorder %v2704, 0.0
      %vm2737 = vcmp.gt.f32.partialorder %v2705, 0.0
      %vm2738 = vcmp.gt.f32.partialorder %v2706, 0.0
      %vm2739 = vcmp.gt.f32.partialorder %v2707, 0.0
      %vm2740 = vcmp.gt.f32.partialorder %v2708, 0.0
      %vm2741 = vcmp.gt.f32.partialorder %v2709, 0.0
      %vm2742 = vcmp.gt.f32.partialorder %v2710, 0.0
      %vm2743 = vcmp.gt.f32.partialorder %v2711, 0.0
      %vm2744 = vcmp.gt.f32.partialorder %v2712, 0.0
      %vm2745 = vcmp.gt.f32.partialorder %v2713, 0.0
      %vm2746 = vcmp.gt.f32.partialorder %v2714, 0.0
      %vm2747 = vcmp.gt.f32.partialorder %v2715, 0.0
      %vm2748 = vcmp.gt.f32.partialorder %v2716, 0.0
      %vm2749 = vcmp.gt.f32.partialorder %v2717, 0.0
      %vm2750 = vcmp.gt.f32.partialorder %v2718, 0.0
      %vm2751 = vcmp.gt.f32.partialorder %v2719, 0.0
      %vm2752 = vcmp.gt.f32.partialorder %v2720, 0.0
      %vm2753 = vcmp.gt.f32.partialorder %v2721, 0.0
      %vm2754 = vcmp.gt.f32.partialorder %v2722, 0.0
      %vm2755 = vcmp.gt.f32.partialorder %v2723, 0.0
      %vm2756 = vcmp.gt.f32.partialorder %v2724, 0.0
      %vm2757 = vcmp.gt.f32.partialorder %v2725, 0.0
      %vm2758 = vcmp.gt.f32.partialorder %v2726, 0.0
      %vm2759 = vcmp.gt.f32.partialorder %v2727, 0.0
      %vm2760 = vcmp.gt.f32.partialorder %v2728, 0.0
      %vm2761 = vcmp.gt.f32.partialorder %v2729, 0.0
      %vm2762 = vcmp.gt.f32.partialorder %v2730, 0.0
      %vm2763 = vcmp.gt.f32.partialorder %v2731, 0.0
      %v2764 = vmul.f32 %v2700, 0.05
      %v2765 = vmul.f32 %v2701, 0.05
      %v2766 = vmul.f32 %v2702, 0.05
      %v2767 = vmul.f32 %v2703, 0.05
      %v2768 = vmul.f32 %v2704, 0.05
      %v2769 = vmul.f32 %v2705, 0.05
      %v2770 = vmul.f32 %v2706, 0.05
      %v2771 = vmul.f32 %v2707, 0.05
      %v2772 = vmul.f32 %v2708, 0.05
      %v2773 = vmul.f32 %v2709, 0.05
      %v2774 = vmul.f32 %v2710, 0.05
      %v2775 = vmul.f32 %v2711, 0.05
      %v2776 = vmul.f32 %v2712, 0.05
      %v2777 = vmul.f32 %v2713, 0.05
      %v2778 = vmul.f32 %v2714, 0.05
      %v2779 = vmul.f32 %v2715, 0.05
      %v2780 = vmul.f32 %v2716, 0.05
      %v2781 = vmul.f32 %v2717, 0.05
      %v2782 = vmul.f32 %v2718, 0.05
      %v2783 = vmul.f32 %v2719, 0.05
      %v2784 = vmul.f32 %v2720, 0.05
      %v2785 = vmul.f32 %v2721, 0.05
      %v2786 = vmul.f32 %v2722, 0.05
      %v2787 = vmul.f32 %v2723, 0.05
      %v2788 = vmul.f32 %v2724, 0.05
      %v2789 = vmul.f32 %v2725, 0.05
      %v2790 = vmul.f32 %v2726, 0.05
      %v2791 = vmul.f32 %v2727, 0.05
      %v2792 = vmul.f32 %v2728, 0.05
      %v2793 = vmul.f32 %v2729, 0.05
      %v2794 = vmul.f32 %v2730, 0.05
      %v2795 = vmul.f32 %v2731, 0.05
      %v2796 = vsel %vm2732, %v2700, %v2764
      %v2797 = vsel %vm2733, %v2701, %v2765
      %v2798 = vsel %vm2734, %v2702, %v2766
      %v2799 = vsel %vm2735, %v2703, %v2767
      %v2800 = vsel %vm2736, %v2704, %v2768
      %v2801 = vsel %vm2737, %v2705, %v2769
      %v2802 = vsel %vm2738, %v2706, %v2770
      %v2803 = vsel %vm2739, %v2707, %v2771
      %v2804 = vsel %vm2740, %v2708, %v2772
      %v2805 = vsel %vm2741, %v2709, %v2773
      %v2806 = vsel %vm2742, %v2710, %v2774
      %v2807 = vsel %vm2743, %v2711, %v2775
      %v2808 = vsel %vm2744, %v2712, %v2776
      %v2809 = vsel %vm2745, %v2713, %v2777
      %v2810 = vsel %vm2746, %v2714, %v2778
      %v2811 = vsel %vm2747, %v2715, %v2779
      %v2812 = vsel %vm2748, %v2716, %v2780
      %v2813 = vsel %vm2749, %v2717, %v2781
      %v2814 = vsel %vm2750, %v2718, %v2782
      %v2815 = vsel %vm2751, %v2719, %v2783
      %v2816 = vsel %vm2752, %v2720, %v2784
      %v2817 = vsel %vm2753, %v2721, %v2785
      %v2818 = vsel %vm2754, %v2722, %v2786
      %v2819 = vsel %vm2755, %v2723, %v2787
      %v2820 = vsel %vm2756, %v2724, %v2788
      %v2821 = vsel %vm2757, %v2725, %v2789
      %v2822 = vsel %vm2758, %v2726, %v2790
      %v2823 = vsel %vm2759, %v2727, %v2791
      %v2824 = vsel %vm2760, %v2728, %v2792
      %v2825 = vsel %vm2761, %v2729, %v2793
      %v2826 = vsel %vm2762, %v2730, %v2794
      %v2827 = vsel %vm2763, %v2731, %v2795
      %v2860 = vrot.slane %v2796, 7
      %v2861 = vsel %vm1351, %v1352, %v2860
      %v2862 = vrot.slane %v2797, 7
      %v2863 = vsel %vm1351, %v2860, %v2862
      %v2864 = vrot.slane %v2798, 7
      %v2865 = vsel %vm1351, %v2862, %v2864
      %v2866 = vrot.slane %v2799, 7
      %v2867 = vsel %vm1351, %v2864, %v2866
      %v2868 = vrot.slane %v2800, 7
      %v2869 = vsel %vm1351, %v2866, %v2868
      %v2870 = vrot.slane %v2801, 7
      %v2871 = vsel %vm1351, %v2868, %v2870
      %v2872 = vrot.slane %v2802, 7
      %v2873 = vsel %vm1351, %v2870, %v2872
      %v2874 = vrot.slane %v2803, 7
      %v2875 = vsel %vm1351, %v2872, %v2874
      %v2876 = vrot.slane %v2804, 7
      %v2877 = vsel %vm1351, %v2874, %v2876
      %v2878 = vrot.slane %v2805, 7
      %v2879 = vsel %vm1351, %v2876, %v2878
      %v2880 = vrot.slane %v2806, 7
      %v2881 = vsel %vm1351, %v2878, %v2880
      %v2882 = vrot.slane %v2807, 7
      %v2883 = vsel %vm1351, %v2880, %v2882
      %v2884 = vrot.slane %v2808, 7
      %v2885 = vsel %vm1351, %v2882, %v2884
      %v2886 = vrot.slane %v2809, 7
      %v2887 = vsel %vm1351, %v2884, %v2886
      %v2888 = vrot.slane %v2810, 7
      %v2889 = vsel %vm1351, %v2886, %v2888
      %v2890 = vrot.slane %v2811, 7
      %v2891 = vsel %vm1351, %v2888, %v2890
      %v2892 = vrot.slane %v2812, 7
      %v2893 = vsel %vm1351, %v2890, %v2892
      %v2894 = vrot.slane %v2813, 7
      %v2895 = vsel %vm1351, %v2892, %v2894
      %v2896 = vrot.slane %v2814, 7
      %v2897 = vsel %vm1351, %v2894, %v2896
      %v2898 = vrot.slane %v2815, 7
      %v2899 = vsel %vm1351, %v2896, %v2898
      %v2900 = vrot.slane %v2816, 7
      %v2901 = vsel %vm1351, %v2898, %v2900
      %v2902 = vrot.slane %v2817, 7
      %v2903 = vsel %vm1351, %v2900, %v2902
      %v2904 = vrot.slane %v2818, 7
      %v2905 = vsel %vm1351, %v2902, %v2904
      %v2906 = vrot.slane %v2819, 7
      %v2907 = vsel %vm1351, %v2904, %v2906
      %v2908 = vrot.slane %v2820, 7
      %v2909 = vsel %vm1351, %v2906, %v2908
      %v2910 = vrot.slane %v2821, 7
      %v2911 = vsel %vm1351, %v2908, %v2910
      %v2912 = vrot.slane %v2822, 7
      %v2913 = vsel %vm1351, %v2910, %v2912
      %v2914 = vrot.slane %v2823, 7
      %v2915 = vsel %vm1351, %v2912, %v2914
      %v2916 = vrot.slane %v2824, 7
      %v2917 = vsel %vm1351, %v2914, %v2916
      %v2918 = vrot.slane %v2825, 7
      %v2919 = vsel %vm1351, %v2916, %v2918
      %v2920 = vrot.slane %v2826, 7
      %v2921 = vsel %vm1351, %v2918, %v2920
      %v2922 = vrot.slane %v2827, 7
      %v2923 = vsel %vm1351, %v2920, %v2922
      %v2956 = vsel %vm1286, %v2861, 0.0
      %v2957 = vsel %vm1287, %v2863, 0.0
      %v2958 = vsel %vm1288, %v2865, 0.0
      %v2959 = vsel %vm1289, %v2867, 0.0
      %v2960 = vsel %vm1290, %v2869, 0.0
      %v2961 = vsel %vm1291, %v2871, 0.0
      %v2962 = vsel %vm1292, %v2873, 0.0
      %v2963 = vsel %vm1293, %v2875, 0.0
      %v2964 = vsel %vm1294, %v2877, 0.0
      %v2965 = vsel %vm1295, %v2879, 0.0
      %v2966 = vsel %vm1296, %v2881, 0.0
      %v2967 = vsel %vm1297, %v2883, 0.0
      %v2968 = vsel %vm1298, %v2885, 0.0
      %v2969 = vsel %vm1299, %v2887, 0.0
      %v2970 = vsel %vm1300, %v2889, 0.0
      %v2971 = vsel %vm1301, %v2891, 0.0
      %v2972 = vsel %vm1302, %v2893, 0.0
      %v2973 = vsel %vm1303, %v2895, 0.0
      %v2974 = vsel %vm1304, %v2897, 0.0
      %v2975 = vsel %vm1305, %v2899, 0.0
      %v2976 = vsel %vm1306, %v2901, 0.0
      %v2977 = vsel %vm1307, %v2903, 0.0
      %v2978 = vsel %vm1308, %v2905, 0.0
      %v2979 = vsel %vm1309, %v2907, 0.0
      %v2980 = vsel %vm1310, %v2909, 0.0
      %v2981 = vsel %vm1311, %v2911, 0.0
      %v2982 = vsel %vm1312, %v2913, 0.0
      %v2983 = vsel %vm1313, %v2915, 0.0
      %v2984 = vsel %vm1314, %v2917, 0.0
      %v2985 = vsel %vm1315, %v2919, 0.0
      %v2986 = vsel %vm1316, %v2921, 0.0
      %v2987 = vsel %vm1317, %v2923, 0.0
      %v2988 = vrot.slane %v2796, 1
      %v2989 = vrot.slane %v2797, 1
      %v2990 = vsel %vm1545, %v2988, %v2989
      %v2991 = vrot.slane %v2798, 1
      %v2992 = vsel %vm1545, %v2989, %v2991
      %v2993 = vrot.slane %v2799, 1
      %v2994 = vsel %vm1545, %v2991, %v2993
      %v2995 = vrot.slane %v2800, 1
      %v2996 = vsel %vm1545, %v2993, %v2995
      %v2997 = vrot.slane %v2801, 1
      %v2998 = vsel %vm1545, %v2995, %v2997
      %v2999 = vrot.slane %v2802, 1
      %v3000 = vsel %vm1545, %v2997, %v2999
      %v3001 = vrot.slane %v2803, 1
      %v3002 = vsel %vm1545, %v2999, %v3001
      %v3003 = vrot.slane %v2804, 1
      %v3004 = vsel %vm1545, %v3001, %v3003
      %v3005 = vrot.slane %v2805, 1
      %v3006 = vsel %vm1545, %v3003, %v3005
      %v3007 = vrot.slane %v2806, 1
      %v3008 = vsel %vm1545, %v3005, %v3007
      %v3009 = vrot.slane %v2807, 1
      %v3010 = vsel %vm1545, %v3007, %v3009
      %v3011 = vrot.slane %v2808, 1
      %v3012 = vsel %vm1545, %v3009, %v3011
      %v3013 = vrot.slane %v2809, 1
      %v3014 = vsel %vm1545, %v3011, %v3013
      %v3015 = vrot.slane %v2810, 1
      %v3016 = vsel %vm1545, %v3013, %v3015
      %v3017 = vrot.slane %v2811, 1
      %v3018 = vsel %vm1545, %v3015, %v3017
      %v3019 = vrot.slane %v2812, 1
      %v3020 = vsel %vm1545, %v3017, %v3019
      %v3021 = vrot.slane %v2813, 1
      %v3022 = vsel %vm1545, %v3019, %v3021
      %v3023 = vrot.slane %v2814, 1
      %v3024 = vsel %vm1545, %v3021, %v3023
      %v3025 = vrot.slane %v2815, 1
      %v3026 = vsel %vm1545, %v3023, %v3025
      %v3027 = vrot.slane %v2816, 1
      %v3028 = vsel %vm1545, %v3025, %v3027
      %v3029 = vrot.slane %v2817, 1
      %v3030 = vsel %vm1545, %v3027, %v3029
      %v3031 = vrot.slane %v2818, 1
      %v3032 = vsel %vm1545, %v3029, %v3031
      %v3033 = vrot.slane %v2819, 1
      %v3034 = vsel %vm1545, %v3031, %v3033
      %v3035 = vrot.slane %v2820, 1
      %v3036 = vsel %vm1545, %v3033, %v3035
      %v3037 = vrot.slane %v2821, 1
      %v3038 = vsel %vm1545, %v3035, %v3037
      %v3039 = vrot.slane %v2822, 1
      %v3040 = vsel %vm1545, %v3037, %v3039
      %v3041 = vrot.slane %v2823, 1
      %v3042 = vsel %vm1545, %v3039, %v3041
      %v3043 = vrot.slane %v2824, 1
      %v3044 = vsel %vm1545, %v3041, %v3043
      %v3045 = vrot.slane %v2825, 1
      %v3046 = vsel %vm1545, %v3043, %v3045
      %v3047 = vrot.slane %v2826, 1
      %v3048 = vsel %vm1545, %v3045, %v3047
      %v3049 = vrot.slane %v2827, 1
      %v3050 = vsel %vm1545, %v3047, %v3049
      %v3051 = vsel %vm1545, %v3049, %v1609
      %v3084 = vsel %vm1513, %v2990, 0.0
      %v3085 = vsel %vm1514, %v2992, 0.0
      %v3086 = vsel %vm1515, %v2994, 0.0
      %v3087 = vsel %vm1516, %v2996, 0.0
      %v3088 = vsel %vm1517, %v2998, 0.0
      %v3089 = vsel %vm1518, %v3000, 0.0
      %v3090 = vsel %vm1519, %v3002, 0.0
      %v3091 = vsel %vm1520, %v3004, 0.0
      %v3092 = vsel %vm1521, %v3006, 0.0
      %v3093 = vsel %vm1522, %v3008, 0.0
      %v3094 = vsel %vm1523, %v3010, 0.0
      %v3095 = vsel %vm1524, %v3012, 0.0
      %v3096 = vsel %vm1525, %v3014, 0.0
      %v3097 = vsel %vm1526, %v3016, 0.0
      %v3098 = vsel %vm1527, %v3018, 0.0
      %v3099 = vsel %vm1528, %v3020, 0.0
      %v3100 = vsel %vm1529, %v3022, 0.0
      %v3101 = vsel %vm1530, %v3024, 0.0
      %v3102 = vsel %vm1531, %v3026, 0.0
      %v3103 = vsel %vm1532, %v3028, 0.0
      %v3104 = vsel %vm1533, %v3030, 0.0
      %v3105 = vsel %vm1534, %v3032, 0.0
      %v3106 = vsel %vm1535, %v3034, 0.0
      %v3107 = vsel %vm1536, %v3036, 0.0
      %v3108 = vsel %vm1537, %v3038, 0.0
      %v3109 = vsel %vm1538, %v3040, 0.0
      %v3110 = vsel %vm1539, %v3042, 0.0
      %v3111 = vsel %vm1540, %v3044, 0.0
      %v3112 = vsel %vm1541, %v3046, 0.0
      %v3113 = vsel %vm1542, %v3048, 0.0
      %v3114 = vsel %vm1543, %v3050, 0.0
      %v3115 = vsel %vm1544, %v3051, 0.0
      %v3116 = vpack.c.bf16 %v2957, %v2956
      %v3117 = vpack.c.bf16 %v2797, %v2796
      %v3118 = vpack.c.bf16 %v3085, %v3084
      %v3119 = vpack.c.bf16 %v2959, %v2958
      %v3120 = vpack.c.bf16 %v2799, %v2798
      %v3121 = vpack.c.bf16 %v3087, %v3086
      %v3122 = vpack.c.bf16 %v2961, %v2960
      %v3123 = vpack.c.bf16 %v2801, %v2800
      %v3124 = vpack.c.bf16 %v3089, %v3088
      %v3125 = vpack.c.bf16 %v2963, %v2962
      %v3126 = vpack.c.bf16 %v2803, %v2802
      %v3127 = vpack.c.bf16 %v3091, %v3090
      %v3128 = vpack.c.bf16 %v2965, %v2964
      %v3129 = vpack.c.bf16 %v2805, %v2804
      %v3130 = vpack.c.bf16 %v3093, %v3092
      %v3131 = vpack.c.bf16 %v2967, %v2966
      %v3132 = vpack.c.bf16 %v2807, %v2806
      %v3133 = vpack.c.bf16 %v3095, %v3094
      %v3134 = vpack.c.bf16 %v2969, %v2968
      %v3135 = vpack.c.bf16 %v2809, %v2808
      %v3136 = vpack.c.bf16 %v3097, %v3096
      %v3137 = vpack.c.bf16 %v2971, %v2970
      %v3138 = vpack.c.bf16 %v2811, %v2810
      %v3139 = vpack.c.bf16 %v3099, %v3098
      %v3140 = vpack.c.bf16 %v2973, %v2972
      %v3141 = vpack.c.bf16 %v2813, %v2812
      %v3142 = vpack.c.bf16 %v3101, %v3100
      %v3143 = vpack.c.bf16 %v2975, %v2974
      %v3144 = vpack.c.bf16 %v2815, %v2814
      %v3145 = vpack.c.bf16 %v3103, %v3102
      %v3146 = vpack.c.bf16 %v2977, %v2976
      %v3147 = vpack.c.bf16 %v2817, %v2816
      %v3148 = vpack.c.bf16 %v3105, %v3104
      %v3149 = vpack.c.bf16 %v2979, %v2978
      %v3150 = vpack.c.bf16 %v2819, %v2818
      %v3151 = vpack.c.bf16 %v3107, %v3106
      %v3152 = vpack.c.bf16 %v2981, %v2980
      %v3153 = vpack.c.bf16 %v2821, %v2820
      %v3154 = vpack.c.bf16 %v3109, %v3108
      %v3155 = vpack.c.bf16 %v2983, %v2982
      %v3156 = vpack.c.bf16 %v2823, %v2822
      %v3157 = vpack.c.bf16 %v3111, %v3110
      %v3158 = vpack.c.bf16 %v2985, %v2984
      %v3159 = vpack.c.bf16 %v2825, %v2824
      %v3160 = vpack.c.bf16 %v3113, %v3112
      %v3161 = vld [vmem:[%s5] sm:$0xf]
      %v3162 = vld [vmem:[%s5 + $0x4] sm:$0xf]
      %v3163 = vld [vmem:[%s5 + $0x8] sm:$0xf]
      %v3164 = vld [vmem:[%s5 + $0xc] sm:$0xf]
      %v3165 = vld [vmem:[%s5 + $0x10] sm:$0xf]
      %v3166 = vld [vmem:[%s5 + $0x14] sm:$0xf]
      %v3167 = vld [vmem:[%s5 + $0x18] sm:$0xf]
      %v3168 = vld [vmem:[%s5 + $0x1c] sm:$0xf]
      %v3169 = vld [vmem:[%s5 + $0x20] sm:$0xf]
      %v3170 = vld [vmem:[%s5 + $0x24] sm:$0xf]
      %v3171 = vld [vmem:[%s5 + $0x28] sm:$0xf]
      %v3172 = vld [vmem:[%s5 + $0x2c] sm:$0xf]
      %v3173 = vld [vmem:[%s5 + $0x30] sm:$0xf]
      %v3174 = vld [vmem:[%s5 + $0x34] sm:$0xf]
      %v3175 = vld [vmem:[%s5 + $0x38] sm:$0xf]
      %v3176 = vld [vmem:[%s5 + $0x3c] sm:$0xf]
      %v3177 = vld [vmem:[%s5 + $0x40] sm:$0xf]
      %v3178 = vld [vmem:[%s5 + $0x44] sm:$0xf]
      %v3179 = vld [vmem:[%s5 + $0x48] sm:$0xf]
      %v3180 = vld [vmem:[%s5 + $0x4c] sm:$0xf]
      %v3181 = vld [vmem:[%s5 + $0x50] sm:$0xf]
      %v3182 = vld [vmem:[%s5 + $0x54] sm:$0xf]
      %v3183 = vld [vmem:[%s5 + $0x58] sm:$0xf]
      %v3184 = vld [vmem:[%s5 + $0x5c] sm:$0xf]
      %v3185 = vld [vmem:[%s5 + $0x60] sm:$0xf]
      %v3186 = vld [vmem:[%s5 + $0x64] sm:$0xf]
      %v3187 = vld [vmem:[%s5 + $0x68] sm:$0xf]
      %v3188 = vld [vmem:[%s5 + $0x6c] sm:$0xf]
      %v3189 = vld [vmem:[%s5 + $0x70] sm:$0xf]
      %v3190 = vld [vmem:[%s5 + $0x74] sm:$0xf]
      %v3191 = vld [vmem:[%s5 + $0x78] sm:$0xf]
      %v3192 = vld [vmem:[%s5 + $0x7c] sm:$0xf]
      %v3193 = vld [vmem:[%s5 + $0x80] sm:$0xf]
      %v3194 = vld [vmem:[%s5 + $0x84] sm:$0xf]
      %v3195 = vld [vmem:[%s5 + $0x88] sm:$0xf]
      %v3196 = vld [vmem:[%s5 + $0x8c] sm:$0xf]
      %v3197 = vld [vmem:[%s5 + $0x90] sm:$0xf]
      %v3198 = vld [vmem:[%s5 + $0x94] sm:$0xf]
      %v3199 = vld [vmem:[%s5 + $0x98] sm:$0xf]
      %v3200 = vld [vmem:[%s5 + $0x9c] sm:$0xf]
      %v3201 = vld [vmem:[%s5 + $0xa0] sm:$0xf]
      %v3202 = vld [vmem:[%s5 + $0xa4] sm:$0xf]
      %v3203 = vld [vmem:[%s5 + $0xa8] sm:$0xf]
      %v3204 = vld [vmem:[%s5 + $0xac] sm:$0xf]
      %v3205 = vld [vmem:[%s5 + $0xb0] sm:$0xf]
      %v3206 = vld [vmem:[%s5 + $0xb4] sm:$0xf]
      %v3207 = vld [vmem:[%s5 + $0xb8] sm:$0xf]
      %v3208 = vld [vmem:[%s5 + $0xbc] sm:$0xf]
      %v3209 = vpack.c.bf16 %v2987, %v2986
      %v3210 = vpack.c.bf16 %v2827, %v2826
      %v3211 = vpack.c.bf16 %v3115, %v3114
      %s3212 = scalar_lea.vmem %s5, 192
      %v3213 = vld [vmem:[%s3212] sm:$0xf]
      %v3214 = vld [vmem:[%s3212 + $0x4] sm:$0xf]
      %v3215 = vld [vmem:[%s3212 + $0x8] sm:$0xf]
      %v3216 = vld [vmem:[%s3212 + $0xc] sm:$0xf]
      %v3217 = vld [vmem:[%s3212 + $0x10] sm:$0xf]
      %v3218 = vld [vmem:[%s3212 + $0x14] sm:$0xf]
      %v3219 = vld [vmem:[%s3212 + $0x18] sm:$0xf]
      %v3220 = vld [vmem:[%s3212 + $0x1c] sm:$0xf]
      %v3221 = vld [vmem:[%s3212 + $0x20] sm:$0xf]
      %v3222 = vld [vmem:[%s3212 + $0x24] sm:$0xf]
      %v3223 = vld [vmem:[%s3212 + $0x28] sm:$0xf]
      %v3224 = vld [vmem:[%s3212 + $0x2c] sm:$0xf]
      %v3225 = vld [vmem:[%s3212 + $0x30] sm:$0xf]
      %v3226 = vld [vmem:[%s3212 + $0x34] sm:$0xf]
      %v3227 = vld [vmem:[%s3212 + $0x38] sm:$0xf]
      %v3228 = vld [vmem:[%s3212 + $0x3c] sm:$0xf]
      %v3229 = vld [vmem:[%s3212 + $0x40] sm:$0xf]
      %v3230 = vld [vmem:[%s3212 + $0x44] sm:$0xf]
      %v3231 = vld [vmem:[%s3212 + $0x48] sm:$0xf]
      %v3232 = vld [vmem:[%s3212 + $0x4c] sm:$0xf]
      %v3233 = vld [vmem:[%s3212 + $0x50] sm:$0xf]
      %v3234 = vld [vmem:[%s3212 + $0x54] sm:$0xf]
      %v3235 = vld [vmem:[%s3212 + $0x58] sm:$0xf]
      %v3236 = vld [vmem:[%s3212 + $0x5c] sm:$0xf]
      %v3237 = vld [vmem:[%s3212 + $0x60] sm:$0xf]
      %v3238 = vld [vmem:[%s3212 + $0x64] sm:$0xf]
      %v3239 = vld [vmem:[%s3212 + $0x68] sm:$0xf]
      %v3240 = vld [vmem:[%s3212 + $0x6c] sm:$0xf]
      %v3241 = vld [vmem:[%s3212 + $0x70] sm:$0xf]
      %v3242 = vld [vmem:[%s3212 + $0x74] sm:$0xf]
      %v3243 = vld [vmem:[%s3212 + $0x78] sm:$0xf]
      %v3244 = vld [vmem:[%s3212 + $0x7c] sm:$0xf]
      %v3245 = vld [vmem:[%s3212 + $0x80] sm:$0xf]
      %v3246 = vld [vmem:[%s3212 + $0x84] sm:$0xf]
      %v3247 = vld [vmem:[%s3212 + $0x88] sm:$0xf]
      %v3248 = vld [vmem:[%s3212 + $0x8c] sm:$0xf]
      %v3249 = vld [vmem:[%s3212 + $0x90] sm:$0xf]
      %v3250 = vld [vmem:[%s3212 + $0x94] sm:$0xf]
      %v3251 = vld [vmem:[%s3212 + $0x98] sm:$0xf]
      %v3252 = vld [vmem:[%s3212 + $0x9c] sm:$0xf]
      %v3253 = vld [vmem:[%s3212 + $0xa0] sm:$0xf]
      %v3254 = vld [vmem:[%s3212 + $0xa4] sm:$0xf]
      %v3255 = vld [vmem:[%s3212 + $0xa8] sm:$0xf]
      %v3256 = vld [vmem:[%s3212 + $0xac] sm:$0xf]
      %v3257 = vld [vmem:[%s3212 + $0xb0] sm:$0xf]
      %v3258 = vld [vmem:[%s3212 + $0xb4] sm:$0xf]
      %v3259 = vld [vmem:[%s3212 + $0xb8] sm:$0xf]
      %v3260 = vld [vmem:[%s3212 + $0xbc] sm:$0xf]
      %v3309 = vunpack.c.l.b16 %v3213
      %v3310 = vunpack.c.l.b16 %v3214
      %v3311 = vunpack.c.l.b16 %v3215
      %v3312 = vunpack.c.l.b16 %v3216
      %v3313 = vunpack.c.l.b16 %v3217
      %v3314 = vunpack.c.l.b16 %v3218
      %v3315 = vunpack.c.l.b16 %v3219
      %v3316 = vunpack.c.l.b16 %v3220
      %v3317 = vunpack.c.l.b16 %v3221
      %v3318 = vunpack.c.l.b16 %v3222
      %v3319 = vunpack.c.l.b16 %v3223
      %v3320 = vunpack.c.l.b16 %v3224
      %v3321 = vunpack.c.l.b16 %v3225
      %v3322 = vunpack.c.l.b16 %v3226
      %v3323 = vunpack.c.l.b16 %v3227
      %v3324 = vunpack.c.l.b16 %v3228
      %v3325 = vunpack.c.l.b16 %v3229
      %v3326 = vunpack.c.l.b16 %v3230
      %v3327 = vunpack.c.l.b16 %v3231
      %v3328 = vunpack.c.l.b16 %v3232
      %v3329 = vunpack.c.l.b16 %v3233
      %v3330 = vunpack.c.l.b16 %v3234
      %v3331 = vunpack.c.l.b16 %v3235
      %v3332 = vunpack.c.l.b16 %v3236
      %v3333 = vunpack.c.l.b16 %v3237
      %v3334 = vunpack.c.l.b16 %v3238
      %v3335 = vunpack.c.l.b16 %v3239
      %v3336 = vunpack.c.l.b16 %v3240
      %v3337 = vunpack.c.l.b16 %v3241
      %v3338 = vunpack.c.l.b16 %v3242
      %v3339 = vunpack.c.l.b16 %v3243
      %v3340 = vunpack.c.l.b16 %v3244
      %v3341 = vunpack.c.l.b16 %v3245
      %v3342 = vunpack.c.l.b16 %v3246
      %v3343 = vunpack.c.l.b16 %v3247
      %v3344 = vunpack.c.l.b16 %v3248
      %v3345 = vunpack.c.l.b16 %v3249
      %v3346 = vunpack.c.l.b16 %v3250
      %v3347 = vunpack.c.l.b16 %v3251
      %v3348 = vunpack.c.l.b16 %v3252
      %v3349 = vunpack.c.l.b16 %v3253
      %v3350 = vunpack.c.l.b16 %v3254
      %v3351 = vunpack.c.l.b16 %v3255
      %v3352 = vunpack.c.l.b16 %v3256
      %v3353 = vunpack.c.l.b16 %v3257
      %v3354 = vunpack.c.l.b16 %v3258
      %v3355 = vunpack.c.l.b16 %v3259
      %v3356 = vunpack.c.l.b16 %v3260
      %v3357 = vpack.c.b16 %v3310, %v3309
      %v3358 = vpack.c.b16 %v3312, %v3311
      %v3359 = vpack.c.b16 %v3314, %v3313
      %v3360 = vpack.c.b16 %v3316, %v3315
      %v3361 = vpack.c.b16 %v3318, %v3317
      %v3362 = vpack.c.b16 %v3320, %v3319
      %v3363 = vpack.c.b16 %v3322, %v3321
      %v3364 = vpack.c.b16 %v3324, %v3323
      %v3365 = vpack.c.b16 %v3326, %v3325
      %v3366 = vpack.c.b16 %v3328, %v3327
      %v3367 = vpack.c.b16 %v3330, %v3329
      %v3368 = vpack.c.b16 %v3332, %v3331
      %v3369 = vpack.c.b16 %v3334, %v3333
      %v3370 = vpack.c.b16 %v3336, %v3335
      %v3371 = vpack.c.b16 %v3338, %v3337
      %v3372 = vpack.c.b16 %v3340, %v3339
      %v3373 = vpack.c.b16 %v3342, %v3341
      %v3374 = vpack.c.b16 %v3344, %v3343
      %v3375 = vpack.c.b16 %v3346, %v3345
      %v3376 = vpack.c.b16 %v3348, %v3347
      %v3377 = vpack.c.b16 %v3350, %v3349
      %v3378 = vpack.c.b16 %v3352, %v3351
      %v3379 = vpack.c.b16 %v3354, %v3353
      %v3380 = vpack.c.b16 %v3356, %v3355
      %3405 = vmatprep.subr.bf16.mxu0 0
      %3406 = vmatpush1.bf16.msra.mxu0 %v3364
      %3407 = vmatprep.subr.bf16.mxu0 0
      %3408 = vmatpush1.bf16.msra.mxu0 %v3363
      %3409 = vmatprep.subr.bf16.mxu0 0
      %3410 = vmatpush1.bf16.msra.mxu0 %v3362
      %3411 = vmatprep.subr.bf16.mxu0 0
      %3412 = vmatpush1.bf16.msra.mxu0 %v3361
      %3413 = vmatprep.subr.bf16.mxu0 0
      %3414 = vmatpush1.bf16.msra.mxu0 %v3360
      %3415 = vmatprep.subr.bf16.mxu0 0
      %3416 = vmatpush1.bf16.msra.mxu0 %v3359
      %3417 = vmatprep.subr.bf16.mxu0 0
      %3418 = vmatpush1.bf16.msra.mxu0 %v3358
      %3419 = vmatprep.subr.bf16.mxu0 0
      %3420 = vmatpush1.bf16.msra.mxu0 %v3357
      %3421 = vmatprep.subr.bf16.mxu0 0
      %3422 = vmatpush2.bf16.msra.mxu0 %v3372
      %3423 = vmatprep.subr.bf16.mxu0 0
      %3424 = vmatpush2.bf16.msra.mxu0 %v3371
      %3425 = vmatprep.subr.bf16.mxu0 0
      %3426 = vmatpush2.bf16.msra.mxu0 %v3370
      %3427 = vmatprep.subr.bf16.mxu0 0
      %3428 = vmatpush2.bf16.msra.mxu0 %v3369
      %3429 = vmatprep.subr.bf16.mxu0 0
      %3430 = vmatpush2.bf16.msra.mxu0 %v3368
      %3431 = vmatprep.subr.bf16.mxu0 0
      %3432 = vmatpush2.bf16.msra.mxu0 %v3367
      %3433 = vmatprep.subr.bf16.mxu0 0
      %3434 = vmatpush2.bf16.msra.mxu0 %v3366
      %3435 = vmatprep.subr.bf16.mxu0 0
      %3436 = vmatpush2.bf16.msra.mxu0 %v3365
      %3437 = vmatprep.mubr.bf16.mxu0 %v3117
      %3438 = vmatmul.mubr.bf16.gmra.mxu0 %v3116
      %v3439 = vpop.f32.mrf.mxu0
      %v3440 = vadd.f32 0.0, %v3439
      %v3441 = vpop.f32.mrf.mxu0
      %v3442 = vpop.f32.mrf.mxu0
      %v3443 = vadd.f32 0.0, %v3442
      %v3444 = vpop.f32.mrf.mxu0
      %3445 = vmatprep.mubr.bf16.mxu0 %v3120
      %3446 = vmatmul.mubr.bf16.gmra.mxu0 %v3119
      %v3447 = vpop.f32.mrf.mxu0
      %v3448 = vadd.f32 0.0, %v3447
      %v3449 = vpop.f32.mrf.mxu0
      %v3450 = vpop.f32.mrf.mxu0
      %v3451 = vadd.f32 0.0, %v3450
      %v3452 = vpop.f32.mrf.mxu0
      %3453 = vmatprep.mubr.bf16.mxu0 %v3123
      %3454 = vmatmul.mubr.bf16.gmra.mxu0 %v3122
      %v3455 = vpop.f32.mrf.mxu0
      %v3456 = vadd.f32 0.0, %v3455
      %v3457 = vpop.f32.mrf.mxu0
      %v3458 = vpop.f32.mrf.mxu0
      %v3459 = vadd.f32 0.0, %v3458
      %v3460 = vpop.f32.mrf.mxu0
      %3461 = vmatprep.mubr.bf16.mxu0 %v3126
      %3462 = vmatmul.mubr.bf16.gmra.mxu0 %v3125
      %v3463 = vpop.f32.mrf.mxu0
      %v3464 = vadd.f32 0.0, %v3463
      %v3465 = vpop.f32.mrf.mxu0
      %v3466 = vpop.f32.mrf.mxu0
      %v3467 = vadd.f32 0.0, %v3466
      %v3468 = vpop.f32.mrf.mxu0
      %3469 = vmatprep.mubr.bf16.mxu0 %v3129
      %3470 = vmatmul.mubr.bf16.gmra.mxu0 %v3128
      %v3471 = vpop.f32.mrf.mxu0
      %v3472 = vadd.f32 0.0, %v3471
      %v3473 = vpop.f32.mrf.mxu0
      %v3474 = vpop.f32.mrf.mxu0
      %v3475 = vadd.f32 0.0, %v3474
      %v3476 = vpop.f32.mrf.mxu0
      %3477 = vmatprep.mubr.bf16.mxu0 %v3132
      %3478 = vmatmul.mubr.bf16.gmra.mxu0 %v3131
      %v3479 = vpop.f32.mrf.mxu0
      %v3480 = vadd.f32 0.0, %v3479
      %v3481 = vpop.f32.mrf.mxu0
      %v3482 = vpop.f32.mrf.mxu0
      %v3483 = vadd.f32 0.0, %v3482
      %v3484 = vpop.f32.mrf.mxu0
      %3485 = vmatprep.mubr.bf16.mxu0 %v3135
      %3486 = vmatmul.mubr.bf16.gmra.mxu0 %v3134
      %v3487 = vpop.f32.mrf.mxu0
      %v3488 = vadd.f32 0.0, %v3487
      %v3489 = vpop.f32.mrf.mxu0
      %v3490 = vpop.f32.mrf.mxu0
      %v3491 = vadd.f32 0.0, %v3490
      %v3492 = vpop.f32.mrf.mxu0
      %3493 = vmatprep.mubr.bf16.mxu0 %v3138
      %3494 = vmatmul.mubr.bf16.gmra.mxu0 %v3137
      %v3495 = vpop.f32.mrf.mxu0
      %v3496 = vadd.f32 0.0, %v3495
      %v3497 = vpop.f32.mrf.mxu0
      %v3498 = vpop.f32.mrf.mxu0
      %v3499 = vadd.f32 0.0, %v3498
      %v3500 = vpop.f32.mrf.mxu0
      %3501 = vmatprep.mubr.bf16.mxu0 %v3141
      %3502 = vmatmul.mubr.bf16.gmra.mxu0 %v3140
      %v3503 = vpop.f32.mrf.mxu0
      %v3504 = vadd.f32 0.0, %v3503
      %v3505 = vpop.f32.mrf.mxu0
      %v3506 = vpop.f32.mrf.mxu0
      %v3507 = vadd.f32 0.0, %v3506
      %v3508 = vpop.f32.mrf.mxu0
      %3509 = vmatprep.mubr.bf16.mxu0 %v3144
      %3510 = vmatmul.mubr.bf16.gmra.mxu0 %v3143
      %v3511 = vpop.f32.mrf.mxu0
      %v3512 = vadd.f32 0.0, %v3511
      %v3513 = vpop.f32.mrf.mxu0
      %v3514 = vpop.f32.mrf.mxu0
      %v3515 = vadd.f32 0.0, %v3514
      %v3516 = vpop.f32.mrf.mxu0
      %3517 = vmatprep.mubr.bf16.mxu0 %v3147
      %3518 = vmatmul.mubr.bf16.gmra.mxu0 %v3146
      %v3519 = vpop.f32.mrf.mxu0
      %v3520 = vadd.f32 0.0, %v3519
      %v3521 = vpop.f32.mrf.mxu0
      %v3522 = vpop.f32.mrf.mxu0
      %v3523 = vadd.f32 0.0, %v3522
      %v3524 = vpop.f32.mrf.mxu0
      %3525 = vmatprep.mubr.bf16.mxu0 %v3150
      %3526 = vmatmul.mubr.bf16.gmra.mxu0 %v3149
      %v3527 = vpop.f32.mrf.mxu0
      %v3528 = vadd.f32 0.0, %v3527
      %v3529 = vpop.f32.mrf.mxu0
      %v3530 = vpop.f32.mrf.mxu0
      %v3531 = vadd.f32 0.0, %v3530
      %v3532 = vpop.f32.mrf.mxu0
      %3533 = vmatprep.mubr.bf16.mxu0 %v3153
      %3534 = vmatmul.mubr.bf16.gmra.mxu0 %v3152
      %v3535 = vpop.f32.mrf.mxu0
      %v3536 = vadd.f32 0.0, %v3535
      %v3537 = vpop.f32.mrf.mxu0
      %v3538 = vpop.f32.mrf.mxu0
      %v3539 = vadd.f32 0.0, %v3538
      %v3540 = vpop.f32.mrf.mxu0
      %3541 = vmatprep.mubr.bf16.mxu0 %v3156
      %3542 = vmatmul.mubr.bf16.gmra.mxu0 %v3155
      %v3543 = vpop.f32.mrf.mxu0
      %v3544 = vadd.f32 0.0, %v3543
      %v3545 = vpop.f32.mrf.mxu0
      %v3546 = vpop.f32.mrf.mxu0
      %v3547 = vadd.f32 0.0, %v3546
      %v3548 = vpop.f32.mrf.mxu0
      %3549 = vmatprep.mubr.bf16.mxu0 %v3159
      %3550 = vmatmul.mubr.bf16.gmra.mxu0 %v3158
      %v3551 = vpop.f32.mrf.mxu0
      %v3552 = vadd.f32 0.0, %v3551
      %v3553 = vpop.f32.mrf.mxu0
      %v3554 = vpop.f32.mrf.mxu0
      %v3555 = vadd.f32 0.0, %v3554
      %v3556 = vpop.f32.mrf.mxu0
      %3557 = vmatprep.mubr.bf16.mxu0 %v3210
      %3558 = vmatmul.mubr.bf16.gmra.mxu0 %v3209
      %v3559 = vpop.f32.mrf.mxu0
      %v3560 = vadd.f32 0.0, %v3559
      %v3561 = vpop.f32.mrf.mxu0
      %v3562 = vpop.f32.mrf.mxu0
      %v3563 = vadd.f32 0.0, %v3562
      %v3564 = vpop.f32.mrf.mxu0
      %3565 = vdwg.mxu0
      %3566 = vmatprep.subr.bf16.mxu0 0
      %3567 = vmatpush1.bf16.msra.mxu0 %v3380
      %3568 = vmatprep.subr.bf16.mxu0 0
      %3569 = vmatpush1.bf16.msra.mxu0 %v3379
      %3570 = vmatprep.subr.bf16.mxu0 0
      %3571 = vmatpush1.bf16.msra.mxu0 %v3378
      %3572 = vmatprep.subr.bf16.mxu0 0
      %3573 = vmatpush1.bf16.msra.mxu0 %v3377
      %3574 = vmatprep.subr.bf16.mxu0 0
      %3575 = vmatpush1.bf16.msra.mxu0 %v3376
      %3576 = vmatprep.subr.bf16.mxu0 0
      %3577 = vmatpush1.bf16.msra.mxu0 %v3375
      %3578 = vmatprep.subr.bf16.mxu0 0
      %3579 = vmatpush1.bf16.msra.mxu0 %v3374
      %3580 = vmatprep.subr.bf16.mxu0 0
      %3581 = vmatpush1.bf16.msra.mxu0 %v3373
      %3582 = vmatprep.subr.bf16.mxu0 0
      %3583 = vmatpush2.bf16.msra.mxu0 0
      %3584 = vmatprep.subr.bf16.mxu0 0
      %3585 = vmatpush2.bf16.msra.mxu0 0
      %3586 = vmatprep.subr.bf16.mxu0 0
      %3587 = vmatpush2.bf16.msra.mxu0 0
      %3588 = vmatprep.subr.bf16.mxu0 0
      %3589 = vmatpush2.bf16.msra.mxu0 0
      %3590 = vmatprep.subr.bf16.mxu0 0
      %3591 = vmatpush2.bf16.msra.mxu0 0
      %3592 = vmatprep.subr.bf16.mxu0 0
      %3593 = vmatpush2.bf16.msra.mxu0 0
      %3594 = vmatprep.subr.bf16.mxu0 0
      %3595 = vmatpush2.bf16.msra.mxu0 0
      %3596 = vmatprep.subr.bf16.mxu0 0
      %3597 = vmatpush2.bf16.msra.mxu0 0
      %3598 = vmatprep.mubr.bf16.mxu0 0
      %3599 = vmatmul.mubr.bf16.gmra.mxu0 %v3118
      %v3600 = vpop.f32.mrf.mxu0
      %v3601 = vadd.f32 %v3440, %v3600
      %v3602 = vpop.f32.mrf.mxu0
      %v3603 = vpop.f32.mrf.mxu0
      %v3604 = vadd.f32 %v3443, %v3603
      %v3605 = vpop.f32.mrf.mxu0
      %3606 = vmatprep.mubr.bf16.mxu0 0
      %3607 = vmatmul.mubr.bf16.gmra.mxu0 %v3121
      %v3608 = vpop.f32.mrf.mxu0
      %v3609 = vadd.f32 %v3448, %v3608
      %v3610 = vpop.f32.mrf.mxu0
      %v3611 = vpop.f32.mrf.mxu0
      %v3612 = vadd.f32 %v3451, %v3611
      %v3613 = vpop.f32.mrf.mxu0
      %3614 = vmatprep.mubr.bf16.mxu0 0
      %3615 = vmatmul.mubr.bf16.gmra.mxu0 %v3124
      %v3616 = vpop.f32.mrf.mxu0
      %v3617 = vadd.f32 %v3456, %v3616
      %v3618 = vpop.f32.mrf.mxu0
      %v3619 = vpop.f32.mrf.mxu0
      %v3620 = vadd.f32 %v3459, %v3619
      %v3621 = vpop.f32.mrf.mxu0
      %3622 = vmatprep.mubr.bf16.mxu0 0
      %3623 = vmatmul.mubr.bf16.gmra.mxu0 %v3127
      %v3624 = vpop.f32.mrf.mxu0
      %v3625 = vadd.f32 %v3464, %v3624
      %v3626 = vpop.f32.mrf.mxu0
      %v3627 = vpop.f32.mrf.mxu0
      %v3628 = vadd.f32 %v3467, %v3627
      %v3629 = vpop.f32.mrf.mxu0
      %3630 = vmatprep.mubr.bf16.mxu0 0
      %3631 = vmatmul.mubr.bf16.gmra.mxu0 %v3130
      %v3632 = vpop.f32.mrf.mxu0
      %v3633 = vadd.f32 %v3472, %v3632
      %v3634 = vpop.f32.mrf.mxu0
      %v3635 = vpop.f32.mrf.mxu0
      %v3636 = vadd.f32 %v3475, %v3635
      %v3637 = vpop.f32.mrf.mxu0
      %3638 = vmatprep.mubr.bf16.mxu0 0
      %3639 = vmatmul.mubr.bf16.gmra.mxu0 %v3133
      %v3640 = vpop.f32.mrf.mxu0
      %v3641 = vadd.f32 %v3480, %v3640
      %v3642 = vpop.f32.mrf.mxu0
      %v3643 = vpop.f32.mrf.mxu0
      %v3644 = vadd.f32 %v3483, %v3643
      %v3645 = vpop.f32.mrf.mxu0
      %3646 = vmatprep.mubr.bf16.mxu0 0
      %3647 = vmatmul.mubr.bf16.gmra.mxu0 %v3136
      %v3648 = vpop.f32.mrf.mxu0
      %v3649 = vadd.f32 %v3488, %v3648
      %v3650 = vpop.f32.mrf.mxu0
      %v3651 = vpop.f32.mrf.mxu0
      %v3652 = vadd.f32 %v3491, %v3651
      %v3653 = vpop.f32.mrf.mxu0
      %3654 = vmatprep.mubr.bf16.mxu0 0
      %3655 = vmatmul.mubr.bf16.gmra.mxu0 %v3139
      %v3656 = vpop.f32.mrf.mxu0
      %v3657 = vadd.f32 %v3496, %v3656
      %v3658 = vpop.f32.mrf.mxu0
      %v3659 = vpop.f32.mrf.mxu0
      %v3660 = vadd.f32 %v3499, %v3659
      %v3661 = vpop.f32.mrf.mxu0
      %3662 = vmatprep.mubr.bf16.mxu0 0
      %3663 = vmatmul.mubr.bf16.gmra.mxu0 %v3142
      %v3664 = vpop.f32.mrf.mxu0
      %v3665 = vadd.f32 %v3504, %v3664
      %v3666 = vpop.f32.mrf.mxu0
      %v3667 = vpop.f32.mrf.mxu0
      %v3668 = vadd.f32 %v3507, %v3667
      %v3669 = vpop.f32.mrf.mxu0
      %3670 = vmatprep.mubr.bf16.mxu0 0
      %3671 = vmatmul.mubr.bf16.gmra.mxu0 %v3145
      %v3672 = vpop.f32.mrf.mxu0
      %v3673 = vadd.f32 %v3512, %v3672
      %v3674 = vpop.f32.mrf.mxu0
      %v3675 = vpop.f32.mrf.mxu0
      %v3676 = vadd.f32 %v3515, %v3675
      %v3677 = vpop.f32.mrf.mxu0
      %3678 = vmatprep.mubr.bf16.mxu0 0
      %3679 = vmatmul.mubr.bf16.gmra.mxu0 %v3148
      %v3680 = vpop.f32.mrf.mxu0
      %v3681 = vadd.f32 %v3520, %v3680
      %v3682 = vpop.f32.mrf.mxu0
      %v3683 = vpop.f32.mrf.mxu0
      %v3684 = vadd.f32 %v3523, %v3683
      %v3685 = vpop.f32.mrf.mxu0
      %3686 = vmatprep.mubr.bf16.mxu0 0
      %3687 = vmatmul.mubr.bf16.gmra.mxu0 %v3151
      %v3688 = vpop.f32.mrf.mxu0
      %v3689 = vadd.f32 %v3528, %v3688
      %v3690 = vpop.f32.mrf.mxu0
      %v3691 = vpop.f32.mrf.mxu0
      %v3692 = vadd.f32 %v3531, %v3691
      %v3693 = vpop.f32.mrf.mxu0
      %3694 = vmatprep.mubr.bf16.mxu0 0
      %3695 = vmatmul.mubr.bf16.gmra.mxu0 %v3154
      %v3696 = vpop.f32.mrf.mxu0
      %v3697 = vadd.f32 %v3536, %v3696
      %v3698 = vpop.f32.mrf.mxu0
      %v3699 = vpop.f32.mrf.mxu0
      %v3700 = vadd.f32 %v3539, %v3699
      %v3701 = vpop.f32.mrf.mxu0
      %3702 = vmatprep.mubr.bf16.mxu0 0
      %3703 = vmatmul.mubr.bf16.gmra.mxu0 %v3157
      %v3704 = vpop.f32.mrf.mxu0
      %v3705 = vadd.f32 %v3544, %v3704
      %v3706 = vpop.f32.mrf.mxu0
      %v3707 = vpop.f32.mrf.mxu0
      %v3708 = vadd.f32 %v3547, %v3707
      %v3709 = vpop.f32.mrf.mxu0
      %3710 = vmatprep.mubr.bf16.mxu0 0
      %3711 = vmatmul.mubr.bf16.gmra.mxu0 %v3160
      %v3712 = vpop.f32.mrf.mxu0
      %v3713 = vadd.f32 %v3552, %v3712
      %v3714 = vpop.f32.mrf.mxu0
      %v3715 = vpop.f32.mrf.mxu0
      %v3716 = vadd.f32 %v3555, %v3715
      %v3717 = vpop.f32.mrf.mxu0
      %3718 = vmatprep.mubr.bf16.mxu0 0
      %3719 = vmatmul.mubr.bf16.gmra.mxu0 %v3211
      %v3720 = vpop.f32.mrf.mxu0
      %v3721 = vadd.f32 %v3560, %v3720
      %v3722 = vpop.f32.mrf.mxu0
      %v3723 = vpop.f32.mrf.mxu0
      %v3724 = vadd.f32 %v3563, %v3723
      %v3725 = vpop.f32.mrf.mxu0
      %3726 = vdwg.mxu0
      %v3775 = vunpack.c.l.b16 %v3161
      %v3776 = vunpack.c.l.b16 %v3162
      %v3777 = vunpack.c.l.b16 %v3163
      %v3778 = vunpack.c.l.b16 %v3164
      %v3779 = vunpack.c.l.b16 %v3165
      %v3780 = vunpack.c.l.b16 %v3166
      %v3781 = vunpack.c.l.b16 %v3167
      %v3782 = vunpack.c.l.b16 %v3168
      %v3783 = vunpack.c.l.b16 %v3169
      %v3784 = vunpack.c.l.b16 %v3170
      %v3785 = vunpack.c.l.b16 %v3171
      %v3786 = vunpack.c.l.b16 %v3172
      %v3787 = vunpack.c.l.b16 %v3173
      %v3788 = vunpack.c.l.b16 %v3174
      %v3789 = vunpack.c.l.b16 %v3175
      %v3790 = vunpack.c.l.b16 %v3176
      %v3791 = vunpack.c.l.b16 %v3177
      %v3792 = vunpack.c.l.b16 %v3178
      %v3793 = vunpack.c.l.b16 %v3179
      %v3794 = vunpack.c.l.b16 %v3180
      %v3795 = vunpack.c.l.b16 %v3181
      %v3796 = vunpack.c.l.b16 %v3182
      %v3797 = vunpack.c.l.b16 %v3183
      %v3798 = vunpack.c.l.b16 %v3184
      %v3799 = vunpack.c.l.b16 %v3185
      %v3800 = vunpack.c.l.b16 %v3186
      %v3801 = vunpack.c.l.b16 %v3187
      %v3802 = vunpack.c.l.b16 %v3188
      %v3803 = vunpack.c.l.b16 %v3189
      %v3804 = vunpack.c.l.b16 %v3190
      %v3805 = vunpack.c.l.b16 %v3191
      %v3806 = vunpack.c.l.b16 %v3192
      %v3807 = vunpack.c.l.b16 %v3193
      %v3808 = vunpack.c.l.b16 %v3194
      %v3809 = vunpack.c.l.b16 %v3195
      %v3810 = vunpack.c.l.b16 %v3196
      %v3811 = vunpack.c.l.b16 %v3197
      %v3812 = vunpack.c.l.b16 %v3198
      %v3813 = vunpack.c.l.b16 %v3199
      %v3814 = vunpack.c.l.b16 %v3200
      %v3815 = vunpack.c.l.b16 %v3201
      %v3816 = vunpack.c.l.b16 %v3202
      %v3817 = vunpack.c.l.b16 %v3203
      %v3818 = vunpack.c.l.b16 %v3204
      %v3819 = vunpack.c.l.b16 %v3205
      %v3820 = vunpack.c.l.b16 %v3206
      %v3821 = vunpack.c.l.b16 %v3207
      %v3822 = vunpack.c.l.b16 %v3208
      %v3823 = vpack.c.b16 %v3776, %v3775
      %v3824 = vpack.c.b16 %v3778, %v3777
      %v3825 = vpack.c.b16 %v3780, %v3779
      %v3826 = vpack.c.b16 %v3782, %v3781
      %v3827 = vpack.c.b16 %v3784, %v3783
      %v3828 = vpack.c.b16 %v3786, %v3785
      %v3829 = vpack.c.b16 %v3788, %v3787
      %v3830 = vpack.c.b16 %v3790, %v3789
      %v3831 = vpack.c.b16 %v3792, %v3791
      %v3832 = vpack.c.b16 %v3794, %v3793
      %v3833 = vpack.c.b16 %v3796, %v3795
      %v3834 = vpack.c.b16 %v3798, %v3797
      %v3835 = vpack.c.b16 %v3800, %v3799
      %v3836 = vpack.c.b16 %v3802, %v3801
      %v3837 = vpack.c.b16 %v3804, %v3803
      %v3838 = vpack.c.b16 %v3806, %v3805
      %v3839 = vpack.c.b16 %v3808, %v3807
      %v3840 = vpack.c.b16 %v3810, %v3809
      %v3841 = vpack.c.b16 %v3812, %v3811
      %v3842 = vpack.c.b16 %v3814, %v3813
      %v3843 = vpack.c.b16 %v3816, %v3815
      %v3844 = vpack.c.b16 %v3818, %v3817
      %v3845 = vpack.c.b16 %v3820, %v3819
      %v3846 = vpack.c.b16 %v3822, %v3821
      %3871 = vmatprep.subr.bf16.mxu0 0
      %3872 = vmatpush1.bf16.msra.mxu0 %v3830
      %3873 = vmatprep.subr.bf16.mxu0 0
      %3874 = vmatpush1.bf16.msra.mxu0 %v3829
      %3875 = vmatprep.subr.bf16.mxu0 0
      %3876 = vmatpush1.bf16.msra.mxu0 %v3828
      %3877 = vmatprep.subr.bf16.mxu0 0
      %3878 = vmatpush1.bf16.msra.mxu0 %v3827
      %3879 = vmatprep.subr.bf16.mxu0 0
      %3880 = vmatpush1.bf16.msra.mxu0 %v3826
      %3881 = vmatprep.subr.bf16.mxu0 0
      %3882 = vmatpush1.bf16.msra.mxu0 %v3825
      %3883 = vmatprep.subr.bf16.mxu0 0
      %3884 = vmatpush1.bf16.msra.mxu0 %v3824
      %3885 = vmatprep.subr.bf16.mxu0 0
      %3886 = vmatpush1.bf16.msra.mxu0 %v3823
      %3887 = vmatprep.subr.bf16.mxu0 0
      %3888 = vmatpush2.bf16.msra.mxu0 %v3838
      %3889 = vmatprep.subr.bf16.mxu0 0
      %3890 = vmatpush2.bf16.msra.mxu0 %v3837
      %3891 = vmatprep.subr.bf16.mxu0 0
      %3892 = vmatpush2.bf16.msra.mxu0 %v3836
      %3893 = vmatprep.subr.bf16.mxu0 0
      %3894 = vmatpush2.bf16.msra.mxu0 %v3835
      %3895 = vmatprep.subr.bf16.mxu0 0
      %3896 = vmatpush2.bf16.msra.mxu0 %v3834
      %3897 = vmatprep.subr.bf16.mxu0 0
      %3898 = vmatpush2.bf16.msra.mxu0 %v3833
      %3899 = vmatprep.subr.bf16.mxu0 0
      %3900 = vmatpush2.bf16.msra.mxu0 %v3832
      %3901 = vmatprep.subr.bf16.mxu0 0
      %3902 = vmatpush2.bf16.msra.mxu0 %v3831
      %3903 = vmatprep.mubr.bf16.mxu0 %v1804
      %3904 = vmatmul.mubr.bf16.gmra.mxu0 %v1804
      %v3905 = vpop.f32.mrf.mxu0
      %v3906 = vadd.f32 %v3601, %v3905
      %v3907 = vpop.f32.mrf.mxu0
      %v3908 = vpop.f32.mrf.mxu0
      %v3909 = vadd.f32 %v3604, %v3908
      %v3910 = vpop.f32.mrf.mxu0
      %3911 = vmatprep.mubr.bf16.mxu0 %v3117
      %3912 = vmatmul.mubr.bf16.gmra.mxu0 %v3116
      %v3913 = vpop.f32.mrf.mxu0
      %v3914 = vadd.f32 %v3609, %v3913
      %v3915 = vpop.f32.mrf.mxu0
      %v3916 = vpop.f32.mrf.mxu0
      %v3917 = vadd.f32 %v3612, %v3916
      %v3918 = vpop.f32.mrf.mxu0
      %3919 = vmatprep.mubr.bf16.mxu0 %v3120
      %3920 = vmatmul.mubr.bf16.gmra.mxu0 %v3119
      %v3921 = vpop.f32.mrf.mxu0
      %v3922 = vadd.f32 %v3617, %v3921
      %v3923 = vpop.f32.mrf.mxu0
      %v3924 = vpop.f32.mrf.mxu0
      %v3925 = vadd.f32 %v3620, %v3924
      %v3926 = vpop.f32.mrf.mxu0
      %3927 = vmatprep.mubr.bf16.mxu0 %v3123
      %3928 = vmatmul.mubr.bf16.gmra.mxu0 %v3122
      %v3929 = vpop.f32.mrf.mxu0
      %v3930 = vadd.f32 %v3625, %v3929
      %v3931 = vpop.f32.mrf.mxu0
      %v3932 = vpop.f32.mrf.mxu0
      %v3933 = vadd.f32 %v3628, %v3932
      %v3934 = vpop.f32.mrf.mxu0
      %3935 = vmatprep.mubr.bf16.mxu0 %v3126
      %3936 = vmatmul.mubr.bf16.gmra.mxu0 %v3125
      %v3937 = vpop.f32.mrf.mxu0
      %v3938 = vadd.f32 %v3633, %v3937
      %v3939 = vpop.f32.mrf.mxu0
      %v3940 = vpop.f32.mrf.mxu0
      %v3941 = vadd.f32 %v3636, %v3940
      %v3942 = vpop.f32.mrf.mxu0
      %3943 = vmatprep.mubr.bf16.mxu0 %v3129
      %3944 = vmatmul.mubr.bf16.gmra.mxu0 %v3128
      %v3945 = vpop.f32.mrf.mxu0
      %v3946 = vadd.f32 %v3641, %v3945
      %v3947 = vpop.f32.mrf.mxu0
      %v3948 = vpop.f32.mrf.mxu0
      %v3949 = vadd.f32 %v3644, %v3948
      %v3950 = vpop.f32.mrf.mxu0
      %3951 = vmatprep.mubr.bf16.mxu0 %v3132
      %3952 = vmatmul.mubr.bf16.gmra.mxu0 %v3131
      %v3953 = vpop.f32.mrf.mxu0
      %v3954 = vadd.f32 %v3649, %v3953
      %v3955 = vpop.f32.mrf.mxu0
      %v3956 = vpop.f32.mrf.mxu0
      %v3957 = vadd.f32 %v3652, %v3956
      %v3958 = vpop.f32.mrf.mxu0
      %3959 = vmatprep.mubr.bf16.mxu0 %v3135
      %3960 = vmatmul.mubr.bf16.gmra.mxu0 %v3134
      %v3961 = vpop.f32.mrf.mxu0
      %v3962 = vadd.f32 %v3657, %v3961
      %v3963 = vpop.f32.mrf.mxu0
      %v3964 = vpop.f32.mrf.mxu0
      %v3965 = vadd.f32 %v3660, %v3964
      %v3966 = vpop.f32.mrf.mxu0
      %3967 = vmatprep.mubr.bf16.mxu0 %v3138
      %3968 = vmatmul.mubr.bf16.gmra.mxu0 %v3137
      %v3969 = vpop.f32.mrf.mxu0
      %v3970 = vadd.f32 %v3665, %v3969
      %v3971 = vpop.f32.mrf.mxu0
      %v3972 = vpop.f32.mrf.mxu0
      %v3973 = vadd.f32 %v3668, %v3972
      %v3974 = vpop.f32.mrf.mxu0
      %3975 = vmatprep.mubr.bf16.mxu0 %v3141
      %3976 = vmatmul.mubr.bf16.gmra.mxu0 %v3140
      %v3977 = vpop.f32.mrf.mxu0
      %v3978 = vadd.f32 %v3673, %v3977
      %v3979 = vpop.f32.mrf.mxu0
      %v3980 = vpop.f32.mrf.mxu0
      %v3981 = vadd.f32 %v3676, %v3980
      %v3982 = vpop.f32.mrf.mxu0
      %3983 = vmatprep.mubr.bf16.mxu0 %v3144
      %3984 = vmatmul.mubr.bf16.gmra.mxu0 %v3143
      %v3985 = vpop.f32.mrf.mxu0
      %v3986 = vadd.f32 %v3681, %v3985
      %v3987 = vpop.f32.mrf.mxu0
      %v3988 = vpop.f32.mrf.mxu0
      %v3989 = vadd.f32 %v3684, %v3988
      %v3990 = vpop.f32.mrf.mxu0
      %3991 = vmatprep.mubr.bf16.mxu0 %v3147
      %3992 = vmatmul.mubr.bf16.gmra.mxu0 %v3146
      %v3993 = vpop.f32.mrf.mxu0
      %v3994 = vadd.f32 %v3689, %v3993
      %v3995 = vpop.f32.mrf.mxu0
      %v3996 = vpop.f32.mrf.mxu0
      %v3997 = vadd.f32 %v3692, %v3996
      %v3998 = vpop.f32.mrf.mxu0
      %3999 = vmatprep.mubr.bf16.mxu0 %v3150
      %4000 = vmatmul.mubr.bf16.gmra.mxu0 %v3149
      %v4001 = vpop.f32.mrf.mxu0
      %v4002 = vadd.f32 %v3697, %v4001
      %v4003 = vpop.f32.mrf.mxu0
      %v4004 = vpop.f32.mrf.mxu0
      %v4005 = vadd.f32 %v3700, %v4004
      %v4006 = vpop.f32.mrf.mxu0
      %4007 = vmatprep.mubr.bf16.mxu0 %v3153
      %4008 = vmatmul.mubr.bf16.gmra.mxu0 %v3152
      %v4009 = vpop.f32.mrf.mxu0
      %v4010 = vadd.f32 %v3705, %v4009
      %v4011 = vpop.f32.mrf.mxu0
      %v4012 = vpop.f32.mrf.mxu0
      %v4013 = vadd.f32 %v3708, %v4012
      %v4014 = vpop.f32.mrf.mxu0
      %4015 = vmatprep.mubr.bf16.mxu0 %v3156
      %4016 = vmatmul.mubr.bf16.gmra.mxu0 %v3155
      %v4017 = vpop.f32.mrf.mxu0
      %v4018 = vadd.f32 %v3713, %v4017
      %v4019 = vpop.f32.mrf.mxu0
      %v4020 = vpop.f32.mrf.mxu0
      %v4021 = vadd.f32 %v3716, %v4020
      %v4022 = vpop.f32.mrf.mxu0
      %4023 = vmatprep.mubr.bf16.mxu0 %v3159
      %4024 = vmatmul.mubr.bf16.gmra.mxu0 %v3158
      %v4025 = vpop.f32.mrf.mxu0
      %v4026 = vadd.f32 %v3721, %v4025
      %v4027 = vpop.f32.mrf.mxu0
      %v4028 = vpop.f32.mrf.mxu0
      %v4029 = vadd.f32 %v3724, %v4028
      %v4030 = vpop.f32.mrf.mxu0
      %4031 = vdwg.mxu0
      %4032 = vmatprep.subr.bf16.mxu0 0
      %4033 = vmatpush1.bf16.msra.mxu0 %v3846
      %4034 = vmatprep.subr.bf16.mxu0 0
      %4035 = vmatpush1.bf16.msra.mxu0 %v3845
      %4036 = vmatprep.subr.bf16.mxu0 0
      %4037 = vmatpush1.bf16.msra.mxu0 %v3844
      %4038 = vmatprep.subr.bf16.mxu0 0
      %4039 = vmatpush1.bf16.msra.mxu0 %v3843
      %4040 = vmatprep.subr.bf16.mxu0 0
      %4041 = vmatpush1.bf16.msra.mxu0 %v3842
      %4042 = vmatprep.subr.bf16.mxu0 0
      %4043 = vmatpush1.bf16.msra.mxu0 %v3841
      %4044 = vmatprep.subr.bf16.mxu0 0
      %4045 = vmatpush1.bf16.msra.mxu0 %v3840
      %4046 = vmatprep.subr.bf16.mxu0 0
      %4047 = vmatpush1.bf16.msra.mxu0 %v3839
      %4048 = vmatprep.subr.bf16.mxu0 0
      %4049 = vmatpush2.bf16.msra.mxu0 0
      %4050 = vmatprep.subr.bf16.mxu0 0
      %4051 = vmatpush2.bf16.msra.mxu0 0
      %4052 = vmatprep.subr.bf16.mxu0 0
      %4053 = vmatpush2.bf16.msra.mxu0 0
      %4054 = vmatprep.subr.bf16.mxu0 0
      %4055 = vmatpush2.bf16.msra.mxu0 0
      %4056 = vmatprep.subr.bf16.mxu0 0
      %4057 = vmatpush2.bf16.msra.mxu0 0
      %4058 = vmatprep.subr.bf16.mxu0 0
      %4059 = vmatpush2.bf16.msra.mxu0 0
      %4060 = vmatprep.subr.bf16.mxu0 0
      %4061 = vmatpush2.bf16.msra.mxu0 0
      %4062 = vmatprep.subr.bf16.mxu0 0
      %4063 = vmatpush2.bf16.msra.mxu0 0
      %4064 = vmatprep.mubr.bf16.mxu0 0
      %4065 = vmatmul.mubr.bf16.gmra.mxu0 %v1804
      %v4066 = vpop.f32.mrf.mxu0
      %v4067 = vadd.f32 %v3906, %v4066
      %v4068 = vpop.f32.mrf.mxu0
      %v4069 = vpop.f32.mrf.mxu0
      %v4070 = vadd.f32 %v3909, %v4069
      %v4071 = vpop.f32.mrf.mxu0
      %4072 = vmatprep.mubr.bf16.mxu0 0
      %4073 = vmatmul.mubr.bf16.gmra.mxu0 %v3118
      %v4074 = vpop.f32.mrf.mxu0
      %v4075 = vadd.f32 %v3914, %v4074
      %v4076 = vpop.f32.mrf.mxu0
      %v4077 = vpop.f32.mrf.mxu0
      %v4078 = vadd.f32 %v3917, %v4077
      %v4079 = vpop.f32.mrf.mxu0
      %4080 = vmatprep.mubr.bf16.mxu0 0
      %4081 = vmatmul.mubr.bf16.gmra.mxu0 %v3121
      %v4082 = vpop.f32.mrf.mxu0
      %v4083 = vadd.f32 %v3922, %v4082
      %v4084 = vpop.f32.mrf.mxu0
      %v4085 = vpop.f32.mrf.mxu0
      %v4086 = vadd.f32 %v3925, %v4085
      %v4087 = vpop.f32.mrf.mxu0
      %4088 = vmatprep.mubr.bf16.mxu0 0
      %4089 = vmatmul.mubr.bf16.gmra.mxu0 %v3124
      %v4090 = vpop.f32.mrf.mxu0
      %v4091 = vadd.f32 %v3930, %v4090
      %v4092 = vpop.f32.mrf.mxu0
      %v4093 = vpop.f32.mrf.mxu0
      %v4094 = vadd.f32 %v3933, %v4093
      %v4095 = vpop.f32.mrf.mxu0
      %4096 = vmatprep.mubr.bf16.mxu0 0
      %4097 = vmatmul.mubr.bf16.gmra.mxu0 %v3127
      %v4098 = vpop.f32.mrf.mxu0
      %v4099 = vadd.f32 %v3938, %v4098
      %v4100 = vpop.f32.mrf.mxu0
      %v4101 = vpop.f32.mrf.mxu0
      %v4102 = vadd.f32 %v3941, %v4101
      %v4103 = vpop.f32.mrf.mxu0
      %4104 = vmatprep.mubr.bf16.mxu0 0
      %4105 = vmatmul.mubr.bf16.gmra.mxu0 %v3130
      %v4106 = vpop.f32.mrf.mxu0
      %v4107 = vadd.f32 %v3946, %v4106
      %v4108 = vpop.f32.mrf.mxu0
      %v4109 = vpop.f32.mrf.mxu0
      %v4110 = vadd.f32 %v3949, %v4109
      %v4111 = vpop.f32.mrf.mxu0
      %4112 = vmatprep.mubr.bf16.mxu0 0
      %4113 = vmatmul.mubr.bf16.gmra.mxu0 %v3133
      %v4114 = vpop.f32.mrf.mxu0
      %v4115 = vadd.f32 %v3954, %v4114
      %v4116 = vpop.f32.mrf.mxu0
      %v4117 = vpop.f32.mrf.mxu0
      %v4118 = vadd.f32 %v3957, %v4117
      %v4119 = vpop.f32.mrf.mxu0
      %4120 = vmatprep.mubr.bf16.mxu0 0
      %4121 = vmatmul.mubr.bf16.gmra.mxu0 %v3136
      %v4122 = vpop.f32.mrf.mxu0
      %v4123 = vadd.f32 %v3962, %v4122
      %v4124 = vpop.f32.mrf.mxu0
      %v4125 = vpop.f32.mrf.mxu0
      %v4126 = vadd.f32 %v3965, %v4125
      %v4127 = vpop.f32.mrf.mxu0
      %4128 = vmatprep.mubr.bf16.mxu0 0
      %4129 = vmatmul.mubr.bf16.gmra.mxu0 %v3139
      %v4130 = vpop.f32.mrf.mxu0
      %v4131 = vadd.f32 %v3970, %v4130
      %v4132 = vpop.f32.mrf.mxu0
      %v4133 = vpop.f32.mrf.mxu0
      %v4134 = vadd.f32 %v3973, %v4133
      %v4135 = vpop.f32.mrf.mxu0
      %4136 = vmatprep.mubr.bf16.mxu0 0
      %4137 = vmatmul.mubr.bf16.gmra.mxu0 %v3142
      %v4138 = vpop.f32.mrf.mxu0
      %v4139 = vadd.f32 %v3978, %v4138
      %v4140 = vpop.f32.mrf.mxu0
      %v4141 = vpop.f32.mrf.mxu0
      %v4142 = vadd.f32 %v3981, %v4141
      %v4143 = vpop.f32.mrf.mxu0
      %4144 = vmatprep.mubr.bf16.mxu0 0
      %4145 = vmatmul.mubr.bf16.gmra.mxu0 %v3145
      %v4146 = vpop.f32.mrf.mxu0
      %v4147 = vadd.f32 %v3986, %v4146
      %v4148 = vpop.f32.mrf.mxu0
      %v4149 = vpop.f32.mrf.mxu0
      %v4150 = vadd.f32 %v3989, %v4149
      %v4151 = vpop.f32.mrf.mxu0
      %4152 = vmatprep.mubr.bf16.mxu0 0
      %4153 = vmatmul.mubr.bf16.gmra.mxu0 %v3148
      %v4154 = vpop.f32.mrf.mxu0
      %v4155 = vadd.f32 %v3994, %v4154
      %v4156 = vpop.f32.mrf.mxu0
      %v4157 = vpop.f32.mrf.mxu0
      %v4158 = vadd.f32 %v3997, %v4157
      %v4159 = vpop.f32.mrf.mxu0
      %4160 = vmatprep.mubr.bf16.mxu0 0
      %4161 = vmatmul.mubr.bf16.gmra.mxu0 %v3151
      %v4162 = vpop.f32.mrf.mxu0
      %v4163 = vadd.f32 %v4002, %v4162
      %v4164 = vpop.f32.mrf.mxu0
      %v4165 = vpop.f32.mrf.mxu0
      %v4166 = vadd.f32 %v4005, %v4165
      %v4167 = vpop.f32.mrf.mxu0
      %4168 = vmatprep.mubr.bf16.mxu0 0
      %4169 = vmatmul.mubr.bf16.gmra.mxu0 %v3154
      %v4170 = vpop.f32.mrf.mxu0
      %v4171 = vadd.f32 %v4010, %v4170
      %v4172 = vpop.f32.mrf.mxu0
      %v4173 = vpop.f32.mrf.mxu0
      %v4174 = vadd.f32 %v4013, %v4173
      %v4175 = vpop.f32.mrf.mxu0
      %4176 = vmatprep.mubr.bf16.mxu0 0
      %4177 = vmatmul.mubr.bf16.gmra.mxu0 %v3157
      %v4178 = vpop.f32.mrf.mxu0
      %v4179 = vadd.f32 %v4018, %v4178
      %v4180 = vpop.f32.mrf.mxu0
      %v4181 = vpop.f32.mrf.mxu0
      %v4182 = vadd.f32 %v4021, %v4181
      %v4183 = vpop.f32.mrf.mxu0
      %4184 = vmatprep.mubr.bf16.mxu0 0
      %4185 = vmatmul.mubr.bf16.gmra.mxu0 %v3160
      %v4186 = vpop.f32.mrf.mxu0
      %v4187 = vadd.f32 %v4026, %v4186
      %v4188 = vpop.f32.mrf.mxu0
      %v4189 = vpop.f32.mrf.mxu0
      %v4190 = vadd.f32 %v4029, %v4189
      %v4191 = vpop.f32.mrf.mxu0
      %4192 = vdwg.mxu0
      %s4193 = scalar_lea.vmem %s5, 384
      %v4194 = vld [vmem:[%s4193] sm:$0xf]
      %v4195 = vld [vmem:[%s4193 + $0x4] sm:$0xf]
      %v4196 = vld [vmem:[%s4193 + $0x8] sm:$0xf]
      %v4197 = vld [vmem:[%s4193 + $0xc] sm:$0xf]
      %v4198 = vld [vmem:[%s4193 + $0x10] sm:$0xf]
      %v4199 = vld [vmem:[%s4193 + $0x14] sm:$0xf]
      %v4200 = vld [vmem:[%s4193 + $0x18] sm:$0xf]
      %v4201 = vld [vmem:[%s4193 + $0x1c] sm:$0xf]
      %v4202 = vld [vmem:[%s4193 + $0x20] sm:$0xf]
      %v4203 = vld [vmem:[%s4193 + $0x24] sm:$0xf]
      %v4204 = vld [vmem:[%s4193 + $0x28] sm:$0xf]
      %v4205 = vld [vmem:[%s4193 + $0x2c] sm:$0xf]
      %v4206 = vld [vmem:[%s4193 + $0x30] sm:$0xf]
      %v4207 = vld [vmem:[%s4193 + $0x34] sm:$0xf]
      %v4208 = vld [vmem:[%s4193 + $0x38] sm:$0xf]
      %v4209 = vld [vmem:[%s4193 + $0x3c] sm:$0xf]
      %v4210 = vld [vmem:[%s4193 + $0x40] sm:$0xf]
      %v4211 = vld [vmem:[%s4193 + $0x44] sm:$0xf]
      %v4212 = vld [vmem:[%s4193 + $0x48] sm:$0xf]
      %v4213 = vld [vmem:[%s4193 + $0x4c] sm:$0xf]
      %v4214 = vld [vmem:[%s4193 + $0x50] sm:$0xf]
      %v4215 = vld [vmem:[%s4193 + $0x54] sm:$0xf]
      %v4216 = vld [vmem:[%s4193 + $0x58] sm:$0xf]
      %v4217 = vld [vmem:[%s4193 + $0x5c] sm:$0xf]
      %v4218 = vld [vmem:[%s4193 + $0x60] sm:$0xf]
      %v4219 = vld [vmem:[%s4193 + $0x64] sm:$0xf]
      %v4220 = vld [vmem:[%s4193 + $0x68] sm:$0xf]
      %v4221 = vld [vmem:[%s4193 + $0x6c] sm:$0xf]
      %v4222 = vld [vmem:[%s4193 + $0x70] sm:$0xf]
      %v4223 = vld [vmem:[%s4193 + $0x74] sm:$0xf]
      %v4224 = vld [vmem:[%s4193 + $0x78] sm:$0xf]
      %v4225 = vld [vmem:[%s4193 + $0x7c] sm:$0xf]
      %v4226 = vld [vmem:[%s4193 + $0x80] sm:$0xf]
      %v4227 = vld [vmem:[%s4193 + $0x84] sm:$0xf]
      %v4228 = vld [vmem:[%s4193 + $0x88] sm:$0xf]
      %v4229 = vld [vmem:[%s4193 + $0x8c] sm:$0xf]
      %v4230 = vld [vmem:[%s4193 + $0x90] sm:$0xf]
      %v4231 = vld [vmem:[%s4193 + $0x94] sm:$0xf]
      %v4232 = vld [vmem:[%s4193 + $0x98] sm:$0xf]
      %v4233 = vld [vmem:[%s4193 + $0x9c] sm:$0xf]
      %v4234 = vld [vmem:[%s4193 + $0xa0] sm:$0xf]
      %v4235 = vld [vmem:[%s4193 + $0xa4] sm:$0xf]
      %v4236 = vld [vmem:[%s4193 + $0xa8] sm:$0xf]
      %v4237 = vld [vmem:[%s4193 + $0xac] sm:$0xf]
      %v4238 = vld [vmem:[%s4193 + $0xb0] sm:$0xf]
      %v4239 = vld [vmem:[%s4193 + $0xb4] sm:$0xf]
      %v4240 = vld [vmem:[%s4193 + $0xb8] sm:$0xf]
      %v4241 = vld [vmem:[%s4193 + $0xbc] sm:$0xf]
      %v4290 = vunpack.c.l.b16 %v4194
      %v4291 = vunpack.c.l.b16 %v4195
      %v4292 = vunpack.c.l.b16 %v4196
      %v4293 = vunpack.c.l.b16 %v4197
      %v4294 = vunpack.c.l.b16 %v4198
      %v4295 = vunpack.c.l.b16 %v4199
      %v4296 = vunpack.c.l.b16 %v4200
      %v4297 = vunpack.c.l.b16 %v4201
      %v4298 = vunpack.c.l.b16 %v4202
      %v4299 = vunpack.c.l.b16 %v4203
      %v4300 = vunpack.c.l.b16 %v4204
      %v4301 = vunpack.c.l.b16 %v4205
      %v4302 = vunpack.c.l.b16 %v4206
      %v4303 = vunpack.c.l.b16 %v4207
      %v4304 = vunpack.c.l.b16 %v4208
      %v4305 = vunpack.c.l.b16 %v4209
      %v4306 = vunpack.c.l.b16 %v4210
      %v4307 = vunpack.c.l.b16 %v4211
      %v4308 = vunpack.c.l.b16 %v4212
      %v4309 = vunpack.c.l.b16 %v4213
      %v4310 = vunpack.c.l.b16 %v4214
      %v4311 = vunpack.c.l.b16 %v4215
      %v4312 = vunpack.c.l.b16 %v4216
      %v4313 = vunpack.c.l.b16 %v4217
      %v4314 = vunpack.c.l.b16 %v4218
      %v4315 = vunpack.c.l.b16 %v4219
      %v4316 = vunpack.c.l.b16 %v4220
      %v4317 = vunpack.c.l.b16 %v4221
      %v4318 = vunpack.c.l.b16 %v4222
      %v4319 = vunpack.c.l.b16 %v4223
      %v4320 = vunpack.c.l.b16 %v4224
      %v4321 = vunpack.c.l.b16 %v4225
      %v4322 = vunpack.c.l.b16 %v4226
      %v4323 = vunpack.c.l.b16 %v4227
      %v4324 = vunpack.c.l.b16 %v4228
      %v4325 = vunpack.c.l.b16 %v4229
      %v4326 = vunpack.c.l.b16 %v4230
      %v4327 = vunpack.c.l.b16 %v4231
      %v4328 = vunpack.c.l.b16 %v4232
      %v4329 = vunpack.c.l.b16 %v4233
      %v4330 = vunpack.c.l.b16 %v4234
      %v4331 = vunpack.c.l.b16 %v4235
      %v4332 = vunpack.c.l.b16 %v4236
      %v4333 = vunpack.c.l.b16 %v4237
      %v4334 = vunpack.c.l.b16 %v4238
      %v4335 = vunpack.c.l.b16 %v4239
      %v4336 = vunpack.c.l.b16 %v4240
      %v4337 = vunpack.c.l.b16 %v4241
      %v4338 = vpack.c.b16 %v4291, %v4290
      %v4339 = vpack.c.b16 %v4293, %v4292
      %v4340 = vpack.c.b16 %v4295, %v4294
      %v4341 = vpack.c.b16 %v4297, %v4296
      %v4342 = vpack.c.b16 %v4299, %v4298
      %v4343 = vpack.c.b16 %v4301, %v4300
      %v4344 = vpack.c.b16 %v4303, %v4302
      %v4345 = vpack.c.b16 %v4305, %v4304
      %v4346 = vpack.c.b16 %v4307, %v4306
      %v4347 = vpack.c.b16 %v4309, %v4308
      %v4348 = vpack.c.b16 %v4311, %v4310
      %v4349 = vpack.c.b16 %v4313, %v4312
      %v4350 = vpack.c.b16 %v4315, %v4314
      %v4351 = vpack.c.b16 %v4317, %v4316
      %v4352 = vpack.c.b16 %v4319, %v4318
      %v4353 = vpack.c.b16 %v4321, %v4320
      %v4354 = vpack.c.b16 %v4323, %v4322
      %v4355 = vpack.c.b16 %v4325, %v4324
      %v4356 = vpack.c.b16 %v4327, %v4326
      %v4357 = vpack.c.b16 %v4329, %v4328
      %v4358 = vpack.c.b16 %v4331, %v4330
      %v4359 = vpack.c.b16 %v4333, %v4332
      %v4360 = vpack.c.b16 %v4335, %v4334
      %v4361 = vpack.c.b16 %v4337, %v4336
      %4386 = vmatprep.subr.bf16.mxu0 0
      %4387 = vmatpush1.bf16.msra.mxu0 %v4345
      %4388 = vmatprep.subr.bf16.mxu0 0
      %4389 = vmatpush1.bf16.msra.mxu0 %v4344
      %4390 = vmatprep.subr.bf16.mxu0 0
      %4391 = vmatpush1.bf16.msra.mxu0 %v4343
      %4392 = vmatprep.subr.bf16.mxu0 0
      %4393 = vmatpush1.bf16.msra.mxu0 %v4342
      %4394 = vmatprep.subr.bf16.mxu0 0
      %4395 = vmatpush1.bf16.msra.mxu0 %v4341
      %4396 = vmatprep.subr.bf16.mxu0 0
      %4397 = vmatpush1.bf16.msra.mxu0 %v4340
      %4398 = vmatprep.subr.bf16.mxu0 0
      %4399 = vmatpush1.bf16.msra.mxu0 %v4339
      %4400 = vmatprep.subr.bf16.mxu0 0
      %4401 = vmatpush1.bf16.msra.mxu0 %v4338
      %4402 = vmatprep.subr.bf16.mxu0 0
      %4403 = vmatpush2.bf16.msra.mxu0 %v4353
      %4404 = vmatprep.subr.bf16.mxu0 0
      %4405 = vmatpush2.bf16.msra.mxu0 %v4352
      %4406 = vmatprep.subr.bf16.mxu0 0
      %4407 = vmatpush2.bf16.msra.mxu0 %v4351
      %4408 = vmatprep.subr.bf16.mxu0 0
      %4409 = vmatpush2.bf16.msra.mxu0 %v4350
      %4410 = vmatprep.subr.bf16.mxu0 0
      %4411 = vmatpush2.bf16.msra.mxu0 %v4349
      %4412 = vmatprep.subr.bf16.mxu0 0
      %4413 = vmatpush2.bf16.msra.mxu0 %v4348
      %4414 = vmatprep.subr.bf16.mxu0 0
      %4415 = vmatpush2.bf16.msra.mxu0 %v4347
      %4416 = vmatprep.subr.bf16.mxu0 0
      %4417 = vmatpush2.bf16.msra.mxu0 %v4346
      %4418 = vmatprep.mubr.bf16.mxu0 %v3120
      %4419 = vmatmul.mubr.bf16.gmra.mxu0 %v3119
      %v4420 = vpop.f32.mrf.mxu0
      %v4421 = vadd.f32 0.0, %v4420
      %v4422 = vpop.f32.mrf.mxu0
      %v4423 = vpop.f32.mrf.mxu0
      %v4424 = vadd.f32 0.0, %v4423
      %v4425 = vpop.f32.mrf.mxu0
      %4426 = vmatprep.mubr.bf16.mxu0 %v3123
      %4427 = vmatmul.mubr.bf16.gmra.mxu0 %v3122
      %v4428 = vpop.f32.mrf.mxu0
      %v4429 = vadd.f32 0.0, %v4428
      %v4430 = vpop.f32.mrf.mxu0
      %v4431 = vpop.f32.mrf.mxu0
      %v4432 = vadd.f32 0.0, %v4431
      %v4433 = vpop.f32.mrf.mxu0
      %4434 = vmatprep.mubr.bf16.mxu0 %v3126
      %4435 = vmatmul.mubr.bf16.gmra.mxu0 %v3125
      %v4436 = vpop.f32.mrf.mxu0
      %v4437 = vadd.f32 0.0, %v4436
      %v4438 = vpop.f32.mrf.mxu0
      %v4439 = vpop.f32.mrf.mxu0
      %v4440 = vadd.f32 0.0, %v4439
      %v4441 = vpop.f32.mrf.mxu0
      %4442 = vmatprep.mubr.bf16.mxu0 %v3129
      %4443 = vmatmul.mubr.bf16.gmra.mxu0 %v3128
      %v4444 = vpop.f32.mrf.mxu0
      %v4445 = vadd.f32 0.0, %v4444
      %v4446 = vpop.f32.mrf.mxu0
      %v4447 = vpop.f32.mrf.mxu0
      %v4448 = vadd.f32 0.0, %v4447
      %v4449 = vpop.f32.mrf.mxu0
      %4450 = vmatprep.mubr.bf16.mxu0 %v3132
      %4451 = vmatmul.mubr.bf16.gmra.mxu0 %v3131
      %v4452 = vpop.f32.mrf.mxu0
      %v4453 = vadd.f32 0.0, %v4452
      %v4454 = vpop.f32.mrf.mxu0
      %v4455 = vpop.f32.mrf.mxu0
      %v4456 = vadd.f32 0.0, %v4455
      %v4457 = vpop.f32.mrf.mxu0
      %4458 = vmatprep.mubr.bf16.mxu0 %v3135
      %4459 = vmatmul.mubr.bf16.gmra.mxu0 %v3134
      %v4460 = vpop.f32.mrf.mxu0
      %v4461 = vadd.f32 0.0, %v4460
      %v4462 = vpop.f32.mrf.mxu0
      %v4463 = vpop.f32.mrf.mxu0
      %v4464 = vadd.f32 0.0, %v4463
      %v4465 = vpop.f32.mrf.mxu0
      %4466 = vmatprep.mubr.bf16.mxu0 %v3138
      %4467 = vmatmul.mubr.bf16.gmra.mxu0 %v3137
      %v4468 = vpop.f32.mrf.mxu0
      %v4469 = vadd.f32 0.0, %v4468
      %v4470 = vpop.f32.mrf.mxu0
      %v4471 = vpop.f32.mrf.mxu0
      %v4472 = vadd.f32 0.0, %v4471
      %v4473 = vpop.f32.mrf.mxu0
      %4474 = vmatprep.mubr.bf16.mxu0 %v3141
      %4475 = vmatmul.mubr.bf16.gmra.mxu0 %v3140
      %v4476 = vpop.f32.mrf.mxu0
      %v4477 = vadd.f32 0.0, %v4476
      %v4478 = vpop.f32.mrf.mxu0
      %v4479 = vpop.f32.mrf.mxu0
      %v4480 = vadd.f32 0.0, %v4479
      %v4481 = vpop.f32.mrf.mxu0
      %4482 = vmatprep.mubr.bf16.mxu0 %v3144
      %4483 = vmatmul.mubr.bf16.gmra.mxu0 %v3143
      %v4484 = vpop.f32.mrf.mxu0
      %v4485 = vadd.f32 0.0, %v4484
      %v4486 = vpop.f32.mrf.mxu0
      %v4487 = vpop.f32.mrf.mxu0
      %v4488 = vadd.f32 0.0, %v4487
      %v4489 = vpop.f32.mrf.mxu0
      %4490 = vmatprep.mubr.bf16.mxu0 %v3147
      %4491 = vmatmul.mubr.bf16.gmra.mxu0 %v3146
      %v4492 = vpop.f32.mrf.mxu0
      %v4493 = vadd.f32 0.0, %v4492
      %v4494 = vpop.f32.mrf.mxu0
      %v4495 = vpop.f32.mrf.mxu0
      %v4496 = vadd.f32 0.0, %v4495
      %v4497 = vpop.f32.mrf.mxu0
      %4498 = vmatprep.mubr.bf16.mxu0 %v3150
      %4499 = vmatmul.mubr.bf16.gmra.mxu0 %v3149
      %v4500 = vpop.f32.mrf.mxu0
      %v4501 = vadd.f32 0.0, %v4500
      %v4502 = vpop.f32.mrf.mxu0
      %v4503 = vpop.f32.mrf.mxu0
      %v4504 = vadd.f32 0.0, %v4503
      %v4505 = vpop.f32.mrf.mxu0
      %4506 = vmatprep.mubr.bf16.mxu0 %v3153
      %4507 = vmatmul.mubr.bf16.gmra.mxu0 %v3152
      %v4508 = vpop.f32.mrf.mxu0
      %v4509 = vadd.f32 0.0, %v4508
      %v4510 = vpop.f32.mrf.mxu0
      %v4511 = vpop.f32.mrf.mxu0
      %v4512 = vadd.f32 0.0, %v4511
      %v4513 = vpop.f32.mrf.mxu0
      %4514 = vmatprep.mubr.bf16.mxu0 %v3156
      %4515 = vmatmul.mubr.bf16.gmra.mxu0 %v3155
      %v4516 = vpop.f32.mrf.mxu0
      %v4517 = vadd.f32 0.0, %v4516
      %v4518 = vpop.f32.mrf.mxu0
      %v4519 = vpop.f32.mrf.mxu0
      %v4520 = vadd.f32 0.0, %v4519
      %v4521 = vpop.f32.mrf.mxu0
      %4522 = vmatprep.mubr.bf16.mxu0 %v3159
      %4523 = vmatmul.mubr.bf16.gmra.mxu0 %v3158
      %v4524 = vpop.f32.mrf.mxu0
      %v4525 = vadd.f32 0.0, %v4524
      %v4526 = vpop.f32.mrf.mxu0
      %v4527 = vpop.f32.mrf.mxu0
      %v4528 = vadd.f32 0.0, %v4527
      %v4529 = vpop.f32.mrf.mxu0
      %4530 = vmatprep.mubr.bf16.mxu0 %v3210
      %4531 = vmatmul.mubr.bf16.gmra.mxu0 %v3209
      %v4532 = vpop.f32.mrf.mxu0
      %v4533 = vadd.f32 0.0, %v4532
      %v4534 = vpop.f32.mrf.mxu0
      %v4535 = vpop.f32.mrf.mxu0
      %v4536 = vadd.f32 0.0, %v4535
      %v4537 = vpop.f32.mrf.mxu0
      %4538 = vmatprep.mubr.bf16.mxu0 %v1804
      %4539 = vmatmul.mubr.bf16.gmra.mxu0 %v1804
      %v4540 = vpop.f32.mrf.mxu0
      %v4541 = vadd.f32 0.0, %v4540
      %v4542 = vpop.f32.mrf.mxu0
      %v4543 = vpop.f32.mrf.mxu0
      %v4544 = vadd.f32 0.0, %v4543
      %v4545 = vpop.f32.mrf.mxu0
      %4546 = vdwg.mxu0
      %4547 = vmatprep.subr.bf16.mxu0 0
      %4548 = vmatpush1.bf16.msra.mxu0 %v4361
      %4549 = vmatprep.subr.bf16.mxu0 0
      %4550 = vmatpush1.bf16.msra.mxu0 %v4360
      %4551 = vmatprep.subr.bf16.mxu0 0
      %4552 = vmatpush1.bf16.msra.mxu0 %v4359
      %4553 = vmatprep.subr.bf16.mxu0 0
      %4554 = vmatpush1.bf16.msra.mxu0 %v4358
      %4555 = vmatprep.subr.bf16.mxu0 0
      %4556 = vmatpush1.bf16.msra.mxu0 %v4357
      %4557 = vmatprep.subr.bf16.mxu0 0
      %4558 = vmatpush1.bf16.msra.mxu0 %v4356
      %4559 = vmatprep.subr.bf16.mxu0 0
      %4560 = vmatpush1.bf16.msra.mxu0 %v4355
      %4561 = vmatprep.subr.bf16.mxu0 0
      %4562 = vmatpush1.bf16.msra.mxu0 %v4354
      %4563 = vmatprep.subr.bf16.mxu0 0
      %4564 = vmatpush2.bf16.msra.mxu0 0
      %4565 = vmatprep.subr.bf16.mxu0 0
      %4566 = vmatpush2.bf16.msra.mxu0 0
      %4567 = vmatprep.subr.bf16.mxu0 0
      %4568 = vmatpush2.bf16.msra.mxu0 0
      %4569 = vmatprep.subr.bf16.mxu0 0
      %4570 = vmatpush2.bf16.msra.mxu0 0
      %4571 = vmatprep.subr.bf16.mxu0 0
      %4572 = vmatpush2.bf16.msra.mxu0 0
      %4573 = vmatprep.subr.bf16.mxu0 0
      %4574 = vmatpush2.bf16.msra.mxu0 0
      %4575 = vmatprep.subr.bf16.mxu0 0
      %4576 = vmatpush2.bf16.msra.mxu0 0
      %4577 = vmatprep.subr.bf16.mxu0 0
      %4578 = vmatpush2.bf16.msra.mxu0 0
      %4579 = vmatprep.mubr.bf16.mxu0 0
      %4580 = vmatmul.mubr.bf16.gmra.mxu0 %v3121
      %v4581 = vpop.f32.mrf.mxu0
      %v4582 = vadd.f32 %v4421, %v4581
      %v4583 = vpop.f32.mrf.mxu0
      %v4584 = vpop.f32.mrf.mxu0
      %v4585 = vadd.f32 %v4424, %v4584
      %v4586 = vpop.f32.mrf.mxu0
      %4587 = vmatprep.mubr.bf16.mxu0 0
      %4588 = vmatmul.mubr.bf16.gmra.mxu0 %v3124
      %v4589 = vpop.f32.mrf.mxu0
      %v4590 = vadd.f32 %v4429, %v4589
      %v4591 = vpop.f32.mrf.mxu0
      %v4592 = vpop.f32.mrf.mxu0
      %v4593 = vadd.f32 %v4432, %v4592
      %v4594 = vpop.f32.mrf.mxu0
      %4595 = vmatprep.mubr.bf16.mxu0 0
      %4596 = vmatmul.mubr.bf16.gmra.mxu0 %v3127
      %v4597 = vpop.f32.mrf.mxu0
      %v4598 = vadd.f32 %v4437, %v4597
      %v4599 = vpop.f32.mrf.mxu0
      %v4600 = vpop.f32.mrf.mxu0
      %v4601 = vadd.f32 %v4440, %v4600
      %v4602 = vpop.f32.mrf.mxu0
      %4603 = vmatprep.mubr.bf16.mxu0 0
      %4604 = vmatmul.mubr.bf16.gmra.mxu0 %v3130
      %v4605 = vpop.f32.mrf.mxu0
      %v4606 = vadd.f32 %v4445, %v4605
      %v4607 = vpop.f32.mrf.mxu0
      %v4608 = vpop.f32.mrf.mxu0
      %v4609 = vadd.f32 %v4448, %v4608
      %v4610 = vpop.f32.mrf.mxu0
      %4611 = vmatprep.mubr.bf16.mxu0 0
      %4612 = vmatmul.mubr.bf16.gmra.mxu0 %v3133
      %v4613 = vpop.f32.mrf.mxu0
      %v4614 = vadd.f32 %v4453, %v4613
      %v4615 = vpop.f32.mrf.mxu0
      %v4616 = vpop.f32.mrf.mxu0
      %v4617 = vadd.f32 %v4456, %v4616
      %v4618 = vpop.f32.mrf.mxu0
      %4619 = vmatprep.mubr.bf16.mxu0 0
      %4620 = vmatmul.mubr.bf16.gmra.mxu0 %v3136
      %v4621 = vpop.f32.mrf.mxu0
      %v4622 = vadd.f32 %v4461, %v4621
      %v4623 = vpop.f32.mrf.mxu0
      %v4624 = vpop.f32.mrf.mxu0
      %v4625 = vadd.f32 %v4464, %v4624
      %v4626 = vpop.f32.mrf.mxu0
      %4627 = vmatprep.mubr.bf16.mxu0 0
      %4628 = vmatmul.mubr.bf16.gmra.mxu0 %v3139
      %v4629 = vpop.f32.mrf.mxu0
      %v4630 = vadd.f32 %v4469, %v4629
      %v4631 = vpop.f32.mrf.mxu0
      %v4632 = vpop.f32.mrf.mxu0
      %v4633 = vadd.f32 %v4472, %v4632
      %v4634 = vpop.f32.mrf.mxu0
      %4635 = vmatprep.mubr.bf16.mxu0 0
      %4636 = vmatmul.mubr.bf16.gmra.mxu0 %v3142
      %v4637 = vpop.f32.mrf.mxu0
      %v4638 = vadd.f32 %v4477, %v4637
      %v4639 = vpop.f32.mrf.mxu0
      %v4640 = vpop.f32.mrf.mxu0
      %v4641 = vadd.f32 %v4480, %v4640
      %v4642 = vpop.f32.mrf.mxu0
      %4643 = vmatprep.mubr.bf16.mxu0 0
      %4644 = vmatmul.mubr.bf16.gmra.mxu0 %v3145
      %v4645 = vpop.f32.mrf.mxu0
      %v4646 = vadd.f32 %v4485, %v4645
      %v4647 = vpop.f32.mrf.mxu0
      %v4648 = vpop.f32.mrf.mxu0
      %v4649 = vadd.f32 %v4488, %v4648
      %v4650 = vpop.f32.mrf.mxu0
      %4651 = vmatprep.mubr.bf16.mxu0 0
      %4652 = vmatmul.mubr.bf16.gmra.mxu0 %v3148
      %v4653 = vpop.f32.mrf.mxu0
      %v4654 = vadd.f32 %v4493, %v4653
      %v4655 = vpop.f32.mrf.mxu0
      %v4656 = vpop.f32.mrf.mxu0
      %v4657 = vadd.f32 %v4496, %v4656
      %v4658 = vpop.f32.mrf.mxu0
      %4659 = vmatprep.mubr.bf16.mxu0 0
      %4660 = vmatmul.mubr.bf16.gmra.mxu0 %v3151
      %v4661 = vpop.f32.mrf.mxu0
      %v4662 = vadd.f32 %v4501, %v4661
      %v4663 = vpop.f32.mrf.mxu0
      %v4664 = vpop.f32.mrf.mxu0
      %v4665 = vadd.f32 %v4504, %v4664
      %v4666 = vpop.f32.mrf.mxu0
      %4667 = vmatprep.mubr.bf16.mxu0 0
      %4668 = vmatmul.mubr.bf16.gmra.mxu0 %v3154
      %v4669 = vpop.f32.mrf.mxu0
      %v4670 = vadd.f32 %v4509, %v4669
      %v4671 = vpop.f32.mrf.mxu0
      %v4672 = vpop.f32.mrf.mxu0
      %v4673 = vadd.f32 %v4512, %v4672
      %v4674 = vpop.f32.mrf.mxu0
      %4675 = vmatprep.mubr.bf16.mxu0 0
      %4676 = vmatmul.mubr.bf16.gmra.mxu0 %v3157
      %v4677 = vpop.f32.mrf.mxu0
      %v4678 = vadd.f32 %v4517, %v4677
      %v4679 = vpop.f32.mrf.mxu0
      %v4680 = vpop.f32.mrf.mxu0
      %v4681 = vadd.f32 %v4520, %v4680
      %v4682 = vpop.f32.mrf.mxu0
      %4683 = vmatprep.mubr.bf16.mxu0 0
      %4684 = vmatmul.mubr.bf16.gmra.mxu0 %v3160
      %v4685 = vpop.f32.mrf.mxu0
      %v4686 = vadd.f32 %v4525, %v4685
      %v4687 = vpop.f32.mrf.mxu0
      %v4688 = vpop.f32.mrf.mxu0
      %v4689 = vadd.f32 %v4528, %v4688
      %v4690 = vpop.f32.mrf.mxu0
      %4691 = vmatprep.mubr.bf16.mxu0 0
      %4692 = vmatmul.mubr.bf16.gmra.mxu0 %v3211
      %v4693 = vpop.f32.mrf.mxu0
      %v4694 = vadd.f32 %v4533, %v4693
      %v4695 = vpop.f32.mrf.mxu0
      %v4696 = vpop.f32.mrf.mxu0
      %v4697 = vadd.f32 %v4536, %v4696
      %v4698 = vpop.f32.mrf.mxu0
      %4699 = vmatprep.mubr.bf16.mxu0 0
      %4700 = vmatmul.mubr.bf16.gmra.mxu0 %v1804
      %v4701 = vpop.f32.mrf.mxu0
      %v4702 = vadd.f32 %v4541, %v4701
      %v4703 = vpop.f32.mrf.mxu0
      %v4704 = vpop.f32.mrf.mxu0
      %v4705 = vadd.f32 %v4544, %v4704
      %v4706 = vpop.f32.mrf.mxu0
      %4707 = vdwg.mxu0
      %v4708 = vadd.f32 %v4067, %v4582
      %v4709 = vadd.f32 %v4070, %v4585
      %v4710 = vadd.f32 %v4075, %v4590
      %v4711 = vadd.f32 %v4078, %v4593
      %v4712 = vadd.f32 %v4083, %v4598
      %v4713 = vadd.f32 %v4086, %v4601
      %v4714 = vadd.f32 %v4091, %v4606
      %v4715 = vadd.f32 %v4094, %v4609
      %v4716 = vadd.f32 %v4099, %v4614
      %v4717 = vadd.f32 %v4102, %v4617
      %v4718 = vadd.f32 %v4107, %v4622
      %v4719 = vadd.f32 %v4110, %v4625
      %v4720 = vadd.f32 %v4115, %v4630
      %v4721 = vadd.f32 %v4118, %v4633
      %v4722 = vadd.f32 %v4123, %v4638
      %v4723 = vadd.f32 %v4126, %v4641
      %v4724 = vadd.f32 %v4131, %v4646
      %v4725 = vadd.f32 %v4134, %v4649
      %v4726 = vadd.f32 %v4139, %v4654
      %v4727 = vadd.f32 %v4142, %v4657
      %v4728 = vadd.f32 %v4147, %v4662
      %v4729 = vadd.f32 %v4150, %v4665
      %v4730 = vadd.f32 %v4155, %v4670
      %v4731 = vadd.f32 %v4158, %v4673
      %v4732 = vadd.f32 %v4163, %v4678
      %v4733 = vadd.f32 %v4166, %v4681
      %v4734 = vadd.f32 %v4171, %v4686
      %v4735 = vadd.f32 %v4174, %v4689
      %v4736 = vadd.f32 %v4179, %v4694
      %v4737 = vadd.f32 %v4182, %v4697
      %v4738 = vadd.f32 %v4187, %v4702
      %v4739 = vadd.f32 %v4190, %v4705
      %v4740 = vld [vmem:[%s6] sm:$0x1]
      %v4742 = vlaneseq
      %v4743 = vshrl.u32 %v4742, 7
      %v4744 = vsub.s32 0, %v4743
      %v4745 = vrot.slane %v4740, %v4744
      %v4747 = vadd.f32 %v4708, %v4745
      %v4748 = vadd.f32 %v4709, %v4745
      %v4749 = vadd.f32 %v4710, %v4745
      %v4750 = vadd.f32 %v4711, %v4745
      %v4751 = vadd.f32 %v4712, %v4745
      %v4752 = vadd.f32 %v4713, %v4745
      %v4753 = vadd.f32 %v4714, %v4745
      %v4754 = vadd.f32 %v4715, %v4745
      %v4755 = vadd.f32 %v4716, %v4745
      %v4756 = vadd.f32 %v4717, %v4745
      %v4757 = vadd.f32 %v4718, %v4745
      %v4758 = vadd.f32 %v4719, %v4745
      %v4759 = vadd.f32 %v4720, %v4745
      %v4760 = vadd.f32 %v4721, %v4745
      %v4761 = vadd.f32 %v4722, %v4745
      %v4762 = vadd.f32 %v4723, %v4745
      %v4763 = vadd.f32 %v4724, %v4745
      %v4764 = vadd.f32 %v4725, %v4745
      %v4765 = vadd.f32 %v4726, %v4745
      %v4766 = vadd.f32 %v4727, %v4745
      %v4767 = vadd.f32 %v4728, %v4745
      %v4768 = vadd.f32 %v4729, %v4745
      %v4769 = vadd.f32 %v4730, %v4745
      %v4770 = vadd.f32 %v4731, %v4745
      %v4771 = vadd.f32 %v4732, %v4745
      %v4772 = vadd.f32 %v4733, %v4745
      %v4773 = vadd.f32 %v4734, %v4745
      %v4774 = vadd.f32 %v4735, %v4745
      %v4775 = vadd.f32 %v4736, %v4745
      %v4776 = vadd.f32 %v4737, %v4745
      %v4777 = vadd.f32 %v4738, %v4745
      %v4778 = vadd.f32 %v4739, %v4745
      %vm4779 = vcmp.gt.f32.partialorder %v4747, 0.0
      %vm4780 = vcmp.gt.f32.partialorder %v4748, 0.0
      %vm4781 = vcmp.gt.f32.partialorder %v4749, 0.0
      %vm4782 = vcmp.gt.f32.partialorder %v4750, 0.0
      %vm4783 = vcmp.gt.f32.partialorder %v4751, 0.0
      %vm4784 = vcmp.gt.f32.partialorder %v4752, 0.0
      %vm4785 = vcmp.gt.f32.partialorder %v4753, 0.0
      %vm4786 = vcmp.gt.f32.partialorder %v4754, 0.0
      %vm4787 = vcmp.gt.f32.partialorder %v4755, 0.0
      %vm4788 = vcmp.gt.f32.partialorder %v4756, 0.0
      %vm4789 = vcmp.gt.f32.partialorder %v4757, 0.0
      %vm4790 = vcmp.gt.f32.partialorder %v4758, 0.0
      %vm4791 = vcmp.gt.f32.partialorder %v4759, 0.0
      %vm4792 = vcmp.gt.f32.partialorder %v4760, 0.0
      %vm4793 = vcmp.gt.f32.partialorder %v4761, 0.0
      %vm4794 = vcmp.gt.f32.partialorder %v4762, 0.0
      %vm4795 = vcmp.gt.f32.partialorder %v4763, 0.0
      %vm4796 = vcmp.gt.f32.partialorder %v4764, 0.0
      %vm4797 = vcmp.gt.f32.partialorder %v4765, 0.0
      %vm4798 = vcmp.gt.f32.partialorder %v4766, 0.0
      %vm4799 = vcmp.gt.f32.partialorder %v4767, 0.0
      %vm4800 = vcmp.gt.f32.partialorder %v4768, 0.0
      %vm4801 = vcmp.gt.f32.partialorder %v4769, 0.0
      %vm4802 = vcmp.gt.f32.partialorder %v4770, 0.0
      %vm4803 = vcmp.gt.f32.partialorder %v4771, 0.0
      %vm4804 = vcmp.gt.f32.partialorder %v4772, 0.0
      %vm4805 = vcmp.gt.f32.partialorder %v4773, 0.0
      %vm4806 = vcmp.gt.f32.partialorder %v4774, 0.0
      %vm4807 = vcmp.gt.f32.partialorder %v4775, 0.0
      %vm4808 = vcmp.gt.f32.partialorder %v4776, 0.0
      %vm4809 = vcmp.gt.f32.partialorder %v4777, 0.0
      %vm4810 = vcmp.gt.f32.partialorder %v4778, 0.0
      %v4811 = vmul.f32 %v4747, 0.05
      %v4812 = vmul.f32 %v4748, 0.05
      %v4813 = vmul.f32 %v4749, 0.05
      %v4814 = vmul.f32 %v4750, 0.05
      %v4815 = vmul.f32 %v4751, 0.05
      %v4816 = vmul.f32 %v4752, 0.05
      %v4817 = vmul.f32 %v4753, 0.05
      %v4818 = vmul.f32 %v4754, 0.05
      %v4819 = vmul.f32 %v4755, 0.05
      %v4820 = vmul.f32 %v4756, 0.05
      %v4821 = vmul.f32 %v4757, 0.05
      %v4822 = vmul.f32 %v4758, 0.05
      %v4823 = vmul.f32 %v4759, 0.05
      %v4824 = vmul.f32 %v4760, 0.05
      %v4825 = vmul.f32 %v4761, 0.05
      %v4826 = vmul.f32 %v4762, 0.05
      %v4827 = vmul.f32 %v4763, 0.05
      %v4828 = vmul.f32 %v4764, 0.05
      %v4829 = vmul.f32 %v4765, 0.05
      %v4830 = vmul.f32 %v4766, 0.05
      %v4831 = vmul.f32 %v4767, 0.05
      %v4832 = vmul.f32 %v4768, 0.05
      %v4833 = vmul.f32 %v4769, 0.05
      %v4834 = vmul.f32 %v4770, 0.05
      %v4835 = vmul.f32 %v4771, 0.05
      %v4836 = vmul.f32 %v4772, 0.05
      %v4837 = vmul.f32 %v4773, 0.05
      %v4838 = vmul.f32 %v4774, 0.05
      %v4839 = vmul.f32 %v4775, 0.05
      %v4840 = vmul.f32 %v4776, 0.05
      %v4841 = vmul.f32 %v4777, 0.05
      %v4842 = vmul.f32 %v4778, 0.05
      %v4843 = vsel %vm4779, %v4747, %v4811
      %v4844 = vsel %vm4780, %v4748, %v4812
      %v4845 = vsel %vm4781, %v4749, %v4813
      %v4846 = vsel %vm4782, %v4750, %v4814
      %v4847 = vsel %vm4783, %v4751, %v4815
      %v4848 = vsel %vm4784, %v4752, %v4816
      %v4849 = vsel %vm4785, %v4753, %v4817
      %v4850 = vsel %vm4786, %v4754, %v4818
      %v4851 = vsel %vm4787, %v4755, %v4819
      %v4852 = vsel %vm4788, %v4756, %v4820
      %v4853 = vsel %vm4789, %v4757, %v4821
      %v4854 = vsel %vm4790, %v4758, %v4822
      %v4855 = vsel %vm4791, %v4759, %v4823
      %v4856 = vsel %vm4792, %v4760, %v4824
      %v4857 = vsel %vm4793, %v4761, %v4825
      %v4858 = vsel %vm4794, %v4762, %v4826
      %v4859 = vsel %vm4795, %v4763, %v4827
      %v4860 = vsel %vm4796, %v4764, %v4828
      %v4861 = vsel %vm4797, %v4765, %v4829
      %v4862 = vsel %vm4798, %v4766, %v4830
      %v4863 = vsel %vm4799, %v4767, %v4831
      %v4864 = vsel %vm4800, %v4768, %v4832
      %v4865 = vsel %vm4801, %v4769, %v4833
      %v4866 = vsel %vm4802, %v4770, %v4834
      %v4867 = vsel %vm4803, %v4771, %v4835
      %v4868 = vsel %vm4804, %v4772, %v4836
      %v4869 = vsel %vm4805, %v4773, %v4837
      %v4870 = vsel %vm4806, %v4774, %v4838
      %v4871 = vsel %vm4807, %v4775, %v4839
      %v4872 = vsel %vm4808, %v4776, %v4840
      %v4873 = vsel %vm4809, %v4777, %v4841
      %v4874 = vsel %vm4810, %v4778, %v4842
      %v4907 = vrot.slane %v4843, 7
      %v4908 = vsel %vm1351, %v1352, %v4907
      %v4909 = vrot.slane %v4844, 7
      %v4910 = vsel %vm1351, %v4907, %v4909
      %v4911 = vrot.slane %v4845, 7
      %v4912 = vsel %vm1351, %v4909, %v4911
      %v4913 = vrot.slane %v4846, 7
      %v4914 = vsel %vm1351, %v4911, %v4913
      %v4915 = vrot.slane %v4847, 7
      %v4916 = vsel %vm1351, %v4913, %v4915
      %v4917 = vrot.slane %v4848, 7
      %v4918 = vsel %vm1351, %v4915, %v4917
      %v4919 = vrot.slane %v4849, 7
      %v4920 = vsel %vm1351, %v4917, %v4919
      %v4921 = vrot.slane %v4850, 7
      %v4922 = vsel %vm1351, %v4919, %v4921
      %v4923 = vrot.slane %v4851, 7
      %v4924 = vsel %vm1351, %v4921, %v4923
      %v4925 = vrot.slane %v4852, 7
      %v4926 = vsel %vm1351, %v4923, %v4925
      %v4927 = vrot.slane %v4853, 7
      %v4928 = vsel %vm1351, %v4925, %v4927
      %v4929 = vrot.slane %v4854, 7
      %v4930 = vsel %vm1351, %v4927, %v4929
      %v4931 = vrot.slane %v4855, 7
      %v4932 = vsel %vm1351, %v4929, %v4931
      %v4933 = vrot.slane %v4856, 7
      %v4934 = vsel %vm1351, %v4931, %v4933
      %v4935 = vrot.slane %v4857, 7
      %v4936 = vsel %vm1351, %v4933, %v4935
      %v4937 = vrot.slane %v4858, 7
      %v4938 = vsel %vm1351, %v4935, %v4937
      %v4939 = vrot.slane %v4859, 7
      %v4940 = vsel %vm1351, %v4937, %v4939
      %v4941 = vrot.slane %v4860, 7
      %v4942 = vsel %vm1351, %v4939, %v4941
      %v4943 = vrot.slane %v4861, 7
      %v4944 = vsel %vm1351, %v4941, %v4943
      %v4945 = vrot.slane %v4862, 7
      %v4946 = vsel %vm1351, %v4943, %v4945
      %v4947 = vrot.slane %v4863, 7
      %v4948 = vsel %vm1351, %v4945, %v4947
      %v4949 = vrot.slane %v4864, 7
      %v4950 = vsel %vm1351, %v4947, %v4949
      %v4951 = vrot.slane %v4865, 7
      %v4952 = vsel %vm1351, %v4949, %v4951
      %v4953 = vrot.slane %v4866, 7
      %v4954 = vsel %vm1351, %v4951, %v4953
      %v4955 = vrot.slane %v4867, 7
      %v4956 = vsel %vm1351, %v4953, %v4955
      %v4957 = vrot.slane %v4868, 7
      %v4958 = vsel %vm1351, %v4955, %v4957
      %v4959 = vrot.slane %v4869, 7
      %v4960 = vsel %vm1351, %v4957, %v4959
      %v4961 = vrot.slane %v4870, 7
      %v4962 = vsel %vm1351, %v4959, %v4961
      %v4963 = vrot.slane %v4871, 7
      %v4964 = vsel %vm1351, %v4961, %v4963
      %v4965 = vrot.slane %v4872, 7
      %v4966 = vsel %vm1351, %v4963, %v4965
      %v4967 = vrot.slane %v4873, 7
      %v4968 = vsel %vm1351, %v4965, %v4967
      %v4969 = vrot.slane %v4874, 7
      %v4970 = vsel %vm1351, %v4967, %v4969
      %v5003 = vsel %vm1286, %v4908, 0.0
      %v5004 = vsel %vm1287, %v4910, 0.0
      %v5005 = vsel %vm1288, %v4912, 0.0
      %v5006 = vsel %vm1289, %v4914, 0.0
      %v5007 = vsel %vm1290, %v4916, 0.0
      %v5008 = vsel %vm1291, %v4918, 0.0
      %v5009 = vsel %vm1292, %v4920, 0.0
      %v5010 = vsel %vm1293, %v4922, 0.0
      %v5011 = vsel %vm1294, %v4924, 0.0
      %v5012 = vsel %vm1295, %v4926, 0.0
      %v5013 = vsel %vm1296, %v4928, 0.0
      %v5014 = vsel %vm1297, %v4930, 0.0
      %v5015 = vsel %vm1298, %v4932, 0.0
      %v5016 = vsel %vm1299, %v4934, 0.0
      %v5017 = vsel %vm1300, %v4936, 0.0
      %v5018 = vsel %vm1301, %v4938, 0.0
      %v5019 = vsel %vm1302, %v4940, 0.0
      %v5020 = vsel %vm1303, %v4942, 0.0
      %v5021 = vsel %vm1304, %v4944, 0.0
      %v5022 = vsel %vm1305, %v4946, 0.0
      %v5023 = vsel %vm1306, %v4948, 0.0
      %v5024 = vsel %vm1307, %v4950, 0.0
      %v5025 = vsel %vm1308, %v4952, 0.0
      %v5026 = vsel %vm1309, %v4954, 0.0
      %v5027 = vsel %vm1310, %v4956, 0.0
      %v5028 = vsel %vm1311, %v4958, 0.0
      %v5029 = vsel %vm1312, %v4960, 0.0
      %v5030 = vsel %vm1313, %v4962, 0.0
      %v5031 = vsel %vm1314, %v4964, 0.0
      %v5032 = vsel %vm1315, %v4966, 0.0
      %v5033 = vsel %vm1316, %v4968, 0.0
      %v5034 = vsel %vm1317, %v4970, 0.0
      %v5035 = vrot.slane %v4843, 1
      %v5036 = vrot.slane %v4844, 1
      %v5037 = vsel %vm1545, %v5035, %v5036
      %v5038 = vrot.slane %v4845, 1
      %v5039 = vsel %vm1545, %v5036, %v5038
      %v5040 = vrot.slane %v4846, 1
      %v5041 = vsel %vm1545, %v5038, %v5040
      %v5042 = vrot.slane %v4847, 1
      %v5043 = vsel %vm1545, %v5040, %v5042
      %v5044 = vrot.slane %v4848, 1
      %v5045 = vsel %vm1545, %v5042, %v5044
      %v5046 = vrot.slane %v4849, 1
      %v5047 = vsel %vm1545, %v5044, %v5046
      %v5048 = vrot.slane %v4850, 1
      %v5049 = vsel %vm1545, %v5046, %v5048
      %v5050 = vrot.slane %v4851, 1
      %v5051 = vsel %vm1545, %v5048, %v5050
      %v5052 = vrot.slane %v4852, 1
      %v5053 = vsel %vm1545, %v5050, %v5052
      %v5054 = vrot.slane %v4853, 1
      %v5055 = vsel %vm1545, %v5052, %v5054
      %v5056 = vrot.slane %v4854, 1
      %v5057 = vsel %vm1545, %v5054, %v5056
      %v5058 = vrot.slane %v4855, 1
      %v5059 = vsel %vm1545, %v5056, %v5058
      %v5060 = vrot.slane %v4856, 1
      %v5061 = vsel %vm1545, %v5058, %v5060
      %v5062 = vrot.slane %v4857, 1
      %v5063 = vsel %vm1545, %v5060, %v5062
      %v5064 = vrot.slane %v4858, 1
      %v5065 = vsel %vm1545, %v5062, %v5064
      %v5066 = vrot.slane %v4859, 1
      %v5067 = vsel %vm1545, %v5064, %v5066
      %v5068 = vrot.slane %v4860, 1
      %v5069 = vsel %vm1545, %v5066, %v5068
      %v5070 = vrot.slane %v4861, 1
      %v5071 = vsel %vm1545, %v5068, %v5070
      %v5072 = vrot.slane %v4862, 1
      %v5073 = vsel %vm1545, %v5070, %v5072
      %v5074 = vrot.slane %v4863, 1
      %v5075 = vsel %vm1545, %v5072, %v5074
      %v5076 = vrot.slane %v4864, 1
      %v5077 = vsel %vm1545, %v5074, %v5076
      %v5078 = vrot.slane %v4865, 1
      %v5079 = vsel %vm1545, %v5076, %v5078
      %v5080 = vrot.slane %v4866, 1
      %v5081 = vsel %vm1545, %v5078, %v5080
      %v5082 = vrot.slane %v4867, 1
      %v5083 = vsel %vm1545, %v5080, %v5082
      %v5084 = vrot.slane %v4868, 1
      %v5085 = vsel %vm1545, %v5082, %v5084
      %v5086 = vrot.slane %v4869, 1
      %v5087 = vsel %vm1545, %v5084, %v5086
      %v5088 = vrot.slane %v4870, 1
      %v5089 = vsel %vm1545, %v5086, %v5088
      %v5090 = vrot.slane %v4871, 1
      %v5091 = vsel %vm1545, %v5088, %v5090
      %v5092 = vrot.slane %v4872, 1
      %v5093 = vsel %vm1545, %v5090, %v5092
      %v5094 = vrot.slane %v4873, 1
      %v5095 = vsel %vm1545, %v5092, %v5094
      %v5096 = vrot.slane %v4874, 1
      %v5097 = vsel %vm1545, %v5094, %v5096
      %v5098 = vsel %vm1545, %v5096, %v1609
      %v5131 = vsel %vm1513, %v5037, 0.0
      %v5132 = vsel %vm1514, %v5039, 0.0
      %v5133 = vsel %vm1515, %v5041, 0.0
      %v5134 = vsel %vm1516, %v5043, 0.0
      %v5135 = vsel %vm1517, %v5045, 0.0
      %v5136 = vsel %vm1518, %v5047, 0.0
      %v5137 = vsel %vm1519, %v5049, 0.0
      %v5138 = vsel %vm1520, %v5051, 0.0
      %v5139 = vsel %vm1521, %v5053, 0.0
      %v5140 = vsel %vm1522, %v5055, 0.0
      %v5141 = vsel %vm1523, %v5057, 0.0
      %v5142 = vsel %vm1524, %v5059, 0.0
      %v5143 = vsel %vm1525, %v5061, 0.0
      %v5144 = vsel %vm1526, %v5063, 0.0
      %v5145 = vsel %vm1527, %v5065, 0.0
      %v5146 = vsel %vm1528, %v5067, 0.0
      %v5147 = vsel %vm1529, %v5069, 0.0
      %v5148 = vsel %vm1530, %v5071, 0.0
      %v5149 = vsel %vm1531, %v5073, 0.0
      %v5150 = vsel %vm1532, %v5075, 0.0
      %v5151 = vsel %vm1533, %v5077, 0.0
      %v5152 = vsel %vm1534, %v5079, 0.0
      %v5153 = vsel %vm1535, %v5081, 0.0
      %v5154 = vsel %vm1536, %v5083, 0.0
      %v5155 = vsel %vm1537, %v5085, 0.0
      %v5156 = vsel %vm1538, %v5087, 0.0
      %v5157 = vsel %vm1539, %v5089, 0.0
      %v5158 = vsel %vm1540, %v5091, 0.0
      %v5159 = vsel %vm1541, %v5093, 0.0
      %v5160 = vsel %vm1542, %v5095, 0.0
      %v5161 = vsel %vm1543, %v5097, 0.0
      %v5162 = vsel %vm1544, %v5098, 0.0
      %5163 = vrot.lane.b32.xlu0 %v4843, 64
      %v5164 = vpop.permute.xlu0 %5163
      %5165 = vrot.lane.b32.xlu0 %v4844, 64
      %v5166 = vpop.permute.xlu0 %5165
      %5167 = vrot.lane.b32.xlu0 %v4845, 64
      %v5168 = vpop.permute.xlu0 %5167
      %5169 = vrot.lane.b32.xlu0 %v4846, 64
      %v5170 = vpop.permute.xlu0 %5169
      %5171 = vrot.lane.b32.xlu0 %v4847, 64
      %v5172 = vpop.permute.xlu0 %5171
      %5173 = vrot.lane.b32.xlu0 %v4848, 64
      %v5174 = vpop.permute.xlu0 %5173
      %5175 = vrot.lane.b32.xlu0 %v4849, 64
      %v5176 = vpop.permute.xlu0 %5175
      %5177 = vrot.lane.b32.xlu0 %v4850, 64
      %v5178 = vpop.permute.xlu0 %5177
      %5179 = vrot.lane.b32.xlu0 %v4851, 64
      %v5180 = vpop.permute.xlu0 %5179
      %5181 = vrot.lane.b32.xlu0 %v4852, 64
      %v5182 = vpop.permute.xlu0 %5181
      %5183 = vrot.lane.b32.xlu0 %v4853, 64
      %v5184 = vpop.permute.xlu0 %5183
      %5185 = vrot.lane.b32.xlu0 %v4854, 64
      %v5186 = vpop.permute.xlu0 %5185
      %5187 = vrot.lane.b32.xlu0 %v4855, 64
      %v5188 = vpop.permute.xlu0 %5187
      %5189 = vrot.lane.b32.xlu0 %v4856, 64
      %v5190 = vpop.permute.xlu0 %5189
      %5191 = vrot.lane.b32.xlu0 %v4857, 64
      %v5192 = vpop.permute.xlu0 %5191
      %5193 = vrot.lane.b32.xlu0 %v4858, 64
      %v5194 = vpop.permute.xlu0 %5193
      %5195 = vrot.lane.b32.xlu0 %v4859, 64
      %v5196 = vpop.permute.xlu0 %5195
      %5197 = vrot.lane.b32.xlu0 %v4860, 64
      %v5198 = vpop.permute.xlu0 %5197
      %5199 = vrot.lane.b32.xlu0 %v4861, 64
      %v5200 = vpop.permute.xlu0 %5199
      %5201 = vrot.lane.b32.xlu0 %v4862, 64
      %v5202 = vpop.permute.xlu0 %5201
      %5203 = vrot.lane.b32.xlu0 %v4863, 64
      %v5204 = vpop.permute.xlu0 %5203
      %5205 = vrot.lane.b32.xlu0 %v4864, 64
      %v5206 = vpop.permute.xlu0 %5205
      %5207 = vrot.lane.b32.xlu0 %v4865, 64
      %v5208 = vpop.permute.xlu0 %5207
      %5209 = vrot.lane.b32.xlu0 %v4866, 64
      %v5210 = vpop.permute.xlu0 %5209
      %5211 = vrot.lane.b32.xlu0 %v4867, 64
      %v5212 = vpop.permute.xlu0 %5211
      %5213 = vrot.lane.b32.xlu0 %v4868, 64
      %v5214 = vpop.permute.xlu0 %5213
      %5215 = vrot.lane.b32.xlu0 %v4869, 64
      %v5216 = vpop.permute.xlu0 %5215
      %5217 = vrot.lane.b32.xlu0 %v4870, 64
      %v5218 = vpop.permute.xlu0 %5217
      %5219 = vrot.lane.b32.xlu0 %v4871, 64
      %v5220 = vpop.permute.xlu0 %5219
      %5221 = vrot.lane.b32.xlu0 %v4872, 64
      %v5222 = vpop.permute.xlu0 %5221
      %5223 = vrot.lane.b32.xlu0 %v4873, 64
      %v5224 = vpop.permute.xlu0 %5223
      %5225 = vrot.lane.b32.xlu0 %v4874, 64
      %v5226 = vpop.permute.xlu0 %5225
      %v5259 = vsel %vm1771, %v5003, %v5164
      %v5260 = vsel %vm1771, %v5004, %v5166
      %v5261 = vsel %vm1771, %v5005, %v5168
      %v5262 = vsel %vm1771, %v5006, %v5170
      %v5263 = vsel %vm1771, %v5007, %v5172
      %v5264 = vsel %vm1771, %v5008, %v5174
      %v5265 = vsel %vm1771, %v5009, %v5176
      %v5266 = vsel %vm1771, %v5010, %v5178
      %v5267 = vsel %vm1771, %v5011, %v5180
      %v5268 = vsel %vm1771, %v5012, %v5182
      %v5269 = vsel %vm1771, %v5013, %v5184
      %v5270 = vsel %vm1771, %v5014, %v5186
      %v5271 = vsel %vm1771, %v5015, %v5188
      %v5272 = vsel %vm1771, %v5016, %v5190
      %v5273 = vsel %vm1771, %v5017, %v5192
      %v5274 = vsel %vm1771, %v5018, %v5194
      %v5275 = vsel %vm1771, %v5019, %v5196
      %v5276 = vsel %vm1771, %v5020, %v5198
      %v5277 = vsel %vm1771, %v5021, %v5200
      %v5278 = vsel %vm1771, %v5022, %v5202
      %v5279 = vsel %vm1771, %v5023, %v5204
      %v5280 = vsel %vm1771, %v5024, %v5206
      %v5281 = vsel %vm1771, %v5025, %v5208
      %v5282 = vsel %vm1771, %v5026, %v5210
      %v5283 = vsel %vm1771, %v5027, %v5212
      %v5284 = vsel %vm1771, %v5028, %v5214
      %v5285 = vsel %vm1771, %v5029, %v5216
      %v5286 = vsel %vm1771, %v5030, %v5218
      %v5287 = vsel %vm1771, %v5031, %v5220
      %v5288 = vsel %vm1771, %v5032, %v5222
      %v5289 = vsel %vm1771, %v5033, %v5224
      %v5290 = vsel %vm1771, %v5034, %v5226
      %v5291 = vpack.c.bf16 %v5260, %v5259
      %v5292 = vpack.c.bf16 %v5132, %v5131
      %v5293 = vpack.c.bf16 %v5262, %v5261
      %v5294 = vpack.c.bf16 %v5134, %v5133
      %v5295 = vpack.c.bf16 %v5264, %v5263
      %v5296 = vpack.c.bf16 %v5136, %v5135
      %v5297 = vpack.c.bf16 %v5266, %v5265
      %v5298 = vpack.c.bf16 %v5138, %v5137
      %v5299 = vpack.c.bf16 %v5268, %v5267
      %v5300 = vpack.c.bf16 %v5140, %v5139
      %v5301 = vpack.c.bf16 %v5270, %v5269
      %v5302 = vpack.c.bf16 %v5142, %v5141
      %v5303 = vpack.c.bf16 %v5272, %v5271
      %v5304 = vpack.c.bf16 %v5144, %v5143
      %v5305 = vpack.c.bf16 %v5274, %v5273
      %v5306 = vpack.c.bf16 %v5146, %v5145
      %v5307 = vpack.c.bf16 %v5276, %v5275
      %v5308 = vpack.c.bf16 %v5148, %v5147
      %v5309 = vpack.c.bf16 %v5278, %v5277
      %v5310 = vpack.c.bf16 %v5150, %v5149
      %v5311 = vpack.c.bf16 %v5280, %v5279
      %v5312 = vpack.c.bf16 %v5152, %v5151
      %v5313 = vpack.c.bf16 %v5282, %v5281
      %v5314 = vpack.c.bf16 %v5154, %v5153
      %v5315 = vpack.c.bf16 %v5284, %v5283
      %v5316 = vpack.c.bf16 %v5156, %v5155
      %v5317 = vpack.c.bf16 %v5286, %v5285
      %v5318 = vpack.c.bf16 %v5158, %v5157
      %v5319 = vpack.c.bf16 %v5288, %v5287
      %v5320 = vpack.c.bf16 %v5160, %v5159
      %v5321 = vld [vmem:[%s7] sm:$0xf]
      %v5322 = vld [vmem:[%s7 + $0x4] sm:$0xf]
      %v5323 = vld [vmem:[%s7 + $0x8] sm:$0xf]
      %v5324 = vld [vmem:[%s7 + $0xc] sm:$0xf]
      %v5325 = vld [vmem:[%s7 + $0x10] sm:$0xf]
      %v5326 = vld [vmem:[%s7 + $0x14] sm:$0xf]
      %v5327 = vld [vmem:[%s7 + $0x18] sm:$0xf]
      %v5328 = vld [vmem:[%s7 + $0x1c] sm:$0xf]
      %v5329 = vld [vmem:[%s7 + $0x20] sm:$0xf]
      %v5330 = vld [vmem:[%s7 + $0x24] sm:$0xf]
      %v5331 = vld [vmem:[%s7 + $0x28] sm:$0xf]
      %v5332 = vld [vmem:[%s7 + $0x2c] sm:$0xf]
      %v5333 = vld [vmem:[%s7 + $0x30] sm:$0xf]
      %v5334 = vld [vmem:[%s7 + $0x34] sm:$0xf]
      %v5335 = vld [vmem:[%s7 + $0x38] sm:$0xf]
      %v5336 = vld [vmem:[%s7 + $0x3c] sm:$0xf]
      %v5337 = vld [vmem:[%s7 + $0x40] sm:$0xf]
      %v5338 = vld [vmem:[%s7 + $0x44] sm:$0xf]
      %v5339 = vld [vmem:[%s7 + $0x48] sm:$0xf]
      %v5340 = vld [vmem:[%s7 + $0x4c] sm:$0xf]
      %v5341 = vld [vmem:[%s7 + $0x50] sm:$0xf]
      %v5342 = vld [vmem:[%s7 + $0x54] sm:$0xf]
      %v5343 = vld [vmem:[%s7 + $0x58] sm:$0xf]
      %v5344 = vld [vmem:[%s7 + $0x5c] sm:$0xf]
      %v5345 = vpack.c.bf16 %v5290, %v5289
      %v5346 = vpack.c.bf16 %v5162, %v5161
      %s5347 = scalar_lea.vmem %s7, 96
      %v5348 = vld [vmem:[%s5347] sm:$0xf]
      %v5349 = vld [vmem:[%s5347 + $0x4] sm:$0xf]
      %v5350 = vld [vmem:[%s5347 + $0x8] sm:$0xf]
      %v5351 = vld [vmem:[%s5347 + $0xc] sm:$0xf]
      %v5352 = vld [vmem:[%s5347 + $0x10] sm:$0xf]
      %v5353 = vld [vmem:[%s5347 + $0x14] sm:$0xf]
      %v5354 = vld [vmem:[%s5347 + $0x18] sm:$0xf]
      %v5355 = vld [vmem:[%s5347 + $0x1c] sm:$0xf]
      %v5356 = vld [vmem:[%s5347 + $0x20] sm:$0xf]
      %v5357 = vld [vmem:[%s5347 + $0x24] sm:$0xf]
      %v5358 = vld [vmem:[%s5347 + $0x28] sm:$0xf]
      %v5359 = vld [vmem:[%s5347 + $0x2c] sm:$0xf]
      %v5360 = vld [vmem:[%s5347 + $0x30] sm:$0xf]
      %v5361 = vld [vmem:[%s5347 + $0x34] sm:$0xf]
      %v5362 = vld [vmem:[%s5347 + $0x38] sm:$0xf]
      %v5363 = vld [vmem:[%s5347 + $0x3c] sm:$0xf]
      %v5364 = vld [vmem:[%s5347 + $0x40] sm:$0xf]
      %v5365 = vld [vmem:[%s5347 + $0x44] sm:$0xf]
      %v5366 = vld [vmem:[%s5347 + $0x48] sm:$0xf]
      %v5367 = vld [vmem:[%s5347 + $0x4c] sm:$0xf]
      %v5368 = vld [vmem:[%s5347 + $0x50] sm:$0xf]
      %v5369 = vld [vmem:[%s5347 + $0x54] sm:$0xf]
      %v5370 = vld [vmem:[%s5347 + $0x58] sm:$0xf]
      %v5371 = vld [vmem:[%s5347 + $0x5c] sm:$0xf]
      %v5396 = vunpack.c.l.b16 %v5348
      %v5397 = vunpack.c.l.b16 %v5349
      %v5398 = vunpack.c.l.b16 %v5350
      %v5399 = vunpack.c.l.b16 %v5351
      %v5400 = vunpack.c.l.b16 %v5352
      %v5401 = vunpack.c.l.b16 %v5353
      %v5402 = vunpack.c.l.b16 %v5354
      %v5403 = vunpack.c.l.b16 %v5355
      %v5404 = vunpack.c.l.b16 %v5356
      %v5405 = vunpack.c.l.b16 %v5357
      %v5406 = vunpack.c.l.b16 %v5358
      %v5407 = vunpack.c.l.b16 %v5359
      %v5408 = vunpack.c.l.b16 %v5360
      %v5409 = vunpack.c.l.b16 %v5361
      %v5410 = vunpack.c.l.b16 %v5362
      %v5411 = vunpack.c.l.b16 %v5363
      %v5412 = vunpack.c.l.b16 %v5364
      %v5413 = vunpack.c.l.b16 %v5365
      %v5414 = vunpack.c.l.b16 %v5366
      %v5415 = vunpack.c.l.b16 %v5367
      %v5416 = vunpack.c.l.b16 %v5368
      %v5417 = vunpack.c.l.b16 %v5369
      %v5418 = vunpack.c.l.b16 %v5370
      %v5419 = vunpack.c.l.b16 %v5371
      %v5420 = vpack.c.b16 %v5397, %v5396
      %v5421 = vpack.c.b16 %v5399, %v5398
      %v5422 = vpack.c.b16 %v5401, %v5400
      %v5423 = vpack.c.b16 %v5403, %v5402
      %v5424 = vpack.c.b16 %v5405, %v5404
      %v5425 = vpack.c.b16 %v5407, %v5406
      %v5426 = vpack.c.b16 %v5409, %v5408
      %v5427 = vpack.c.b16 %v5411, %v5410
      %v5428 = vpack.c.b16 %v5413, %v5412
      %v5429 = vpack.c.b16 %v5415, %v5414
      %v5430 = vpack.c.b16 %v5417, %v5416
      %v5431 = vpack.c.b16 %v5419, %v5418
      %v5445 = vsel %vm1771, %v5292, 0
      %v5448 = vsel %vm1771, %v5294, 0
      %v5451 = vsel %vm1771, %v5296, 0
      %v5454 = vsel %vm1771, %v5298, 0
      %v5457 = vsel %vm1771, %v5300, 0
      %v5460 = vsel %vm1771, %v5302, 0
      %v5463 = vsel %vm1771, %v5304, 0
      %v5466 = vsel %vm1771, %v5306, 0
      %v5469 = vsel %vm1771, %v5308, 0
      %v5472 = vsel %vm1771, %v5310, 0
      %v5475 = vsel %vm1771, %v5312, 0
      %v5478 = vsel %vm1771, %v5314, 0
      %v5481 = vsel %vm1771, %v5316, 0
      %v5484 = vsel %vm1771, %v5318, 0
      %v5487 = vsel %vm1771, %v5320, 0
      %v5490 = vsel %vm1771, %v5346, 0
      %5492 = vmatprep.subr.bf16.mxu0 0
      %5493 = vmatpush1.bf16.msra.mxu0 %v5427
      %5494 = vmatprep.subr.bf16.mxu0 0
      %5495 = vmatpush1.bf16.msra.mxu0 %v5426
      %5496 = vmatprep.subr.bf16.mxu0 0
      %5497 = vmatpush1.bf16.msra.mxu0 %v5425
      %5498 = vmatprep.subr.bf16.mxu0 0
      %5499 = vmatpush1.bf16.msra.mxu0 %v5424
      %5500 = vmatprep.subr.bf16.mxu0 0
      %5501 = vmatpush1.bf16.msra.mxu0 %v5423
      %5502 = vmatprep.subr.bf16.mxu0 0
      %5503 = vmatpush1.bf16.msra.mxu0 %v5422
      %5504 = vmatprep.subr.bf16.mxu0 0
      %5505 = vmatpush1.bf16.msra.mxu0 %v5421
      %5506 = vmatprep.subr.bf16.mxu0 0
      %5507 = vmatpush1.bf16.msra.mxu0 %v5420
      %5508 = vmatprep.subr.bf16.mxu0 0
      %5509 = vmatpush2.bf16.msra.mxu0 0
      %5510 = vmatprep.subr.bf16.mxu0 0
      %5511 = vmatpush2.bf16.msra.mxu0 0
      %5512 = vmatprep.subr.bf16.mxu0 0
      %5513 = vmatpush2.bf16.msra.mxu0 0
      %5514 = vmatprep.subr.bf16.mxu0 0
      %5515 = vmatpush2.bf16.msra.mxu0 0
      %5516 = vmatprep.subr.bf16.mxu0 0
      %5517 = vmatpush2.bf16.msra.mxu0 %v5431
      %5518 = vmatprep.subr.bf16.mxu0 0
      %5519 = vmatpush2.bf16.msra.mxu0 %v5430
      %5520 = vmatprep.subr.bf16.mxu0 0
      %5521 = vmatpush2.bf16.msra.mxu0 %v5429
      %5522 = vmatprep.subr.bf16.mxu0 0
      %5523 = vmatpush2.bf16.msra.mxu0 %v5428
      %5524 = vmatprep.mubr.bf16.mxu0 %v5445
      %5525 = vmatmul.mubr.bf16.gmra.mxu0 %v5291
      %v5526 = vpop.f32.mrf.mxu0
      %v5527 = vadd.f32 0.0, %v5526
      %v5528 = vpop.f32.mrf.mxu0
      %v5529 = vpop.f32.mrf.mxu0
      %v5530 = vadd.f32 0.0, %v5529
      %v5531 = vpop.f32.mrf.mxu0
      %5532 = vmatprep.mubr.bf16.mxu0 %v5448
      %5533 = vmatmul.mubr.bf16.gmra.mxu0 %v5293
      %v5534 = vpop.f32.mrf.mxu0
      %v5535 = vadd.f32 0.0, %v5534
      %v5536 = vpop.f32.mrf.mxu0
      %v5537 = vpop.f32.mrf.mxu0
      %v5538 = vadd.f32 0.0, %v5537
      %v5539 = vpop.f32.mrf.mxu0
      %5540 = vmatprep.mubr.bf16.mxu0 %v5451
      %5541 = vmatmul.mubr.bf16.gmra.mxu0 %v5295
      %v5542 = vpop.f32.mrf.mxu0
      %v5543 = vadd.f32 0.0, %v5542
      %v5544 = vpop.f32.mrf.mxu0
      %v5545 = vpop.f32.mrf.mxu0
      %v5546 = vadd.f32 0.0, %v5545
      %v5547 = vpop.f32.mrf.mxu0
      %5548 = vmatprep.mubr.bf16.mxu0 %v5454
      %5549 = vmatmul.mubr.bf16.gmra.mxu0 %v5297
      %v5550 = vpop.f32.mrf.mxu0
      %v5551 = vadd.f32 0.0, %v5550
      %v5552 = vpop.f32.mrf.mxu0
      %v5553 = vpop.f32.mrf.mxu0
      %v5554 = vadd.f32 0.0, %v5553
      %v5555 = vpop.f32.mrf.mxu0
      %5556 = vmatprep.mubr.bf16.mxu0 %v5457
      %5557 = vmatmul.mubr.bf16.gmra.mxu0 %v5299
      %v5558 = vpop.f32.mrf.mxu0
      %v5559 = vadd.f32 0.0, %v5558
      %v5560 = vpop.f32.mrf.mxu0
      %v5561 = vpop.f32.mrf.mxu0
      %v5562 = vadd.f32 0.0, %v5561
      %v5563 = vpop.f32.mrf.mxu0
      %5564 = vmatprep.mubr.bf16.mxu0 %v5460
      %5565 = vmatmul.mubr.bf16.gmra.mxu0 %v5301
      %v5566 = vpop.f32.mrf.mxu0
      %v5567 = vadd.f32 0.0, %v5566
      %v5568 = vpop.f32.mrf.mxu0
      %v5569 = vpop.f32.mrf.mxu0
      %v5570 = vadd.f32 0.0, %v5569
      %v5571 = vpop.f32.mrf.mxu0
      %5572 = vmatprep.mubr.bf16.mxu0 %v5463
      %5573 = vmatmul.mubr.bf16.gmra.mxu0 %v5303
      %v5574 = vpop.f32.mrf.mxu0
      %v5575 = vadd.f32 0.0, %v5574
      %v5576 = vpop.f32.mrf.mxu0
      %v5577 = vpop.f32.mrf.mxu0
      %v5578 = vadd.f32 0.0, %v5577
      %v5579 = vpop.f32.mrf.mxu0
      %5580 = vmatprep.mubr.bf16.mxu0 %v5466
      %5581 = vmatmul.mubr.bf16.gmra.mxu0 %v5305
      %v5582 = vpop.f32.mrf.mxu0
      %v5583 = vadd.f32 0.0, %v5582
      %v5584 = vpop.f32.mrf.mxu0
      %v5585 = vpop.f32.mrf.mxu0
      %v5586 = vadd.f32 0.0, %v5585
      %v5587 = vpop.f32.mrf.mxu0
      %5588 = vmatprep.mubr.bf16.mxu0 %v5469
      %5589 = vmatmul.mubr.bf16.gmra.mxu0 %v5307
      %v5590 = vpop.f32.mrf.mxu0
      %v5591 = vadd.f32 0.0, %v5590
      %v5592 = vpop.f32.mrf.mxu0
      %v5593 = vpop.f32.mrf.mxu0
      %v5594 = vadd.f32 0.0, %v5593
      %v5595 = vpop.f32.mrf.mxu0
      %5596 = vmatprep.mubr.bf16.mxu0 %v5472
      %5597 = vmatmul.mubr.bf16.gmra.mxu0 %v5309
      %v5598 = vpop.f32.mrf.mxu0
      %v5599 = vadd.f32 0.0, %v5598
      %v5600 = vpop.f32.mrf.mxu0
      %v5601 = vpop.f32.mrf.mxu0
      %v5602 = vadd.f32 0.0, %v5601
      %v5603 = vpop.f32.mrf.mxu0
      %5604 = vmatprep.mubr.bf16.mxu0 %v5475
      %5605 = vmatmul.mubr.bf16.gmra.mxu0 %v5311
      %v5606 = vpop.f32.mrf.mxu0
      %v5607 = vadd.f32 0.0, %v5606
      %v5608 = vpop.f32.mrf.mxu0
      %v5609 = vpop.f32.mrf.mxu0
      %v5610 = vadd.f32 0.0, %v5609
      %v5611 = vpop.f32.mrf.mxu0
      %5612 = vmatprep.mubr.bf16.mxu0 %v5478
      %5613 = vmatmul.mubr.bf16.gmra.mxu0 %v5313
      %v5614 = vpop.f32.mrf.mxu0
      %v5615 = vadd.f32 0.0, %v5614
      %v5616 = vpop.f32.mrf.mxu0
      %v5617 = vpop.f32.mrf.mxu0
      %v5618 = vadd.f32 0.0, %v5617
      %v5619 = vpop.f32.mrf.mxu0
      %5620 = vmatprep.mubr.bf16.mxu0 %v5481
      %5621 = vmatmul.mubr.bf16.gmra.mxu0 %v5315
      %v5622 = vpop.f32.mrf.mxu0
      %v5623 = vadd.f32 0.0, %v5622
      %v5624 = vpop.f32.mrf.mxu0
      %v5625 = vpop.f32.mrf.mxu0
      %v5626 = vadd.f32 0.0, %v5625
      %v5627 = vpop.f32.mrf.mxu0
      %5628 = vmatprep.mubr.bf16.mxu0 %v5484
      %5629 = vmatmul.mubr.bf16.gmra.mxu0 %v5317
      %v5630 = vpop.f32.mrf.mxu0
      %v5631 = vadd.f32 0.0, %v5630
      %v5632 = vpop.f32.mrf.mxu0
      %v5633 = vpop.f32.mrf.mxu0
      %v5634 = vadd.f32 0.0, %v5633
      %v5635 = vpop.f32.mrf.mxu0
      %5636 = vmatprep.mubr.bf16.mxu0 %v5487
      %5637 = vmatmul.mubr.bf16.gmra.mxu0 %v5319
      %v5638 = vpop.f32.mrf.mxu0
      %v5639 = vadd.f32 0.0, %v5638
      %v5640 = vpop.f32.mrf.mxu0
      %v5641 = vpop.f32.mrf.mxu0
      %v5642 = vadd.f32 0.0, %v5641
      %v5643 = vpop.f32.mrf.mxu0
      %5644 = vmatprep.mubr.bf16.mxu0 %v5490
      %5645 = vmatmul.mubr.bf16.gmra.mxu0 %v5345
      %v5646 = vpop.f32.mrf.mxu0
      %v5647 = vadd.f32 0.0, %v5646
      %v5648 = vpop.f32.mrf.mxu0
      %v5649 = vpop.f32.mrf.mxu0
      %v5650 = vadd.f32 0.0, %v5649
      %v5651 = vpop.f32.mrf.mxu0
      %5652 = vdwg.mxu0
      %v5677 = vunpack.c.l.b16 %v5321
      %v5678 = vunpack.c.l.b16 %v5322
      %v5679 = vunpack.c.l.b16 %v5323
      %v5680 = vunpack.c.l.b16 %v5324
      %v5681 = vunpack.c.l.b16 %v5325
      %v5682 = vunpack.c.l.b16 %v5326
      %v5683 = vunpack.c.l.b16 %v5327
      %v5684 = vunpack.c.l.b16 %v5328
      %v5685 = vunpack.c.l.b16 %v5329
      %v5686 = vunpack.c.l.b16 %v5330
      %v5687 = vunpack.c.l.b16 %v5331
      %v5688 = vunpack.c.l.b16 %v5332
      %v5689 = vunpack.c.l.b16 %v5333
      %v5690 = vunpack.c.l.b16 %v5334
      %v5691 = vunpack.c.l.b16 %v5335
      %v5692 = vunpack.c.l.b16 %v5336
      %v5693 = vunpack.c.l.b16 %v5337
      %v5694 = vunpack.c.l.b16 %v5338
      %v5695 = vunpack.c.l.b16 %v5339
      %v5696 = vunpack.c.l.b16 %v5340
      %v5697 = vunpack.c.l.b16 %v5341
      %v5698 = vunpack.c.l.b16 %v5342
      %v5699 = vunpack.c.l.b16 %v5343
      %v5700 = vunpack.c.l.b16 %v5344
      %v5701 = vpack.c.b16 %v5678, %v5677
      %v5702 = vpack.c.b16 %v5680, %v5679
      %v5703 = vpack.c.b16 %v5682, %v5681
      %v5704 = vpack.c.b16 %v5684, %v5683
      %v5705 = vpack.c.b16 %v5686, %v5685
      %v5706 = vpack.c.b16 %v5688, %v5687
      %v5707 = vpack.c.b16 %v5690, %v5689
      %v5708 = vpack.c.b16 %v5692, %v5691
      %v5709 = vpack.c.b16 %v5694, %v5693
      %v5710 = vpack.c.b16 %v5696, %v5695
      %v5711 = vpack.c.b16 %v5698, %v5697
      %v5712 = vpack.c.b16 %v5700, %v5699
      %5725 = vmatprep.subr.bf16.mxu0 0
      %5726 = vmatpush1.bf16.msra.mxu0 %v5708
      %5727 = vmatprep.subr.bf16.mxu0 0
      %5728 = vmatpush1.bf16.msra.mxu0 %v5707
      %5729 = vmatprep.subr.bf16.mxu0 0
      %5730 = vmatpush1.bf16.msra.mxu0 %v5706
      %5731 = vmatprep.subr.bf16.mxu0 0
      %5732 = vmatpush1.bf16.msra.mxu0 %v5705
      %5733 = vmatprep.subr.bf16.mxu0 0
      %5734 = vmatpush1.bf16.msra.mxu0 %v5704
      %5735 = vmatprep.subr.bf16.mxu0 0
      %5736 = vmatpush1.bf16.msra.mxu0 %v5703
      %5737 = vmatprep.subr.bf16.mxu0 0
      %5738 = vmatpush1.bf16.msra.mxu0 %v5702
      %5739 = vmatprep.subr.bf16.mxu0 0
      %5740 = vmatpush1.bf16.msra.mxu0 %v5701
      %5741 = vmatprep.subr.bf16.mxu0 0
      %5742 = vmatpush2.bf16.msra.mxu0 0
      %5743 = vmatprep.subr.bf16.mxu0 0
      %5744 = vmatpush2.bf16.msra.mxu0 0
      %5745 = vmatprep.subr.bf16.mxu0 0
      %5746 = vmatpush2.bf16.msra.mxu0 0
      %5747 = vmatprep.subr.bf16.mxu0 0
      %5748 = vmatpush2.bf16.msra.mxu0 0
      %5749 = vmatprep.subr.bf16.mxu0 0
      %5750 = vmatpush2.bf16.msra.mxu0 %v5712
      %5751 = vmatprep.subr.bf16.mxu0 0
      %5752 = vmatpush2.bf16.msra.mxu0 %v5711
      %5753 = vmatprep.subr.bf16.mxu0 0
      %5754 = vmatpush2.bf16.msra.mxu0 %v5710
      %5755 = vmatprep.subr.bf16.mxu0 0
      %5756 = vmatpush2.bf16.msra.mxu0 %v5709
      %5757 = vmatprep.mubr.bf16.mxu0 %v2240
      %5758 = vmatmul.mubr.bf16.gmra.mxu0 %v1804
      %v5759 = vpop.f32.mrf.mxu0
      %v5760 = vadd.f32 %v5527, %v5759
      %v5761 = vpop.f32.mrf.mxu0
      %v5762 = vpop.f32.mrf.mxu0
      %v5763 = vadd.f32 %v5530, %v5762
      %v5764 = vpop.f32.mrf.mxu0
      %5765 = vmatprep.mubr.bf16.mxu0 %v5445
      %5766 = vmatmul.mubr.bf16.gmra.mxu0 %v5291
      %v5767 = vpop.f32.mrf.mxu0
      %v5768 = vadd.f32 %v5535, %v5767
      %v5769 = vpop.f32.mrf.mxu0
      %v5770 = vpop.f32.mrf.mxu0
      %v5771 = vadd.f32 %v5538, %v5770
      %v5772 = vpop.f32.mrf.mxu0
      %5773 = vmatprep.mubr.bf16.mxu0 %v5448
      %5774 = vmatmul.mubr.bf16.gmra.mxu0 %v5293
      %v5775 = vpop.f32.mrf.mxu0
      %v5776 = vadd.f32 %v5543, %v5775
      %v5777 = vpop.f32.mrf.mxu0
      %v5778 = vpop.f32.mrf.mxu0
      %v5779 = vadd.f32 %v5546, %v5778
      %v5780 = vpop.f32.mrf.mxu0
      %5781 = vmatprep.mubr.bf16.mxu0 %v5451
      %5782 = vmatmul.mubr.bf16.gmra.mxu0 %v5295
      %v5783 = vpop.f32.mrf.mxu0
      %v5784 = vadd.f32 %v5551, %v5783
      %v5785 = vpop.f32.mrf.mxu0
      %v5786 = vpop.f32.mrf.mxu0
      %v5787 = vadd.f32 %v5554, %v5786
      %v5788 = vpop.f32.mrf.mxu0
      %5789 = vmatprep.mubr.bf16.mxu0 %v5454
      %5790 = vmatmul.mubr.bf16.gmra.mxu0 %v5297
      %v5791 = vpop.f32.mrf.mxu0
      %v5792 = vadd.f32 %v5559, %v5791
      %v5793 = vpop.f32.mrf.mxu0
      %v5794 = vpop.f32.mrf.mxu0
      %v5795 = vadd.f32 %v5562, %v5794
      %v5796 = vpop.f32.mrf.mxu0
      %5797 = vmatprep.mubr.bf16.mxu0 %v5457
      %5798 = vmatmul.mubr.bf16.gmra.mxu0 %v5299
      %v5799 = vpop.f32.mrf.mxu0
      %v5800 = vadd.f32 %v5567, %v5799
      %v5801 = vpop.f32.mrf.mxu0
      %v5802 = vpop.f32.mrf.mxu0
      %v5803 = vadd.f32 %v5570, %v5802
      %v5804 = vpop.f32.mrf.mxu0
      %5805 = vmatprep.mubr.bf16.mxu0 %v5460
      %5806 = vmatmul.mubr.bf16.gmra.mxu0 %v5301
      %v5807 = vpop.f32.mrf.mxu0
      %v5808 = vadd.f32 %v5575, %v5807
      %v5809 = vpop.f32.mrf.mxu0
      %v5810 = vpop.f32.mrf.mxu0
      %v5811 = vadd.f32 %v5578, %v5810
      %v5812 = vpop.f32.mrf.mxu0
      %5813 = vmatprep.mubr.bf16.mxu0 %v5463
      %5814 = vmatmul.mubr.bf16.gmra.mxu0 %v5303
      %v5815 = vpop.f32.mrf.mxu0
      %v5816 = vadd.f32 %v5583, %v5815
      %v5817 = vpop.f32.mrf.mxu0
      %v5818 = vpop.f32.mrf.mxu0
      %v5819 = vadd.f32 %v5586, %v5818
      %v5820 = vpop.f32.mrf.mxu0
      %5821 = vmatprep.mubr.bf16.mxu0 %v5466
      %5822 = vmatmul.mubr.bf16.gmra.mxu0 %v5305
      %v5823 = vpop.f32.mrf.mxu0
      %v5824 = vadd.f32 %v5591, %v5823
      %v5825 = vpop.f32.mrf.mxu0
      %v5826 = vpop.f32.mrf.mxu0
      %v5827 = vadd.f32 %v5594, %v5826
      %v5828 = vpop.f32.mrf.mxu0
      %5829 = vmatprep.mubr.bf16.mxu0 %v5469
      %5830 = vmatmul.mubr.bf16.gmra.mxu0 %v5307
      %v5831 = vpop.f32.mrf.mxu0
      %v5832 = vadd.f32 %v5599, %v5831
      %v5833 = vpop.f32.mrf.mxu0
      %v5834 = vpop.f32.mrf.mxu0
      %v5835 = vadd.f32 %v5602, %v5834
      %v5836 = vpop.f32.mrf.mxu0
      %5837 = vmatprep.mubr.bf16.mxu0 %v5472
      %5838 = vmatmul.mubr.bf16.gmra.mxu0 %v5309
      %v5839 = vpop.f32.mrf.mxu0
      %v5840 = vadd.f32 %v5607, %v5839
      %v5841 = vpop.f32.mrf.mxu0
      %v5842 = vpop.f32.mrf.mxu0
      %v5843 = vadd.f32 %v5610, %v5842
      %v5844 = vpop.f32.mrf.mxu0
      %5845 = vmatprep.mubr.bf16.mxu0 %v5475
      %5846 = vmatmul.mubr.bf16.gmra.mxu0 %v5311
      %v5847 = vpop.f32.mrf.mxu0
      %v5848 = vadd.f32 %v5615, %v5847
      %v5849 = vpop.f32.mrf.mxu0
      %v5850 = vpop.f32.mrf.mxu0
      %v5851 = vadd.f32 %v5618, %v5850
      %v5852 = vpop.f32.mrf.mxu0
      %5853 = vmatprep.mubr.bf16.mxu0 %v5478
      %5854 = vmatmul.mubr.bf16.gmra.mxu0 %v5313
      %v5855 = vpop.f32.mrf.mxu0
      %v5856 = vadd.f32 %v5623, %v5855
      %v5857 = vpop.f32.mrf.mxu0
      %v5858 = vpop.f32.mrf.mxu0
      %v5859 = vadd.f32 %v5626, %v5858
      %v5860 = vpop.f32.mrf.mxu0
      %5861 = vmatprep.mubr.bf16.mxu0 %v5481
      %5862 = vmatmul.mubr.bf16.gmra.mxu0 %v5315
      %v5863 = vpop.f32.mrf.mxu0
      %v5864 = vadd.f32 %v5631, %v5863
      %v5865 = vpop.f32.mrf.mxu0
      %v5866 = vpop.f32.mrf.mxu0
      %v5867 = vadd.f32 %v5634, %v5866
      %v5868 = vpop.f32.mrf.mxu0
      %5869 = vmatprep.mubr.bf16.mxu0 %v5484
      %5870 = vmatmul.mubr.bf16.gmra.mxu0 %v5317
      %v5871 = vpop.f32.mrf.mxu0
      %v5872 = vadd.f32 %v5639, %v5871
      %v5873 = vpop.f32.mrf.mxu0
      %v5874 = vpop.f32.mrf.mxu0
      %v5875 = vadd.f32 %v5642, %v5874
      %v5876 = vpop.f32.mrf.mxu0
      %5877 = vmatprep.mubr.bf16.mxu0 %v5487
      %5878 = vmatmul.mubr.bf16.gmra.mxu0 %v5319
      %v5879 = vpop.f32.mrf.mxu0
      %v5880 = vadd.f32 %v5647, %v5879
      %v5881 = vpop.f32.mrf.mxu0
      %v5882 = vpop.f32.mrf.mxu0
      %v5883 = vadd.f32 %v5650, %v5882
      %v5884 = vpop.f32.mrf.mxu0
      %5885 = vdwg.mxu0
      %s5886 = scalar_lea.vmem %s7, 192
      %v5887 = vld [vmem:[%s5886] sm:$0xf]
      %v5888 = vld [vmem:[%s5886 + $0x4] sm:$0xf]
      %v5889 = vld [vmem:[%s5886 + $0x8] sm:$0xf]
      %v5890 = vld [vmem:[%s5886 + $0xc] sm:$0xf]
      %v5891 = vld [vmem:[%s5886 + $0x10] sm:$0xf]
      %v5892 = vld [vmem:[%s5886 + $0x14] sm:$0xf]
      %v5893 = vld [vmem:[%s5886 + $0x18] sm:$0xf]
      %v5894 = vld [vmem:[%s5886 + $0x1c] sm:$0xf]
      %v5895 = vld [vmem:[%s5886 + $0x20] sm:$0xf]
      %v5896 = vld [vmem:[%s5886 + $0x24] sm:$0xf]
      %v5897 = vld [vmem:[%s5886 + $0x28] sm:$0xf]
      %v5898 = vld [vmem:[%s5886 + $0x2c] sm:$0xf]
      %v5899 = vld [vmem:[%s5886 + $0x30] sm:$0xf]
      %v5900 = vld [vmem:[%s5886 + $0x34] sm:$0xf]
      %v5901 = vld [vmem:[%s5886 + $0x38] sm:$0xf]
      %v5902 = vld [vmem:[%s5886 + $0x3c] sm:$0xf]
      %v5903 = vld [vmem:[%s5886 + $0x40] sm:$0xf]
      %v5904 = vld [vmem:[%s5886 + $0x44] sm:$0xf]
      %v5905 = vld [vmem:[%s5886 + $0x48] sm:$0xf]
      %v5906 = vld [vmem:[%s5886 + $0x4c] sm:$0xf]
      %v5907 = vld [vmem:[%s5886 + $0x50] sm:$0xf]
      %v5908 = vld [vmem:[%s5886 + $0x54] sm:$0xf]
      %v5909 = vld [vmem:[%s5886 + $0x58] sm:$0xf]
      %v5910 = vld [vmem:[%s5886 + $0x5c] sm:$0xf]
      %v5935 = vunpack.c.l.b16 %v5887
      %v5936 = vunpack.c.l.b16 %v5888
      %v5937 = vunpack.c.l.b16 %v5889
      %v5938 = vunpack.c.l.b16 %v5890
      %v5939 = vunpack.c.l.b16 %v5891
      %v5940 = vunpack.c.l.b16 %v5892
      %v5941 = vunpack.c.l.b16 %v5893
      %v5942 = vunpack.c.l.b16 %v5894
      %v5943 = vunpack.c.l.b16 %v5895
      %v5944 = vunpack.c.l.b16 %v5896
      %v5945 = vunpack.c.l.b16 %v5897
      %v5946 = vunpack.c.l.b16 %v5898
      %v5947 = vunpack.c.l.b16 %v5899
      %v5948 = vunpack.c.l.b16 %v5900
      %v5949 = vunpack.c.l.b16 %v5901
      %v5950 = vunpack.c.l.b16 %v5902
      %v5951 = vunpack.c.l.b16 %v5903
      %v5952 = vunpack.c.l.b16 %v5904
      %v5953 = vunpack.c.l.b16 %v5905
      %v5954 = vunpack.c.l.b16 %v5906
      %v5955 = vunpack.c.l.b16 %v5907
      %v5956 = vunpack.c.l.b16 %v5908
      %v5957 = vunpack.c.l.b16 %v5909
      %v5958 = vunpack.c.l.b16 %v5910
      %v5959 = vpack.c.b16 %v5936, %v5935
      %v5960 = vpack.c.b16 %v5938, %v5937
      %v5961 = vpack.c.b16 %v5940, %v5939
      %v5962 = vpack.c.b16 %v5942, %v5941
      %v5963 = vpack.c.b16 %v5944, %v5943
      %v5964 = vpack.c.b16 %v5946, %v5945
      %v5965 = vpack.c.b16 %v5948, %v5947
      %v5966 = vpack.c.b16 %v5950, %v5949
      %v5967 = vpack.c.b16 %v5952, %v5951
      %v5968 = vpack.c.b16 %v5954, %v5953
      %v5969 = vpack.c.b16 %v5956, %v5955
      %v5970 = vpack.c.b16 %v5958, %v5957
      %5983 = vmatprep.subr.bf16.mxu0 0
      %5984 = vmatpush1.bf16.msra.mxu0 %v5966
      %5985 = vmatprep.subr.bf16.mxu0 0
      %5986 = vmatpush1.bf16.msra.mxu0 %v5965
      %5987 = vmatprep.subr.bf16.mxu0 0
      %5988 = vmatpush1.bf16.msra.mxu0 %v5964
      %5989 = vmatprep.subr.bf16.mxu0 0
      %5990 = vmatpush1.bf16.msra.mxu0 %v5963
      %5991 = vmatprep.subr.bf16.mxu0 0
      %5992 = vmatpush1.bf16.msra.mxu0 %v5962
      %5993 = vmatprep.subr.bf16.mxu0 0
      %5994 = vmatpush1.bf16.msra.mxu0 %v5961
      %5995 = vmatprep.subr.bf16.mxu0 0
      %5996 = vmatpush1.bf16.msra.mxu0 %v5960
      %5997 = vmatprep.subr.bf16.mxu0 0
      %5998 = vmatpush1.bf16.msra.mxu0 %v5959
      %5999 = vmatprep.subr.bf16.mxu0 0
      %6000 = vmatpush2.bf16.msra.mxu0 0
      %6001 = vmatprep.subr.bf16.mxu0 0
      %6002 = vmatpush2.bf16.msra.mxu0 0
      %6003 = vmatprep.subr.bf16.mxu0 0
      %6004 = vmatpush2.bf16.msra.mxu0 0
      %6005 = vmatprep.subr.bf16.mxu0 0
      %6006 = vmatpush2.bf16.msra.mxu0 0
      %6007 = vmatprep.subr.bf16.mxu0 0
      %6008 = vmatpush2.bf16.msra.mxu0 %v5970
      %6009 = vmatprep.subr.bf16.mxu0 0
      %6010 = vmatpush2.bf16.msra.mxu0 %v5969
      %6011 = vmatprep.subr.bf16.mxu0 0
      %6012 = vmatpush2.bf16.msra.mxu0 %v5968
      %6013 = vmatprep.subr.bf16.mxu0 0
      %6014 = vmatpush2.bf16.msra.mxu0 %v5967
      %6015 = vmatprep.mubr.bf16.mxu0 %v5448
      %6016 = vmatmul.mubr.bf16.gmra.mxu0 %v5293
      %v6017 = vpop.f32.mrf.mxu0
      %v6018 = vadd.f32 0.0, %v6017
      %v6019 = vpop.f32.mrf.mxu0
      %v6020 = vpop.f32.mrf.mxu0
      %v6021 = vadd.f32 0.0, %v6020
      %v6022 = vpop.f32.mrf.mxu0
      %6023 = vmatprep.mubr.bf16.mxu0 %v5451
      %6024 = vmatmul.mubr.bf16.gmra.mxu0 %v5295
      %v6025 = vpop.f32.mrf.mxu0
      %v6026 = vadd.f32 0.0, %v6025
      %v6027 = vpop.f32.mrf.mxu0
      %v6028 = vpop.f32.mrf.mxu0
      %v6029 = vadd.f32 0.0, %v6028
      %v6030 = vpop.f32.mrf.mxu0
      %6031 = vmatprep.mubr.bf16.mxu0 %v5454
      %6032 = vmatmul.mubr.bf16.gmra.mxu0 %v5297
      %v6033 = vpop.f32.mrf.mxu0
      %v6034 = vadd.f32 0.0, %v6033
      %v6035 = vpop.f32.mrf.mxu0
      %v6036 = vpop.f32.mrf.mxu0
      %v6037 = vadd.f32 0.0, %v6036
      %v6038 = vpop.f32.mrf.mxu0
      %6039 = vmatprep.mubr.bf16.mxu0 %v5457
      %6040 = vmatmul.mubr.bf16.gmra.mxu0 %v5299
      %v6041 = vpop.f32.mrf.mxu0
      %v6042 = vadd.f32 0.0, %v6041
      %v6043 = vpop.f32.mrf.mxu0
      %v6044 = vpop.f32.mrf.mxu0
      %v6045 = vadd.f32 0.0, %v6044
      %v6046 = vpop.f32.mrf.mxu0
      %6047 = vmatprep.mubr.bf16.mxu0 %v5460
      %6048 = vmatmul.mubr.bf16.gmra.mxu0 %v5301
      %v6049 = vpop.f32.mrf.mxu0
      %v6050 = vadd.f32 0.0, %v6049
      %v6051 = vpop.f32.mrf.mxu0
      %v6052 = vpop.f32.mrf.mxu0
      %v6053 = vadd.f32 0.0, %v6052
      %v6054 = vpop.f32.mrf.mxu0
      %6055 = vmatprep.mubr.bf16.mxu0 %v5463
      %6056 = vmatmul.mubr.bf16.gmra.mxu0 %v5303
      %v6057 = vpop.f32.mrf.mxu0
      %v6058 = vadd.f32 0.0, %v6057
      %v6059 = vpop.f32.mrf.mxu0
      %v6060 = vpop.f32.mrf.mxu0
      %v6061 = vadd.f32 0.0, %v6060
      %v6062 = vpop.f32.mrf.mxu0
      %6063 = vmatprep.mubr.bf16.mxu0 %v5466
      %6064 = vmatmul.mubr.bf16.gmra.mxu0 %v5305
      %v6065 = vpop.f32.mrf.mxu0
      %v6066 = vadd.f32 0.0, %v6065
      %v6067 = vpop.f32.mrf.mxu0
      %v6068 = vpop.f32.mrf.mxu0
      %v6069 = vadd.f32 0.0, %v6068
      %v6070 = vpop.f32.mrf.mxu0
      %6071 = vmatprep.mubr.bf16.mxu0 %v5469
      %6072 = vmatmul.mubr.bf16.gmra.mxu0 %v5307
      %v6073 = vpop.f32.mrf.mxu0
      %v6074 = vadd.f32 0.0, %v6073
      %v6075 = vpop.f32.mrf.mxu0
      %v6076 = vpop.f32.mrf.mxu0
      %v6077 = vadd.f32 0.0, %v6076
      %v6078 = vpop.f32.mrf.mxu0
      %6079 = vmatprep.mubr.bf16.mxu0 %v5472
      %6080 = vmatmul.mubr.bf16.gmra.mxu0 %v5309
      %v6081 = vpop.f32.mrf.mxu0
      %v6082 = vadd.f32 0.0, %v6081
      %v6083 = vpop.f32.mrf.mxu0
      %v6084 = vpop.f32.mrf.mxu0
      %v6085 = vadd.f32 0.0, %v6084
      %v6086 = vpop.f32.mrf.mxu0
      %6087 = vmatprep.mubr.bf16.mxu0 %v5475
      %6088 = vmatmul.mubr.bf16.gmra.mxu0 %v5311
      %v6089 = vpop.f32.mrf.mxu0
      %v6090 = vadd.f32 0.0, %v6089
      %v6091 = vpop.f32.mrf.mxu0
      %v6092 = vpop.f32.mrf.mxu0
      %v6093 = vadd.f32 0.0, %v6092
      %v6094 = vpop.f32.mrf.mxu0
      %6095 = vmatprep.mubr.bf16.mxu0 %v5478
      %6096 = vmatmul.mubr.bf16.gmra.mxu0 %v5313
      %v6097 = vpop.f32.mrf.mxu0
      %v6098 = vadd.f32 0.0, %v6097
      %v6099 = vpop.f32.mrf.mxu0
      %v6100 = vpop.f32.mrf.mxu0
      %v6101 = vadd.f32 0.0, %v6100
      %v6102 = vpop.f32.mrf.mxu0
      %6103 = vmatprep.mubr.bf16.mxu0 %v5481
      %6104 = vmatmul.mubr.bf16.gmra.mxu0 %v5315
      %v6105 = vpop.f32.mrf.mxu0
      %v6106 = vadd.f32 0.0, %v6105
      %v6107 = vpop.f32.mrf.mxu0
      %v6108 = vpop.f32.mrf.mxu0
      %v6109 = vadd.f32 0.0, %v6108
      %v6110 = vpop.f32.mrf.mxu0
      %6111 = vmatprep.mubr.bf16.mxu0 %v5484
      %6112 = vmatmul.mubr.bf16.gmra.mxu0 %v5317
      %v6113 = vpop.f32.mrf.mxu0
      %v6114 = vadd.f32 0.0, %v6113
      %v6115 = vpop.f32.mrf.mxu0
      %v6116 = vpop.f32.mrf.mxu0
      %v6117 = vadd.f32 0.0, %v6116
      %v6118 = vpop.f32.mrf.mxu0
      %6119 = vmatprep.mubr.bf16.mxu0 %v5487
      %6120 = vmatmul.mubr.bf16.gmra.mxu0 %v5319
      %v6121 = vpop.f32.mrf.mxu0
      %v6122 = vadd.f32 0.0, %v6121
      %v6123 = vpop.f32.mrf.mxu0
      %v6124 = vpop.f32.mrf.mxu0
      %v6125 = vadd.f32 0.0, %v6124
      %v6126 = vpop.f32.mrf.mxu0
      %6127 = vmatprep.mubr.bf16.mxu0 %v5490
      %6128 = vmatmul.mubr.bf16.gmra.mxu0 %v5345
      %v6129 = vpop.f32.mrf.mxu0
      %v6130 = vadd.f32 0.0, %v6129
      %v6131 = vpop.f32.mrf.mxu0
      %v6132 = vpop.f32.mrf.mxu0
      %v6133 = vadd.f32 0.0, %v6132
      %v6134 = vpop.f32.mrf.mxu0
      %6135 = vmatprep.mubr.bf16.mxu0 %v2240
      %6136 = vmatmul.mubr.bf16.gmra.mxu0 %v1804
      %v6137 = vpop.f32.mrf.mxu0
      %v6138 = vadd.f32 0.0, %v6137
      %v6139 = vpop.f32.mrf.mxu0
      %v6140 = vpop.f32.mrf.mxu0
      %v6141 = vadd.f32 0.0, %v6140
      %v6142 = vpop.f32.mrf.mxu0
      %6143 = vdwg.mxu0
      %v6144 = vadd.f32 %v5760, %v6018
      %v6145 = vadd.f32 %v5763, %v6021
      %v6146 = vadd.f32 %v5768, %v6026
      %v6147 = vadd.f32 %v5771, %v6029
      %v6148 = vadd.f32 %v5776, %v6034
      %v6149 = vadd.f32 %v5779, %v6037
      %v6150 = vadd.f32 %v5784, %v6042
      %v6151 = vadd.f32 %v5787, %v6045
      %v6152 = vadd.f32 %v5792, %v6050
      %v6153 = vadd.f32 %v5795, %v6053
      %v6154 = vadd.f32 %v5800, %v6058
      %v6155 = vadd.f32 %v5803, %v6061
      %v6156 = vadd.f32 %v5808, %v6066
      %v6157 = vadd.f32 %v5811, %v6069
      %v6158 = vadd.f32 %v5816, %v6074
      %v6159 = vadd.f32 %v5819, %v6077
      %v6160 = vadd.f32 %v5824, %v6082
      %v6161 = vadd.f32 %v5827, %v6085
      %v6162 = vadd.f32 %v5832, %v6090
      %v6163 = vadd.f32 %v5835, %v6093
      %v6164 = vadd.f32 %v5840, %v6098
      %v6165 = vadd.f32 %v5843, %v6101
      %v6166 = vadd.f32 %v5848, %v6106
      %v6167 = vadd.f32 %v5851, %v6109
      %v6168 = vadd.f32 %v5856, %v6114
      %v6169 = vadd.f32 %v5859, %v6117
      %v6170 = vadd.f32 %v5864, %v6122
      %v6171 = vadd.f32 %v5867, %v6125
      %v6172 = vadd.f32 %v5872, %v6130
      %v6173 = vadd.f32 %v5875, %v6133
      %v6174 = vadd.f32 %v5880, %v6138
      %v6175 = vadd.f32 %v5883, %v6141
      %v6176 = vld [vmem:[%s8] sm:$0x1]
      %v6178 = vlaneseq
      %v6179 = vshrl.u32 %v6178, 7
      %v6180 = vsub.s32 0, %v6179
      %v6181 = vrot.slane %v6176, %v6180
      %v6183 = vadd.f32 %v6144, %v6181
      %v6184 = vadd.f32 %v6145, %v6181
      %v6185 = vadd.f32 %v6146, %v6181
      %v6186 = vadd.f32 %v6147, %v6181
      %v6187 = vadd.f32 %v6148, %v6181
      %v6188 = vadd.f32 %v6149, %v6181
      %v6189 = vadd.f32 %v6150, %v6181
      %v6190 = vadd.f32 %v6151, %v6181
      %v6191 = vadd.f32 %v6152, %v6181
      %v6192 = vadd.f32 %v6153, %v6181
      %v6193 = vadd.f32 %v6154, %v6181
      %v6194 = vadd.f32 %v6155, %v6181
      %v6195 = vadd.f32 %v6156, %v6181
      %v6196 = vadd.f32 %v6157, %v6181
      %v6197 = vadd.f32 %v6158, %v6181
      %v6198 = vadd.f32 %v6159, %v6181
      %v6199 = vadd.f32 %v6160, %v6181
      %v6200 = vadd.f32 %v6161, %v6181
      %v6201 = vadd.f32 %v6162, %v6181
      %v6202 = vadd.f32 %v6163, %v6181
      %v6203 = vadd.f32 %v6164, %v6181
      %v6204 = vadd.f32 %v6165, %v6181
      %v6205 = vadd.f32 %v6166, %v6181
      %v6206 = vadd.f32 %v6167, %v6181
      %v6207 = vadd.f32 %v6168, %v6181
      %v6208 = vadd.f32 %v6169, %v6181
      %v6209 = vadd.f32 %v6170, %v6181
      %v6210 = vadd.f32 %v6171, %v6181
      %v6211 = vadd.f32 %v6172, %v6181
      %v6212 = vadd.f32 %v6173, %v6181
      %v6213 = vadd.f32 %v6174, %v6181
      %v6214 = vadd.f32 %v6175, %v6181
      %6215 = vst [vmem:[%s332] sm:$0xff] %v6183
      %6216 = vst [vmem:[%s332 + $0x8] sm:$0xff] %v6184
      %6217 = vst [vmem:[%s332 + $0x10] sm:$0xff] %v6185
      %6218 = vst [vmem:[%s332 + $0x18] sm:$0xff] %v6186
      %6219 = vst [vmem:[%s332 + $0x20] sm:$0xff] %v6187
      %6220 = vst [vmem:[%s332 + $0x28] sm:$0xff] %v6188
      %6221 = vst [vmem:[%s332 + $0x30] sm:$0xff] %v6189
      %6222 = vst [vmem:[%s332 + $0x38] sm:$0xff] %v6190
      %6223 = vst [vmem:[%s332 + $0x40] sm:$0xff] %v6191
      %6224 = vst [vmem:[%s332 + $0x48] sm:$0xff] %v6192
      %6225 = vst [vmem:[%s332 + $0x50] sm:$0xff] %v6193
      %6226 = vst [vmem:[%s332 + $0x58] sm:$0xff] %v6194
      %6227 = vst [vmem:[%s332 + $0x60] sm:$0xff] %v6195
      %6228 = vst [vmem:[%s332 + $0x68] sm:$0xff] %v6196
      %6229 = vst [vmem:[%s332 + $0x70] sm:$0xff] %v6197
      %6230 = vst [vmem:[%s332 + $0x78] sm:$0xff] %v6198
      %6231 = vst [vmem:[%s332 + $0x80] sm:$0xff] %v6199
      %6232 = vst [vmem:[%s332 + $0x88] sm:$0xff] %v6200
      %6233 = vst [vmem:[%s332 + $0x90] sm:$0xff] %v6201
      %6234 = vst [vmem:[%s332 + $0x98] sm:$0xff] %v6202
      %6235 = vst [vmem:[%s332 + $0xa0] sm:$0xff] %v6203
      %6236 = vst [vmem:[%s332 + $0xa8] sm:$0xff] %v6204
      %6237 = vst [vmem:[%s332 + $0xb0] sm:$0xff] %v6205
      %6238 = vst [vmem:[%s332 + $0xb8] sm:$0xff] %v6206
      %6239 = vst [vmem:[%s332 + $0xc0] sm:$0xff] %v6207
      %6240 = vst [vmem:[%s332 + $0xc8] sm:$0xff] %v6208
      %6241 = vst [vmem:[%s332 + $0xd0] sm:$0xff] %v6209
      %6242 = vst [vmem:[%s332 + $0xd8] sm:$0xff] %v6210
      %6243 = vst [vmem:[%s332 + $0xe0] sm:$0xff] %v6211
      %6244 = vst [vmem:[%s332 + $0xe8] sm:$0xff] %v6212
      %6245 = vst [vmem:[%s332 + $0xf0] sm:$0xff] %v6213
      %6246 = vst [vmem:[%s332 + $0xf8] sm:$0xff] %v6214
      %p6247 = scmp.lt.s32.totalorder %s20, 1
      %s6248 = scalar_select %p6247, %s20, 1
      %s6249 = smul.addr %s6248, 32
      %s6250 = smul.addr %s6249, 8
      %s6251 = scalar_lea.vmem %s9, %s6250
      // Predicated region
      $region57: #{vision_prompt_net_pallas.1} parent=55 // pred_check
        %p6252 = pneg %p232
      $region58: #{vision_prompt_net_pallas.1} parent=55 // pred_check_branch
        %6254 = sbr.rel (%p6252) target = $region60
      $region59: #{vision_prompt_net_pallas.1} parent=55 // pred_region
        _
      $region60: #{vision_prompt_net_pallas.1} parent=55 // pred_fallthru
        _
    $region56: #{vision_prompt_net_pallas.1} parent=5 // pred_fallthru
      _
    %p6255 = scmp.le.s32.totalorder 2, %s15
    // Predicated region
    $region61: #{vision_prompt_net_pallas.1} parent=5 // pred_check
      %p6256 = pneg %p6255
    $region62: #{vision_prompt_net_pallas.1} parent=5 // pred_check_branch
      %6258 = sbr.rel (%p6256) target = $region64
    $region63: #{vision_prompt_net_pallas.1} parent=5 // pred_region
      %s6259 = ssub.s32 %s15, 2
      // Predicated region
      $region65: #{vision_prompt_net_pallas.1} parent=63 // pred_check
        %p6260 = pneg %p238
      $region66: #{vision_prompt_net_pallas.1} parent=63 // pred_check_branch
        %6262 = sbr.rel (%p6260) target = $region68
      $region67: #{vision_prompt_net_pallas.1} parent=63 // pred_region
        %p6263 = scmp.lt.s32.totalorder %s21, 1
        %s6264 = scalar_select %p6263, %s21, 1
        %s6265 = smul.addr %s6264, 32
        %s6266 = smul.addr %s6265, 8
        %s6267 = scalar_lea.vmem %s9, %s6266
      $region68: #{vision_prompt_net_pallas.1} parent=63 // pred_fallthru
        _
    $region64: #{vision_prompt_net_pallas.1} parent=5 // pred_fallthru
      _
  $region6: #{vision_prompt_net_pallas.1} parent=0 // loop_footer
    %s19 = sadd.s32 1, %s15
  $region7: #{vision_prompt_net_pallas.1} parent=0 // loop_footer_branch
    %14 = sbr.rel target = $region3
  $region8: #{vision_prompt_net_pallas.1} parent=0 // loop_exit
    _

</llo_original>
